<compile_context>
chip_gen: v7x
topology: tpu7x:2x2x1
jax: 0.10.0
libtpu: 0.0.40
codegen_flags: <defaults>
</compile_context>

<pallas_src>
import functools

import jax
import jax.numpy as jnp
import numpy as np
from jax.experimental import pallas as pl
from jax.experimental.pallas import tpu as pltpu

# len(LABELS) is not available here; use a deterministic small class count.
CLASS_COUNT = 3

# Fixed LeNet geometry implied by the module (32x32 NCHW input).
_C_IN = 3                 # input channels
_C1 = 6                   # conv1 / conv2 output channels
_CP = 8                   # channel count padded to a sublane multiple
_K = 5                    # conv kernel size
_P1 = 14                  # spatial size after conv1 + pool1   (32 -> 28 -> 14)
_P2 = 5                   # spatial size after conv2 + pool2   (14 -> 10 -> 5)
_POS1 = _P1 * _P1         # 196 pooled1 positions per image
_POS2 = _P2 * _P2         # 25  pooled2 positions per image
_SHIFT_PAD = (_K - 1) * _P1 + (_K - 1)   # 60: max lane shift used by conv2 taps
_KROWS1 = _C_IN * _K * _K                # 75 im2col rows for conv1
_KROWS1_PAD = 80                         # padded to a multiple of 8


# ----------------------------------------------------------------------------
# Fused Pallas kernel: conv1+relu+pool -> conv2+relu+pool -> fc1 -> fc2 -> fc3
# ----------------------------------------------------------------------------
def _fused_forward_kernel(p1_ref, w1_ref, b1_ref, w2_ref, b2_ref, s2_ref,
                          wf1_ref, bf1_ref, wf2_ref, bf2_ref, wf3_ref,
                          bf3_ref, out_ref, pool1_ref, feat_ref, *, n_batch):
    f32 = jnp.float32
    m1 = n_batch * _POS1                       # 392 lanes of real pooled1 data
    b1 = b1_ref[...]                           # (8, 1)

    # ---- Stage 1: conv1 + ReLU + 2x2 avg-pool.
    # p1_ref[i] is the im2col patch matrix (80, m1+60) for pool sub-position i,
    # so the pool is just the mean of the four ReLU'd GEMM outputs.
    acc1 = None
    for i in range(4):
        y = jnp.dot(w1_ref[...], p1_ref[i], preferred_element_type=f32) + b1
        y = jnp.maximum(y, 0.0)
        acc1 = y if acc1 is None else acc1 + y
    pool1_ref[...] = acc1 * 0.25               # pooled1, lane-flattened (+ pad)

    # ---- Stage 2: conv2 + ReLU + 2x2 avg-pool.
    # conv2 = sum over the 25 taps of an (8x8 channel GEMM) applied to a
    # shifted lane-slice of pooled1.  Columns whose taps run out of range pick
    # up garbage, but those columns are never selected by the pool-2 matrix.
    acc2 = None
    for kh in range(_K):
        for kw in range(_K):
            tap = kh * _K + kw
            off = kh * _P1 + kw
            y = jnp.dot(w2_ref[tap], pool1_ref[:, off:off + m1],
                        preferred_element_type=f32)
            acc2 = y if acc2 is None else acc2 + y
    y2 = jnp.maximum(acc2 + b2_ref[...], 0.0)            # relu(conv2), (8, m1)
    # 2x2 avg pool + valid-position selection as one 0/1 GEMM: (8,m1)@(m1,N*25)
    pooled2 = jnp.dot(y2, s2_ref[...], preferred_element_type=f32) * 0.25

    # ---- Rearrange (channel rows, batch*spatial lanes) into the
    # torch.flatten(x, 1) layout (batch rows, (c, h, w) features on lanes)
    # with static VMEM stores.
    for nb in range(n_batch):
        for c in range(_C1):
            feat_ref[nb:nb + 1, c * _POS2:(c + 1) * _POS2] = (
                pooled2[c:c + 1, nb * _POS2:(nb + 1) * _POS2])
    feat = feat_ref[...]                                 # (N, 150)

    # ---- FC stack (weights already transposed to (in, out)).
    h = jnp.maximum(
        jnp.dot(feat, wf1_ref[...], preferred_element_type=f32) + bf1_ref[...],
        0.0)
    h = jnp.maximum(
        jnp.dot(h, wf2_ref[...], preferred_element_type=f32) + bf2_ref[...],
        0.0)
    out_ref[...] = (jnp.dot(h, wf3_ref[...], preferred_element_type=f32)
                    + bf3_ref[...])


# ----------------------------------------------------------------------------
# Host-side helpers (run once per call on the raw input / once on the params)
# ----------------------------------------------------------------------------
def _build_conv1_patches(x):
    """x: (N, 3, 32, 32) -> (4, 80, N*196 + 60) transposed im2col patches.

    Block i = du*2+dv holds the patches of the conv1 outputs that feed pool-1
    sub-position (du, dv); rows are (c, kh, kw) (PyTorch weight order), lanes
    are (n, ph, pw) over the 14x14 pooled grid, plus 60 zero pad lanes that let
    the kernel take shifted slices for the conv2 taps without bounds checks.
    """
    n = x.shape[0]
    taps = [x[:, :, kh:kh + 2 * _P1, kw:kw + 2 * _P1]
            for kh in range(_K) for kw in range(_K)]
    p = jnp.stack(taps, axis=0)                    # (25, N, 3, 28, 28)
    p = p.reshape(25, n, _C_IN, _P1, 2, _P1, 2)    # 28 -> (ph, du), (pw, dv)
    p = jnp.transpose(p, (4, 6, 2, 0, 1, 3, 5))    # (du, dv, c, tap, n, ph, pw)
    p = p.reshape(4, _KROWS1, n * _POS1)
    return jnp.pad(p, ((0, 0), (0, _KROWS1_PAD - _KROWS1), (0, _SHIFT_PAD)))


def _build_pool2_selector(n):
    """0/1 matrix (N*196, N*25) summing the 4 conv2 outputs of each 2x2 window.

    Rows corresponding to invalid conv2 positions (garbage columns produced by
    the in-kernel shifted slices) are all-zero, so garbage never propagates.
    """
    s = np.zeros((n * _POS1, n * _POS2), np.float32)
    for nb in range(n):
        for qh in range(_P2):
            for qw in range(_P2):
                col = nb * _POS2 + qh * _P2 + qw
                for dy in range(2):
                    for dx in range(2):
                        row = nb * _POS1 + (2 * qh + dy) * _P1 + (2 * qw + dx)
                        s[row, col] = 1.0
    return jnp.asarray(s)


def init_params(key, class_count=CLASS_COUNT):
    """PyTorch-layout parameters (same shapes as SmallModel's state_dict)."""
    ks = jax.random.split(key, 10)

    def w(k, shape, fan_in):
        return jax.random.normal(k, shape, jnp.float32) / jnp.sqrt(fan_in)

    return {
        "conv1_w": w(ks[0], (_C1, _C_IN, _K, _K), _C_IN * _K * _K),
        "conv1_b": w(ks[1], (_C1,), _C_IN * _K * _K),
        "conv2_w": w(ks[2], (_C1, _C1, _K, _K), _C1 * _K * _K),
        "conv2_b": w(ks[3], (_C1,), _C1 * _K * _K),
        "fc1_w": w(ks[4], (64, _C1 * _P2 * _P2), _C1 * _P2 * _P2),
        "fc1_b": w(ks[5], (64,), _C1 * _P2 * _P2),
        "fc2_w": w(ks[6], (8, 64), 64),
        "fc2_b": w(ks[7], (8,), 64),
        "fc3_w": w(ks[8], (class_count, 8), 8),
        "fc3_b": w(ks[9], (class_count,), 8),
    }


def prepare_params(params):
    """One-time re-layout of PyTorch-style params into kernel-friendly form."""
    w1 = params["conv1_w"].reshape(_C1, _KROWS1)                   # (6, 75)
    w1p = jnp.zeros((_CP, _KROWS1_PAD), jnp.float32).at[:_C1, :_KROWS1].set(w1)
    b1p = jnp.zeros((_CP, 1), jnp.float32).at[:_C1, 0].set(params["conv1_b"])
    w2 = jnp.transpose(params["conv2_w"], (2, 3, 0, 1)).reshape(_K * _K, _C1, _C1)
    w2p = jnp.zeros((_K * _K, _CP, _CP), jnp.float32).at[:, :_C1, :_C1].set(w2)
    b2p = jnp.zeros((_CP, 1), jnp.float32).at[:_C1, 0].set(params["conv2_b"])
    return {
        "w1": w1p, "b1": b1p, "w2": w2p, "b2": b2p,
        "wf1": params["fc1_w"].T, "bf1": params["fc1_b"].reshape(1, -1),
        "wf2": params["fc2_w"].T, "bf2": params["fc2_b"].reshape(1, -1),
        "wf3": params["fc3_w"].T, "bf3": params["fc3_b"].reshape(1, -1),
    }


@jax.jit
def small_model_forward(prepped, x):
    """x: (N, 3, 32, 32) float32 -> logits (N, class_count)."""
    n = x.shape[0]
    num_classes = prepped["wf3"].shape[1]
    p1 = _build_conv1_patches(x)
    s2 = _build_pool2_selector(n)          # trace-time constant

    vmem = functools.partial(pl.BlockSpec, memory_space=pltpu.MemorySpace.VMEM)
    return pl.pallas_call(
        functools.partial(_fused_forward_kernel, n_batch=n),
        out_shape=jax.ShapeDtypeStruct((n, num_classes), jnp.float32),
        in_specs=[vmem() for _ in range(12)],
        out_specs=vmem(),
        scratch_shapes=[
            pltpu.VMEM((_CP, n * _POS1 + _SHIFT_PAD), jnp.float32),  # pooled1
            pltpu.VMEM((n, _C1 * _POS2), jnp.float32),               # flat feat
        ],
    )(p1, prepped["w1"], prepped["b1"], prepped["w2"], prepped["b2"], s2,
      prepped["wf1"], prepped["bf1"], prepped["wf2"], prepped["bf2"],
      prepped["wf3"], prepped["bf3"])


# ----------------------------------------------------------------------------
# Pure-JAX reference (for a numerical self-check)
# ----------------------------------------------------------------------------
@jax.jit
def _reference_forward(params, x):
    hp = jax.lax.Precision.HIGHEST

    def conv(x, w, b):
        y = jax.lax.conv_general_dilated(
            x, w, window_strides=(1, 1), padding="VALID",
            dimension_numbers=("NCHW", "OIHW", "NCHW"), precision=hp)
        return y + b[None, :, None, None]

    def pool(x):
        n, c, h, w = x.shape
        return x.reshape(n, c, h // 2, 2, w // 2, 2).mean(axis=(3, 5))

    x = pool(jax.nn.relu(conv(x, params["conv1_w"], params["conv1_b"])))
    x = pool(jax.nn.relu(conv(x, params["conv2_w"], params["conv2_b"])))
    x = x.reshape(x.shape[0], -1)
    x = jax.nn.relu(jnp.dot(x, params["fc1_w"].T, precision=hp) + params["fc1_b"])
    x = jax.nn.relu(jnp.dot(x, params["fc2_w"].T, precision=hp) + params["fc2_b"])
    return jnp.dot(x, params["fc3_w"].T, precision=hp) + params["fc3_b"]


if __name__ == "__main__":
    key = jax.random.PRNGKey(0)
    pkey, xkey = jax.random.split(key)
    params = init_params(pkey)
    prepped = prepare_params(params)

    # Spatial size must be 32x32: 32 -conv5-> 28 -pool-> 14 -conv5-> 10 -pool-> 5
    x = jax.random.normal(xkey, (2, _C_IN, 32, 32), jnp.float32)

    out = jax.block_until_ready(small_model_forward(prepped, x))
    ref = jax.block_until_ready(_reference_forward(params, x))

    assert out.shape == (2, CLASS_COUNT), out.shape
    assert bool(jnp.all(jnp.isfinite(out)))
    assert bool(jnp.allclose(out, ref, rtol=1e-2, atol=1e-2)), (
        float(jnp.max(jnp.abs(out - ref))))
    print("KERNEL_OK")
</pallas_src>

<mosaic_0001>
module attributes {stable_mosaic.version = 11 : i64} {
  func.func @_fused_forward_kernel(%arg0: memref<4x80x452xf32, #tpu.memory_space<vmem>>, %arg1: memref<8x80xf32, #tpu.memory_space<vmem>>, %arg2: memref<8x1xf32, #tpu.memory_space<vmem>>, %arg3: memref<25x8x8xf32, #tpu.memory_space<vmem>>, %arg4: memref<8x1xf32, #tpu.memory_space<vmem>>, %arg5: memref<392x50xf32, #tpu.memory_space<vmem>>, %arg6: memref<150x64xf32, #tpu.memory_space<vmem>>, %arg7: memref<1x64xf32, #tpu.memory_space<vmem>>, %arg8: memref<64x8xf32, #tpu.memory_space<vmem>>, %arg9: memref<1x8xf32, #tpu.memory_space<vmem>>, %arg10: memref<8x3xf32, #tpu.memory_space<vmem>>, %arg11: memref<1x3xf32, #tpu.memory_space<vmem>>, %arg12: memref<2x3xf32, #tpu.memory_space<vmem>>, %arg13: memref<8x452xf32, #tpu.memory_space<vmem>>, %arg14: memref<2x150xf32, #tpu.memory_space<vmem>>) attributes {dimension_semantics = [], scalar_prefetch = 0 : i64, scratch_operands = 2 : i64, tpu.core_type = #tpu.core_type<tc>} {
    %c0 = arith.constant 0 : index
    %c0_0 = arith.constant 0 : index
    %0 = vector.load %arg2[%c0, %c0_0] : memref<8x1xf32, #tpu.memory_space<vmem>>, vector<8x1xf32>
    %c0_1 = arith.constant 0 : index
    %c0_2 = arith.constant 0 : index
    %1 = vector.load %arg1[%c0_1, %c0_2] : memref<8x80xf32, #tpu.memory_space<vmem>>, vector<8x80xf32>
    %c0_3 = arith.constant 0 : index
    %c0_4 = arith.constant 0 : index
    %c0_5 = arith.constant 0 : index
    %2 = vector.load %arg0[%c0_3, %c0_4, %c0_5] : memref<4x80x452xf32, #tpu.memory_space<vmem>>, vector<1x80x452xf32>
    %3 = vector.shape_cast %2 : vector<1x80x452xf32> to vector<80x452xf32>
    %cst = arith.constant dense<0.000000e+00> : vector<8x452xf32>
    %4 = tpu.matmul %1, %3, %cst {dimension_numbers = #tpu.dot_dimension_numbers<[1], [0], [0], [1], [0, 0, 1, 1], [], []>} : vector<8x80xf32>, vector<80x452xf32>, vector<8x452xf32> -> vector<8x452xf32>
    %5 = vector.broadcast %0 : vector<8x1xf32> to vector<8x452xf32>
    %6 = arith.addf %4, %5 : vector<8x452xf32>
    %cst_6 = arith.constant 0.000000e+00 : f32
    %7 = vector.broadcast %cst_6 : f32 to vector<8x452xf32>
    %8 = arith.maximumf %6, %7 : vector<8x452xf32>
    %c0_7 = arith.constant 0 : index
    %c0_8 = arith.constant 0 : index
    %9 = vector.load %arg1[%c0_7, %c0_8] : memref<8x80xf32, #tpu.memory_space<vmem>>, vector<8x80xf32>
    %c1 = arith.constant 1 : index
    %c0_9 = arith.constant 0 : index
    %c0_10 = arith.constant 0 : index
    %10 = vector.load %arg0[%c1, %c0_9, %c0_10] : memref<4x80x452xf32, #tpu.memory_space<vmem>>, vector<1x80x452xf32>
    %11 = vector.shape_cast %10 : vector<1x80x452xf32> to vector<80x452xf32>
    %cst_11 = arith.constant dense<0.000000e+00> : vector<8x452xf32>
    %12 = tpu.matmul %9, %11, %cst_11 {dimension_numbers = #tpu.dot_dimension_numbers<[1], [0], [0], [1], [0, 0, 1, 1], [], []>} : vector<8x80xf32>, vector<80x452xf32>, vector<8x452xf32> -> vector<8x452xf32>
    %13 = vector.broadcast %0 : vector<8x1xf32> to vector<8x452xf32>
    %14 = arith.addf %12, %13 : vector<8x452xf32>
    %cst_12 = arith.constant 0.000000e+00 : f32
    %15 = vector.broadcast %cst_12 : f32 to vector<8x452xf32>
    %16 = arith.maximumf %14, %15 : vector<8x452xf32>
    %17 = arith.addf %8, %16 : vector<8x452xf32>
    %c0_13 = arith.constant 0 : index
    %c0_14 = arith.constant 0 : index
    %18 = vector.load %arg1[%c0_13, %c0_14] : memref<8x80xf32, #tpu.memory_space<vmem>>, vector<8x80xf32>
    %c2 = arith.constant 2 : index
    %c0_15 = arith.constant 0 : index
    %c0_16 = arith.constant 0 : index
    %19 = vector.load %arg0[%c2, %c0_15, %c0_16] : memref<4x80x452xf32, #tpu.memory_space<vmem>>, vector<1x80x452xf32>
    %20 = vector.shape_cast %19 : vector<1x80x452xf32> to vector<80x452xf32>
    %cst_17 = arith.constant dense<0.000000e+00> : vector<8x452xf32>
    %21 = tpu.matmul %18, %20, %cst_17 {dimension_numbers = #tpu.dot_dimension_numbers<[1], [0], [0], [1], [0, 0, 1, 1], [], []>} : vector<8x80xf32>, vector<80x452xf32>, vector<8x452xf32> -> vector<8x452xf32>
    %22 = vector.broadcast %0 : vector<8x1xf32> to vector<8x452xf32>
    %23 = arith.addf %21, %22 : vector<8x452xf32>
    %cst_18 = arith.constant 0.000000e+00 : f32
    %24 = vector.broadcast %cst_18 : f32 to vector<8x452xf32>
    %25 = arith.maximumf %23, %24 : vector<8x452xf32>
    %26 = arith.addf %17, %25 : vector<8x452xf32>
    %c0_19 = arith.constant 0 : index
    %c0_20 = arith.constant 0 : index
    %27 = vector.load %arg1[%c0_19, %c0_20] : memref<8x80xf32, #tpu.memory_space<vmem>>, vector<8x80xf32>
    %c3 = arith.constant 3 : index
    %c0_21 = arith.constant 0 : index
    %c0_22 = arith.constant 0 : index
    %28 = vector.load %arg0[%c3, %c0_21, %c0_22] : memref<4x80x452xf32, #tpu.memory_space<vmem>>, vector<1x80x452xf32>
    %29 = vector.shape_cast %28 : vector<1x80x452xf32> to vector<80x452xf32>
    %cst_23 = arith.constant dense<0.000000e+00> : vector<8x452xf32>
    %30 = tpu.matmul %27, %29, %cst_23 {dimension_numbers = #tpu.dot_dimension_numbers<[1], [0], [0], [1], [0, 0, 1, 1], [], []>} : vector<8x80xf32>, vector<80x452xf32>, vector<8x452xf32> -> vector<8x452xf32>
    %31 = vector.broadcast %0 : vector<8x1xf32> to vector<8x452xf32>
    %32 = arith.addf %30, %31 : vector<8x452xf32>
    %cst_24 = arith.constant 0.000000e+00 : f32
    %33 = vector.broadcast %cst_24 : f32 to vector<8x452xf32>
    %34 = arith.maximumf %32, %33 : vector<8x452xf32>
    %35 = arith.addf %26, %34 : vector<8x452xf32>
    %cst_25 = arith.constant 2.500000e-01 : f32
    %36 = vector.broadcast %cst_25 : f32 to vector<8x452xf32>
    %37 = arith.mulf %35, %36 : vector<8x452xf32>
    %c0_26 = arith.constant 0 : index
    %c0_27 = arith.constant 0 : index
    %38 = vector.load %arg13[%c0_26, %c0_27] : memref<8x452xf32, #tpu.memory_space<vmem>>, vector<8x452xf32>
    tpu.vector_store %arg13[%c0_26, %c0_27], %37 {strides = array<i32>} : memref<8x452xf32, #tpu.memory_space<vmem>>, vector<8x452xf32>,
    %c0_28 = arith.constant 0 : index
    %c0_29 = arith.constant 0 : index
    %c0_30 = arith.constant 0 : index
    %39 = vector.load %arg3[%c0_28, %c0_29, %c0_30] : memref<25x8x8xf32, #tpu.memory_space<vmem>>, vector<1x8x8xf32>
    %40 = vector.shape_cast %39 : vector<1x8x8xf32> to vector<8x8xf32>
    %c0_31 = arith.constant 0 : index
    %c0_32 = arith.constant 0 : index
    %41 = vector.load %arg13[%c0_31, %c0_32] : memref<8x452xf32, #tpu.memory_space<vmem>>, vector<8x392xf32>
    %cst_33 = arith.constant dense<0.000000e+00> : vector<8x392xf32>
    %42 = tpu.matmul %40, %41, %cst_33 {dimension_numbers = #tpu.dot_dimension_numbers<[1], [0], [0], [1], [0, 0, 1, 1], [], []>} : vector<8x8xf32>, vector<8x392xf32>, vector<8x392xf32> -> vector<8x392xf32>
    %c1_34 = arith.constant 1 : index
    %c0_35 = arith.constant 0 : index
    %c0_36 = arith.constant 0 : index
    %43 = vector.load %arg3[%c1_34, %c0_35, %c0_36] : memref<25x8x8xf32, #tpu.memory_space<vmem>>, vector<1x8x8xf32>
    %44 = vector.shape_cast %43 : vector<1x8x8xf32> to vector<8x8xf32>
    %c0_37 = arith.constant 0 : index
    %c1_38 = arith.constant 1 : index
    %45 = vector.load %arg13[%c0_37, %c1_38] : memref<8x452xf32, #tpu.memory_space<vmem>>, vector<8x392xf32>
    %cst_39 = arith.constant dense<0.000000e+00> : vector<8x392xf32>
    %46 = tpu.matmul %44, %45, %cst_39 {dimension_numbers = #tpu.dot_dimension_numbers<[1], [0], [0], [1], [0, 0, 1, 1], [], []>} : vector<8x8xf32>, vector<8x392xf32>, vector<8x392xf32> -> vector<8x392xf32>
    %47 = arith.addf %42, %46 : vector<8x392xf32>
    %c2_40 = arith.constant 2 : index
    %c0_41 = arith.constant 0 : index
    %c0_42 = arith.constant 0 : index
    %48 = vector.load %arg3[%c2_40, %c0_41, %c0_42] : memref<25x8x8xf32, #tpu.memory_space<vmem>>, vector<1x8x8xf32>
    %49 = vector.shape_cast %48 : vector<1x8x8xf32> to vector<8x8xf32>
    %c0_43 = arith.constant 0 : index
    %c2_44 = arith.constant 2 : index
    %50 = vector.load %arg13[%c0_43, %c2_44] : memref<8x452xf32, #tpu.memory_space<vmem>>, vector<8x392xf32>
    %cst_45 = arith.constant dense<0.000000e+00> : vector<8x392xf32>
    %51 = tpu.matmul %49, %50, %cst_45 {dimension_numbers = #tpu.dot_dimension_numbers<[1], [0], [0], [1], [0, 0, 1, 1], [], []>} : vector<8x8xf32>, vector<8x392xf32>, vector<8x392xf32> -> vector<8x392xf32>
    %52 = arith.addf %47, %51 : vector<8x392xf32>
    %c3_46 = arith.constant 3 : index
    %c0_47 = arith.constant 0 : index
    %c0_48 = arith.constant 0 : index
    %53 = vector.load %arg3[%c3_46, %c0_47, %c0_48] : memref<25x8x8xf32, #tpu.memory_space<vmem>>, vector<1x8x8xf32>
    %54 = vector.shape_cast %53 : vector<1x8x8xf32> to vector<8x8xf32>
    %c0_49 = arith.constant 0 : index
    %c3_50 = arith.constant 3 : index
    %55 = vector.load %arg13[%c0_49, %c3_50] : memref<8x452xf32, #tpu.memory_space<vmem>>, vector<8x392xf32>
    %cst_51 = arith.constant dense<0.000000e+00> : vector<8x392xf32>
    %56 = tpu.matmul %54, %55, %cst_51 {dimension_numbers = #tpu.dot_dimension_numbers<[1], [0], [0], [1], [0, 0, 1, 1], [], []>} : vector<8x8xf32>, vector<8x392xf32>, vector<8x392xf32> -> vector<8x392xf32>
    %57 = arith.addf %52, %56 : vector<8x392xf32>
    %c4 = arith.constant 4 : index
    %c0_52 = arith.constant 0 : index
    %c0_53 = arith.constant 0 : index
    %58 = vector.load %arg3[%c4, %c0_52, %c0_53] : memref<25x8x8xf32, #tpu.memory_space<vmem>>, vector<1x8x8xf32>
    %59 = vector.shape_cast %58 : vector<1x8x8xf32> to vector<8x8xf32>
    %c0_54 = arith.constant 0 : index
    %c4_55 = arith.constant 4 : index
    %60 = vector.load %arg13[%c0_54, %c4_55] : memref<8x452xf32, #tpu.memory_space<vmem>>, vector<8x392xf32>
    %cst_56 = arith.constant dense<0.000000e+00> : vector<8x392xf32>
    %61 = tpu.matmul %59, %60, %cst_56 {dimension_numbers = #tpu.dot_dimension_numbers<[1], [0], [0], [1], [0, 0, 1, 1], [], []>} : vector<8x8xf32>, vector<8x392xf32>, vector<8x392xf32> -> vector<8x392xf32>
    %62 = arith.addf %57, %61 : vector<8x392xf32>
    %c5 = arith.constant 5 : index
    %c0_57 = arith.constant 0 : index
    %c0_58 = arith.constant 0 : index
    %63 = vector.load %arg3[%c5, %c0_57, %c0_58] : memref<25x8x8xf32, #tpu.memory_space<vmem>>, vector<1x8x8xf32>
    %64 = vector.shape_cast %63 : vector<1x8x8xf32> to vector<8x8xf32>
    %c0_59 = arith.constant 0 : index
    %c14 = arith.constant 14 : index
    %65 = vector.load %arg13[%c0_59, %c14] : memref<8x452xf32, #tpu.memory_space<vmem>>, vector<8x392xf32>
    %cst_60 = arith.constant dense<0.000000e+00> : vector<8x392xf32>
    %66 = tpu.matmul %64, %65, %cst_60 {dimension_numbers = #tpu.dot_dimension_numbers<[1], [0], [0], [1], [0, 0, 1, 1], [], []>} : vector<8x8xf32>, vector<8x392xf32>, vector<8x392xf32> -> vector<8x392xf32>
    %67 = arith.addf %62, %66 : vector<8x392xf32>
    %c6 = arith.constant 6 : index
    %c0_61 = arith.constant 0 : index
    %c0_62 = arith.constant 0 : index
    %68 = vector.load %arg3[%c6, %c0_61, %c0_62] : memref<25x8x8xf32, #tpu.memory_space<vmem>>, vector<1x8x8xf32>
    %69 = vector.shape_cast %68 : vector<1x8x8xf32> to vector<8x8xf32>
    %c0_63 = arith.constant 0 : index
    %c15 = arith.constant 15 : index
    %70 = vector.load %arg13[%c0_63, %c15] : memref<8x452xf32, #tpu.memory_space<vmem>>, vector<8x392xf32>
    %cst_64 = arith.constant dense<0.000000e+00> : vector<8x392xf32>
    %71 = tpu.matmul %69, %70, %cst_64 {dimension_numbers = #tpu.dot_dimension_numbers<[1], [0], [0], [1], [0, 0, 1, 1], [], []>} : vector<8x8xf32>, vector<8x392xf32>, vector<8x392xf32> -> vector<8x392xf32>
    %72 = arith.addf %67, %71 : vector<8x392xf32>
    %c7 = arith.constant 7 : index
    %c0_65 = arith.constant 0 : index
    %c0_66 = arith.constant 0 : index
    %73 = vector.load %arg3[%c7, %c0_65, %c0_66] : memref<25x8x8xf32, #tpu.memory_space<vmem>>, vector<1x8x8xf32>
    %74 = vector.shape_cast %73 : vector<1x8x8xf32> to vector<8x8xf32>
    %c0_67 = arith.constant 0 : index
    %c16 = arith.constant 16 : index
    %75 = vector.load %arg13[%c0_67, %c16] : memref<8x452xf32, #tpu.memory_space<vmem>>, vector<8x392xf32>
    %cst_68 = arith.constant dense<0.000000e+00> : vector<8x392xf32>
    %76 = tpu.matmul %74, %75, %cst_68 {dimension_numbers = #tpu.dot_dimension_numbers<[1], [0], [0], [1], [0, 0, 1, 1], [], []>} : vector<8x8xf32>, vector<8x392xf32>, vector<8x392xf32> -> vector<8x392xf32>
    %77 = arith.addf %72, %76 : vector<8x392xf32>
    %c8 = arith.constant 8 : index
    %c0_69 = arith.constant 0 : index
    %c0_70 = arith.constant 0 : index
    %78 = vector.load %arg3[%c8, %c0_69, %c0_70] : memref<25x8x8xf32, #tpu.memory_space<vmem>>, vector<1x8x8xf32>
    %79 = vector.shape_cast %78 : vector<1x8x8xf32> to vector<8x8xf32>
    %c0_71 = arith.constant 0 : index
    %c17 = arith.constant 17 : index
    %80 = vector.load %arg13[%c0_71, %c17] : memref<8x452xf32, #tpu.memory_space<vmem>>, vector<8x392xf32>
    %cst_72 = arith.constant dense<0.000000e+00> : vector<8x392xf32>
    %81 = tpu.matmul %79, %80, %cst_72 {dimension_numbers = #tpu.dot_dimension_numbers<[1], [0], [0], [1], [0, 0, 1, 1], [], []>} : vector<8x8xf32>, vector<8x392xf32>, vector<8x392xf32> -> vector<8x392xf32>
    %82 = arith.addf %77, %81 : vector<8x392xf32>
    %c9 = arith.constant 9 : index
    %c0_73 = arith.constant 0 : index
    %c0_74 = arith.constant 0 : index
    %83 = vector.load %arg3[%c9, %c0_73, %c0_74] : memref<25x8x8xf32, #tpu.memory_space<vmem>>, vector<1x8x8xf32>
    %84 = vector.shape_cast %83 : vector<1x8x8xf32> to vector<8x8xf32>
    %c0_75 = arith.constant 0 : index
    %c18 = arith.constant 18 : index
    %85 = vector.load %arg13[%c0_75, %c18] : memref<8x452xf32, #tpu.memory_space<vmem>>, vector<8x392xf32>
    %cst_76 = arith.constant dense<0.000000e+00> : vector<8x392xf32>
    %86 = tpu.matmul %84, %85, %cst_76 {dimension_numbers = #tpu.dot_dimension_numbers<[1], [0], [0], [1], [0, 0, 1, 1], [], []>} : vector<8x8xf32>, vector<8x392xf32>, vector<8x392xf32> -> vector<8x392xf32>
    %87 = arith.addf %82, %86 : vector<8x392xf32>
    %c10 = arith.constant 10 : index
    %c0_77 = arith.constant 0 : index
    %c0_78 = arith.constant 0 : index
    %88 = vector.load %arg3[%c10, %c0_77, %c0_78] : memref<25x8x8xf32, #tpu.memory_space<vmem>>, vector<1x8x8xf32>
    %89 = vector.shape_cast %88 : vector<1x8x8xf32> to vector<8x8xf32>
    %c0_79 = arith.constant 0 : index
    %c28 = arith.constant 28 : index
    %90 = vector.load %arg13[%c0_79, %c28] : memref<8x452xf32, #tpu.memory_space<vmem>>, vector<8x392xf32>
    %cst_80 = arith.constant dense<0.000000e+00> : vector<8x392xf32>
    %91 = tpu.matmul %89, %90, %cst_80 {dimension_numbers = #tpu.dot_dimension_numbers<[1], [0], [0], [1], [0, 0, 1, 1], [], []>} : vector<8x8xf32>, vector<8x392xf32>, vector<8x392xf32> -> vector<8x392xf32>
    %92 = arith.addf %87, %91 : vector<8x392xf32>
    %c11 = arith.constant 11 : index
    %c0_81 = arith.constant 0 : index
    %c0_82 = arith.constant 0 : index
    %93 = vector.load %arg3[%c11, %c0_81, %c0_82] : memref<25x8x8xf32, #tpu.memory_space<vmem>>, vector<1x8x8xf32>
    %94 = vector.shape_cast %93 : vector<1x8x8xf32> to vector<8x8xf32>
    %c0_83 = arith.constant 0 : index
    %c29 = arith.constant 29 : index
    %95 = vector.load %arg13[%c0_83, %c29] : memref<8x452xf32, #tpu.memory_space<vmem>>, vector<8x392xf32>
    %cst_84 = arith.constant dense<0.000000e+00> : vector<8x392xf32>
    %96 = tpu.matmul %94, %95, %cst_84 {dimension_numbers = #tpu.dot_dimension_numbers<[1], [0], [0], [1], [0, 0, 1, 1], [], []>} : vector<8x8xf32>, vector<8x392xf32>, vector<8x392xf32> -> vector<8x392xf32>
    %97 = arith.addf %92, %96 : vector<8x392xf32>
    %c12 = arith.constant 12 : index
    %c0_85 = arith.constant 0 : index
    %c0_86 = arith.constant 0 : index
    %98 = vector.load %arg3[%c12, %c0_85, %c0_86] : memref<25x8x8xf32, #tpu.memory_space<vmem>>, vector<1x8x8xf32>
    %99 = vector.shape_cast %98 : vector<1x8x8xf32> to vector<8x8xf32>
    %c0_87 = arith.constant 0 : index
    %c30 = arith.constant 30 : index
    %100 = vector.load %arg13[%c0_87, %c30] : memref<8x452xf32, #tpu.memory_space<vmem>>, vector<8x392xf32>
    %cst_88 = arith.constant dense<0.000000e+00> : vector<8x392xf32>
    %101 = tpu.matmul %99, %100, %cst_88 {dimension_numbers = #tpu.dot_dimension_numbers<[1], [0], [0], [1], [0, 0, 1, 1], [], []>} : vector<8x8xf32>, vector<8x392xf32>, vector<8x392xf32> -> vector<8x392xf32>
    %102 = arith.addf %97, %101 : vector<8x392xf32>
    %c13 = arith.constant 13 : index
    %c0_89 = arith.constant 0 : index
    %c0_90 = arith.constant 0 : index
    %103 = vector.load %arg3[%c13, %c0_89, %c0_90] : memref<25x8x8xf32, #tpu.memory_space<vmem>>, vector<1x8x8xf32>
    %104 = vector.shape_cast %103 : vector<1x8x8xf32> to vector<8x8xf32>
    %c0_91 = arith.constant 0 : index
    %c31 = arith.constant 31 : index
    %105 = vector.load %arg13[%c0_91, %c31] : memref<8x452xf32, #tpu.memory_space<vmem>>, vector<8x392xf32>
    %cst_92 = arith.constant dense<0.000000e+00> : vector<8x392xf32>
    %106 = tpu.matmul %104, %105, %cst_92 {dimension_numbers = #tpu.dot_dimension_numbers<[1], [0], [0], [1], [0, 0, 1, 1], [], []>} : vector<8x8xf32>, vector<8x392xf32>, vector<8x392xf32> -> vector<8x392xf32>
    %107 = arith.addf %102, %106 : vector<8x392xf32>
    %c14_93 = arith.constant 14 : index
    %c0_94 = arith.constant 0 : index
    %c0_95 = arith.constant 0 : index
    %108 = vector.load %arg3[%c14_93, %c0_94, %c0_95] : memref<25x8x8xf32, #tpu.memory_space<vmem>>, vector<1x8x8xf32>
    %109 = vector.shape_cast %108 : vector<1x8x8xf32> to vector<8x8xf32>
    %c0_96 = arith.constant 0 : index
    %c32 = arith.constant 32 : index
    %110 = vector.load %arg13[%c0_96, %c32] : memref<8x452xf32, #tpu.memory_space<vmem>>, vector<8x392xf32>
    %cst_97 = arith.constant dense<0.000000e+00> : vector<8x392xf32>
    %111 = tpu.matmul %109, %110, %cst_97 {dimension_numbers = #tpu.dot_dimension_numbers<[1], [0], [0], [1], [0, 0, 1, 1], [], []>} : vector<8x8xf32>, vector<8x392xf32>, vector<8x392xf32> -> vector<8x392xf32>
    %112 = arith.addf %107, %111 : vector<8x392xf32>
    %c15_98 = arith.constant 15 : index
    %c0_99 = arith.constant 0 : index
    %c0_100 = arith.constant 0 : index
    %113 = vector.load %arg3[%c15_98, %c0_99, %c0_100] : memref<25x8x8xf32, #tpu.memory_space<vmem>>, vector<1x8x8xf32>
    %114 = vector.shape_cast %113 : vector<1x8x8xf32> to vector<8x8xf32>
    %c0_101 = arith.constant 0 : index
    %c42 = arith.constant 42 : index
    %115 = vector.load %arg13[%c0_101, %c42] : memref<8x452xf32, #tpu.memory_space<vmem>>, vector<8x392xf32>
    %cst_102 = arith.constant dense<0.000000e+00> : vector<8x392xf32>
    %116 = tpu.matmul %114, %115, %cst_102 {dimension_numbers = #tpu.dot_dimension_numbers<[1], [0], [0], [1], [0, 0, 1, 1], [], []>} : vector<8x8xf32>, vector<8x392xf32>, vector<8x392xf32> -> vector<8x392xf32>
    %117 = arith.addf %112, %116 : vector<8x392xf32>
    %c16_103 = arith.constant 16 : index
    %c0_104 = arith.constant 0 : index
    %c0_105 = arith.constant 0 : index
    %118 = vector.load %arg3[%c16_103, %c0_104, %c0_105] : memref<25x8x8xf32, #tpu.memory_space<vmem>>, vector<1x8x8xf32>
    %119 = vector.shape_cast %118 : vector<1x8x8xf32> to vector<8x8xf32>
    %c0_106 = arith.constant 0 : index
    %c43 = arith.constant 43 : index
    %120 = vector.load %arg13[%c0_106, %c43] : memref<8x452xf32, #tpu.memory_space<vmem>>, vector<8x392xf32>
    %cst_107 = arith.constant dense<0.000000e+00> : vector<8x392xf32>
    %121 = tpu.matmul %119, %120, %cst_107 {dimension_numbers = #tpu.dot_dimension_numbers<[1], [0], [0], [1], [0, 0, 1, 1], [], []>} : vector<8x8xf32>, vector<8x392xf32>, vector<8x392xf32> -> vector<8x392xf32>
    %122 = arith.addf %117, %121 : vector<8x392xf32>
    %c17_108 = arith.constant 17 : index
    %c0_109 = arith.constant 0 : index
    %c0_110 = arith.constant 0 : index
    %123 = vector.load %arg3[%c17_108, %c0_109, %c0_110] : memref<25x8x8xf32, #tpu.memory_space<vmem>>, vector<1x8x8xf32>
    %124 = vector.shape_cast %123 : vector<1x8x8xf32> to vector<8x8xf32>
    %c0_111 = arith.constant 0 : index
    %c44 = arith.constant 44 : index
    %125 = vector.load %arg13[%c0_111, %c44] : memref<8x452xf32, #tpu.memory_space<vmem>>, vector<8x392xf32>
    %cst_112 = arith.constant dense<0.000000e+00> : vector<8x392xf32>
    %126 = tpu.matmul %124, %125, %cst_112 {dimension_numbers = #tpu.dot_dimension_numbers<[1], [0], [0], [1], [0, 0, 1, 1], [], []>} : vector<8x8xf32>, vector<8x392xf32>, vector<8x392xf32> -> vector<8x392xf32>
    %127 = arith.addf %122, %126 : vector<8x392xf32>
    %c18_113 = arith.constant 18 : index
    %c0_114 = arith.constant 0 : index
    %c0_115 = arith.constant 0 : index
    %128 = vector.load %arg3[%c18_113, %c0_114, %c0_115] : memref<25x8x8xf32, #tpu.memory_space<vmem>>, vector<1x8x8xf32>
    %129 = vector.shape_cast %128 : vector<1x8x8xf32> to vector<8x8xf32>
    %c0_116 = arith.constant 0 : index
    %c45 = arith.constant 45 : index
    %130 = vector.load %arg13[%c0_116, %c45] : memref<8x452xf32, #tpu.memory_space<vmem>>, vector<8x392xf32>
    %cst_117 = arith.constant dense<0.000000e+00> : vector<8x392xf32>
    %131 = tpu.matmul %129, %130, %cst_117 {dimension_numbers = #tpu.dot_dimension_numbers<[1], [0], [0], [1], [0, 0, 1, 1], [], []>} : vector<8x8xf32>, vector<8x392xf32>, vector<8x392xf32> -> vector<8x392xf32>
    %132 = arith.addf %127, %131 : vector<8x392xf32>
    %c19 = arith.constant 19 : index
    %c0_118 = arith.constant 0 : index
    %c0_119 = arith.constant 0 : index
    %133 = vector.load %arg3[%c19, %c0_118, %c0_119] : memref<25x8x8xf32, #tpu.memory_space<vmem>>, vector<1x8x8xf32>
    %134 = vector.shape_cast %133 : vector<1x8x8xf32> to vector<8x8xf32>
    %c0_120 = arith.constant 0 : index
    %c46 = arith.constant 46 : index
    %135 = vector.load %arg13[%c0_120, %c46] : memref<8x452xf32, #tpu.memory_space<vmem>>, vector<8x392xf32>
    %cst_121 = arith.constant dense<0.000000e+00> : vector<8x392xf32>
    %136 = tpu.matmul %134, %135, %cst_121 {dimension_numbers = #tpu.dot_dimension_numbers<[1], [0], [0], [1], [0, 0, 1, 1], [], []>} : vector<8x8xf32>, vector<8x392xf32>, vector<8x392xf32> -> vector<8x392xf32>
    %137 = arith.addf %132, %136 : vector<8x392xf32>
    %c20 = arith.constant 20 : index
    %c0_122 = arith.constant 0 : index
    %c0_123 = arith.constant 0 : index
    %138 = vector.load %arg3[%c20, %c0_122, %c0_123] : memref<25x8x8xf32, #tpu.memory_space<vmem>>, vector<1x8x8xf32>
    %139 = vector.shape_cast %138 : vector<1x8x8xf32> to vector<8x8xf32>
    %c0_124 = arith.constant 0 : index
    %c56 = arith.constant 56 : index
    %140 = vector.load %arg13[%c0_124, %c56] : memref<8x452xf32, #tpu.memory_space<vmem>>, vector<8x392xf32>
    %cst_125 = arith.constant dense<0.000000e+00> : vector<8x392xf32>
    %141 = tpu.matmul %139, %140, %cst_125 {dimension_numbers = #tpu.dot_dimension_numbers<[1], [0], [0], [1], [0, 0, 1, 1], [], []>} : vector<8x8xf32>, vector<8x392xf32>, vector<8x392xf32> -> vector<8x392xf32>
    %142 = arith.addf %137, %141 : vector<8x392xf32>
    %c21 = arith.constant 21 : index
    %c0_126 = arith.constant 0 : index
    %c0_127 = arith.constant 0 : index
    %143 = vector.load %arg3[%c21, %c0_126, %c0_127] : memref<25x8x8xf32, #tpu.memory_space<vmem>>, vector<1x8x8xf32>
    %144 = vector.shape_cast %143 : vector<1x8x8xf32> to vector<8x8xf32>
    %c0_128 = arith.constant 0 : index
    %c57 = arith.constant 57 : index
    %145 = vector.load %arg13[%c0_128, %c57] : memref<8x452xf32, #tpu.memory_space<vmem>>, vector<8x392xf32>
    %cst_129 = arith.constant dense<0.000000e+00> : vector<8x392xf32>
    %146 = tpu.matmul %144, %145, %cst_129 {dimension_numbers = #tpu.dot_dimension_numbers<[1], [0], [0], [1], [0, 0, 1, 1], [], []>} : vector<8x8xf32>, vector<8x392xf32>, vector<8x392xf32> -> vector<8x392xf32>
    %147 = arith.addf %142, %146 : vector<8x392xf32>
    %c22 = arith.constant 22 : index
    %c0_130 = arith.constant 0 : index
    %c0_131 = arith.constant 0 : index
    %148 = vector.load %arg3[%c22, %c0_130, %c0_131] : memref<25x8x8xf32, #tpu.memory_space<vmem>>, vector<1x8x8xf32>
    %149 = vector.shape_cast %148 : vector<1x8x8xf32> to vector<8x8xf32>
    %c0_132 = arith.constant 0 : index
    %c58 = arith.constant 58 : index
    %150 = vector.load %arg13[%c0_132, %c58] : memref<8x452xf32, #tpu.memory_space<vmem>>, vector<8x392xf32>
    %cst_133 = arith.constant dense<0.000000e+00> : vector<8x392xf32>
    %151 = tpu.matmul %149, %150, %cst_133 {dimension_numbers = #tpu.dot_dimension_numbers<[1], [0], [0], [1], [0, 0, 1, 1], [], []>} : vector<8x8xf32>, vector<8x392xf32>, vector<8x392xf32> -> vector<8x392xf32>
    %152 = arith.addf %147, %151 : vector<8x392xf32>
    %c23 = arith.constant 23 : index
    %c0_134 = arith.constant 0 : index
    %c0_135 = arith.constant 0 : index
    %153 = vector.load %arg3[%c23, %c0_134, %c0_135] : memref<25x8x8xf32, #tpu.memory_space<vmem>>, vector<1x8x8xf32>
    %154 = vector.shape_cast %153 : vector<1x8x8xf32> to vector<8x8xf32>
    %c0_136 = arith.constant 0 : index
    %c59 = arith.constant 59 : index
    %155 = vector.load %arg13[%c0_136, %c59] : memref<8x452xf32, #tpu.memory_space<vmem>>, vector<8x392xf32>
    %cst_137 = arith.constant dense<0.000000e+00> : vector<8x392xf32>
    %156 = tpu.matmul %154, %155, %cst_137 {dimension_numbers = #tpu.dot_dimension_numbers<[1], [0], [0], [1], [0, 0, 1, 1], [], []>} : vector<8x8xf32>, vector<8x392xf32>, vector<8x392xf32> -> vector<8x392xf32>
    %157 = arith.addf %152, %156 : vector<8x392xf32>
    %c24 = arith.constant 24 : index
    %c0_138 = arith.constant 0 : index
    %c0_139 = arith.constant 0 : index
    %158 = vector.load %arg3[%c24, %c0_138, %c0_139] : memref<25x8x8xf32, #tpu.memory_space<vmem>>, vector<1x8x8xf32>
    %159 = vector.shape_cast %158 : vector<1x8x8xf32> to vector<8x8xf32>
    %c0_140 = arith.constant 0 : index
    %c60 = arith.constant 60 : index
    %160 = vector.load %arg13[%c0_140, %c60] : memref<8x452xf32, #tpu.memory_space<vmem>>, vector<8x392xf32>
    %cst_141 = arith.constant dense<0.000000e+00> : vector<8x392xf32>
    %161 = tpu.matmul %159, %160, %cst_141 {dimension_numbers = #tpu.dot_dimension_numbers<[1], [0], [0], [1], [0, 0, 1, 1], [], []>} : vector<8x8xf32>, vector<8x392xf32>, vector<8x392xf32> -> vector<8x392xf32>
    %162 = arith.addf %157, %161 : vector<8x392xf32>
    %c0_142 = arith.constant 0 : index
    %c0_143 = arith.constant 0 : index
    %163 = vector.load %arg4[%c0_142, %c0_143] : memref<8x1xf32, #tpu.memory_space<vmem>>, vector<8x1xf32>
    %164 = vector.broadcast %163 : vector<8x1xf32> to vector<8x392xf32>
    %165 = arith.addf %162, %164 : vector<8x392xf32>
    %cst_144 = arith.constant 0.000000e+00 : f32
    %166 = vector.broadcast %cst_144 : f32 to vector<8x392xf32>
    %167 = arith.maximumf %165, %166 : vector<8x392xf32>
    %c0_145 = arith.constant 0 : index
    %c0_146 = arith.constant 0 : index
    %168 = vector.load %arg5[%c0_145, %c0_146] : memref<392x50xf32, #tpu.memory_space<vmem>>, vector<392x50xf32>
    %cst_147 = arith.constant dense<0.000000e+00> : vector<8x50xf32>
    %169 = tpu.matmul %167, %168, %cst_147 {dimension_numbers = #tpu.dot_dimension_numbers<[1], [0], [0], [1], [0, 0, 1, 1], [], []>} : vector<8x392xf32>, vector<392x50xf32>, vector<8x50xf32> -> vector<8x50xf32>
    %cst_148 = arith.constant 2.500000e-01 : f32
    %170 = vector.broadcast %cst_148 : f32 to vector<8x50xf32>
    %171 = arith.mulf %169, %170 : vector<8x50xf32>
    %172 = vector.extract_strided_slice %171 {offsets = [0, 0], sizes = [1, 25], strides = [1, 1]} : vector<8x50xf32> to vector<1x25xf32>
    %c0_149 = arith.constant 0 : index
    %c0_150 = arith.constant 0 : index
    %173 = vector.load %arg14[%c0_149, %c0_150] : memref<2x150xf32, #tpu.memory_space<vmem>>, vector<1x25xf32>
    tpu.vector_store %arg14[%c0_149, %c0_150], %172 {strides = array<i32>} : memref<2x150xf32, #tpu.memory_space<vmem>>, vector<1x25xf32>,
    %174 = vector.extract_strided_slice %171 {offsets = [1, 0], sizes = [1, 25], strides = [1, 1]} : vector<8x50xf32> to vector<1x25xf32>
    %c0_151 = arith.constant 0 : index
    %c25 = arith.constant 25 : index
    %175 = vector.load %arg14[%c0_151, %c25] : memref<2x150xf32, #tpu.memory_space<vmem>>, vector<1x25xf32>
    tpu.vector_store %arg14[%c0_151, %c25], %174 {strides = array<i32>} : memref<2x150xf32, #tpu.memory_space<vmem>>, vector<1x25xf32>,
    %176 = vector.extract_strided_slice %171 {offsets = [2, 0], sizes = [1, 25], strides = [1, 1]} : vector<8x50xf32> to vector<1x25xf32>
    %c0_152 = arith.constant 0 : index
    %c50 = arith.constant 50 : index
    %177 = vector.load %arg14[%c0_152, %c50] : memref<2x150xf32, #tpu.memory_space<vmem>>, vector<1x25xf32>
    tpu.vector_store %arg14[%c0_152, %c50], %176 {strides = array<i32>} : memref<2x150xf32, #tpu.memory_space<vmem>>, vector<1x25xf32>,
    %178 = vector.extract_strided_slice %171 {offsets = [3, 0], sizes = [1, 25], strides = [1, 1]} : vector<8x50xf32> to vector<1x25xf32>
    %c0_153 = arith.constant 0 : index
    %c75 = arith.constant 75 : index
    %179 = vector.load %arg14[%c0_153, %c75] : memref<2x150xf32, #tpu.memory_space<vmem>>, vector<1x25xf32>
    tpu.vector_store %arg14[%c0_153, %c75], %178 {strides = array<i32>} : memref<2x150xf32, #tpu.memory_space<vmem>>, vector<1x25xf32>,
    %180 = vector.extract_strided_slice %171 {offsets = [4, 0], sizes = [1, 25], strides = [1, 1]} : vector<8x50xf32> to vector<1x25xf32>
    %c0_154 = arith.constant 0 : index
    %c100 = arith.constant 100 : index
    %181 = vector.load %arg14[%c0_154, %c100] : memref<2x150xf32, #tpu.memory_space<vmem>>, vector<1x25xf32>
    tpu.vector_store %arg14[%c0_154, %c100], %180 {strides = array<i32>} : memref<2x150xf32, #tpu.memory_space<vmem>>, vector<1x25xf32>,
    %182 = vector.extract_strided_slice %171 {offsets = [5, 0], sizes = [1, 25], strides = [1, 1]} : vector<8x50xf32> to vector<1x25xf32>
    %c0_155 = arith.constant 0 : index
    %c125 = arith.constant 125 : index
    %183 = vector.load %arg14[%c0_155, %c125] : memref<2x150xf32, #tpu.memory_space<vmem>>, vector<1x25xf32>
    tpu.vector_store %arg14[%c0_155, %c125], %182 {strides = array<i32>} : memref<2x150xf32, #tpu.memory_space<vmem>>, vector<1x25xf32>,
    %184 = vector.extract_strided_slice %171 {offsets = [0, 25], sizes = [1, 25], strides = [1, 1]} : vector<8x50xf32> to vector<1x25xf32>
    %c1_156 = arith.constant 1 : index
    %c0_157 = arith.constant 0 : index
    %185 = vector.load %arg14[%c1_156, %c0_157] : memref<2x150xf32, #tpu.memory_space<vmem>>, vector<1x25xf32>
    tpu.vector_store %arg14[%c1_156, %c0_157], %184 {strides = array<i32>} : memref<2x150xf32, #tpu.memory_space<vmem>>, vector<1x25xf32>,
    %186 = vector.extract_strided_slice %171 {offsets = [1, 25], sizes = [1, 25], strides = [1, 1]} : vector<8x50xf32> to vector<1x25xf32>
    %c1_158 = arith.constant 1 : index
    %c25_159 = arith.constant 25 : index
    %187 = vector.load %arg14[%c1_158, %c25_159] : memref<2x150xf32, #tpu.memory_space<vmem>>, vector<1x25xf32>
    tpu.vector_store %arg14[%c1_158, %c25_159], %186 {strides = array<i32>} : memref<2x150xf32, #tpu.memory_space<vmem>>, vector<1x25xf32>,
    %188 = vector.extract_strided_slice %171 {offsets = [2, 25], sizes = [1, 25], strides = [1, 1]} : vector<8x50xf32> to vector<1x25xf32>
    %c1_160 = arith.constant 1 : index
    %c50_161 = arith.constant 50 : index
    %189 = vector.load %arg14[%c1_160, %c50_161] : memref<2x150xf32, #tpu.memory_space<vmem>>, vector<1x25xf32>
    tpu.vector_store %arg14[%c1_160, %c50_161], %188 {strides = array<i32>} : memref<2x150xf32, #tpu.memory_space<vmem>>, vector<1x25xf32>,
    %190 = vector.extract_strided_slice %171 {offsets = [3, 25], sizes = [1, 25], strides = [1, 1]} : vector<8x50xf32> to vector<1x25xf32>
    %c1_162 = arith.constant 1 : index
    %c75_163 = arith.constant 75 : index
    %191 = vector.load %arg14[%c1_162, %c75_163] : memref<2x150xf32, #tpu.memory_space<vmem>>, vector<1x25xf32>
    tpu.vector_store %arg14[%c1_162, %c75_163], %190 {strides = array<i32>} : memref<2x150xf32, #tpu.memory_space<vmem>>, vector<1x25xf32>,
    %192 = vector.extract_strided_slice %171 {offsets = [4, 25], sizes = [1, 25], strides = [1, 1]} : vector<8x50xf32> to vector<1x25xf32>
    %c1_164 = arith.constant 1 : index
    %c100_165 = arith.constant 100 : index
    %193 = vector.load %arg14[%c1_164, %c100_165] : memref<2x150xf32, #tpu.memory_space<vmem>>, vector<1x25xf32>
    tpu.vector_store %arg14[%c1_164, %c100_165], %192 {strides = array<i32>} : memref<2x150xf32, #tpu.memory_space<vmem>>, vector<1x25xf32>,
    %194 = vector.extract_strided_slice %171 {offsets = [5, 25], sizes = [1, 25], strides = [1, 1]} : vector<8x50xf32> to vector<1x25xf32>
    %c1_166 = arith.constant 1 : index
    %c125_167 = arith.constant 125 : index
    %195 = vector.load %arg14[%c1_166, %c125_167] : memref<2x150xf32, #tpu.memory_space<vmem>>, vector<1x25xf32>
    tpu.vector_store %arg14[%c1_166, %c125_167], %194 {strides = array<i32>} : memref<2x150xf32, #tpu.memory_space<vmem>>, vector<1x25xf32>,
    %c0_168 = arith.constant 0 : index
    %c0_169 = arith.constant 0 : index
    %196 = vector.load %arg14[%c0_168, %c0_169] : memref<2x150xf32, #tpu.memory_space<vmem>>, vector<2x150xf32>
    %c0_170 = arith.constant 0 : index
    %c0_171 = arith.constant 0 : index
    %197 = vector.load %arg6[%c0_170, %c0_171] : memref<150x64xf32, #tpu.memory_space<vmem>>, vector<150x64xf32>
    %cst_172 = arith.constant dense<0.000000e+00> : vector<2x64xf32>
    %198 = tpu.matmul %196, %197, %cst_172 {dimension_numbers = #tpu.dot_dimension_numbers<[1], [0], [0], [1], [0, 0, 1, 1], [], []>} : vector<2x150xf32>, vector<150x64xf32>, vector<2x64xf32> -> vector<2x64xf32>
    %c0_173 = arith.constant 0 : index
    %c0_174 = arith.constant 0 : index
    %199 = vector.load %arg7[%c0_173, %c0_174] : memref<1x64xf32, #tpu.memory_space<vmem>>, vector<1x64xf32>
    %200 = vector.broadcast %199 : vector<1x64xf32> to vector<2x64xf32>
    %201 = arith.addf %198, %200 : vector<2x64xf32>
    %cst_175 = arith.constant 0.000000e+00 : f32
    %202 = vector.broadcast %cst_175 : f32 to vector<2x64xf32>
    %203 = arith.maximumf %201, %202 : vector<2x64xf32>
    %c0_176 = arith.constant 0 : index
    %c0_177 = arith.constant 0 : index
    %204 = vector.load %arg8[%c0_176, %c0_177] : memref<64x8xf32, #tpu.memory_space<vmem>>, vector<64x8xf32>
    %cst_178 = arith.constant dense<0.000000e+00> : vector<2x8xf32>
    %205 = tpu.matmul %203, %204, %cst_178 {dimension_numbers = #tpu.dot_dimension_numbers<[1], [0], [0], [1], [0, 0, 1, 1], [], []>} : vector<2x64xf32>, vector<64x8xf32>, vector<2x8xf32> -> vector<2x8xf32>
    %c0_179 = arith.constant 0 : index
    %c0_180 = arith.constant 0 : index
    %206 = vector.load %arg9[%c0_179, %c0_180] : memref<1x8xf32, #tpu.memory_space<vmem>>, vector<1x8xf32>
    %207 = vector.broadcast %206 : vector<1x8xf32> to vector<2x8xf32>
    %208 = arith.addf %205, %207 : vector<2x8xf32>
    %cst_181 = arith.constant 0.000000e+00 : f32
    %209 = vector.broadcast %cst_181 : f32 to vector<2x8xf32>
    %210 = arith.maximumf %208, %209 : vector<2x8xf32>
    %c0_182 = arith.constant 0 : index
    %c0_183 = arith.constant 0 : index
    %211 = vector.load %arg10[%c0_182, %c0_183] : memref<8x3xf32, #tpu.memory_space<vmem>>, vector<8x3xf32>
    %cst_184 = arith.constant dense<0.000000e+00> : vector<2x3xf32>
    %212 = tpu.matmul %210, %211, %cst_184 {dimension_numbers = #tpu.dot_dimension_numbers<[1], [0], [0], [1], [0, 0, 1, 1], [], []>} : vector<2x8xf32>, vector<8x3xf32>, vector<2x3xf32> -> vector<2x3xf32>
    %c0_185 = arith.constant 0 : index
    %c0_186 = arith.constant 0 : index
    %213 = vector.load %arg11[%c0_185, %c0_186] : memref<1x3xf32, #tpu.memory_space<vmem>>, vector<1x3xf32>
    %214 = vector.broadcast %213 : vector<1x3xf32> to vector<2x3xf32>
    %215 = arith.addf %212, %214 : vector<2x3xf32>
    %c0_187 = arith.constant 0 : index
    %c0_188 = arith.constant 0 : index
    %216 = vector.load %arg12[%c0_187, %c0_188] : memref<2x3xf32, #tpu.memory_space<vmem>>, vector<2x3xf32>
    tpu.vector_store %arg12[%c0_187, %c0_188], %215 {strides = array<i32>} : memref<2x3xf32, #tpu.memory_space<vmem>>, vector<2x3xf32>,
    return
  }
}

</mosaic_0001>

<llo_original>
// kernel: small_model_forward.1
$region0: #{small_model_forward.1}
  #allocation0 [shape = 'u32[]', space=smem, size = 0x4, offset = 0x4, fixed_abs, tag = 'smem constant byte address 0x4 - core index']
  #allocation1 [shape = 'u32[144,128]{1,0:T(1,128)}', space=vmem, size = 0x12000, scoped, tag = 'internal scratch']
  #allocation2 [shape = 'f32[8,452]{1,0:T(8,128)}', space=vmem, size = 0x4000, scoped, tag = 'scratch operand']
  #allocation3 [shape = 'f32[2,150]{1,0:T(2,128)}', space=vmem, size = 0x800, scoped, tag = 'scratch operand']
  %s0 = inlined_call_operand.vmem [shape: f32[4,80,452], index: 0, kind: input, shape index: {}]
  %s1 = inlined_call_operand.vmem [shape: f32[8,80], index: 1, kind: input, shape index: {}]
  %s2 = inlined_call_operand.vmem [shape: f32[8,1], index: 2, kind: input, shape index: {}]
  %s3 = inlined_call_operand.vmem [shape: f32[25,8,8], index: 3, kind: input, shape index: {}]
  %s4 = inlined_call_operand.vmem [shape: f32[8,1], index: 4, kind: input, shape index: {}]
  %s5 = inlined_call_operand.vmem [shape: f32[392,50], index: 5, kind: input, shape index: {}]
  %s6 = inlined_call_operand.vmem [shape: f32[150,64], index: 6, kind: input, shape index: {}]
  %s7 = inlined_call_operand.vmem [shape: f32[1,64], index: 7, kind: input, shape index: {}]
  %s8 = inlined_call_operand.vmem [shape: f32[64,8], index: 8, kind: input, shape index: {}]
  %s9 = inlined_call_operand.vmem [shape: f32[1,8], index: 9, kind: input, shape index: {}]
  %s10 = inlined_call_operand.vmem [shape: f32[8,3], index: 10, kind: input, shape index: {}]
  %s11 = inlined_call_operand.vmem [shape: f32[1,3], index: 11, kind: input, shape index: {}]
  %s12 = inlined_call_operand.hbm [shape: f32[2,3], index: 12, kind: output, shape index: {}]
  %s13 = sld [smem:[#allocation0]]
  $region58: #{small_model_forward.1} parent=0
    _
  %s15 = ssub.s32 1, %s13
  %s16 = scalar_select 0, %s15, %s13
  $region1: #{small_model_forward.1} parent=0
    #allocation4 [shape = 'u8[1024]{0}', space=vmem, size = 0x400, scoped, tag = 'output window, operand 0, single buffered']
    #allocation5 [shape = 's32[1]{0}', space=sflag, size = 0x4, scoped, tag = 'scoped memory for small_model_forward.1']
    %17 = vsyncpa [#allocation5], 0
    // Predicated region
    $region2: #{small_model_forward.1} parent=1 // pred_check
      _
    $region3: #{small_model_forward.1} parent=1 // pred_check_branch
      %19 = sbr.rel (0) target = $region5
    $region4: #{small_model_forward.1} parent=1 // pred_region
      _
    $region5: #{small_model_forward.1} parent=1 // pred_fallthru
      _
    // Predicated region
    $region6: #{small_model_forward.1} parent=1 // pred_check
      _
    $region7: #{small_model_forward.1} parent=1 // pred_check_branch
      %21 = sbr.rel (0) target = $region9
    $region8: #{small_model_forward.1} parent=1 // pred_region
      _
    $region9: #{small_model_forward.1} parent=1 // pred_fallthru
      _
    // Predicated region
    $region10: #{small_model_forward.1} parent=1 // pred_check
      _
    $region11: #{small_model_forward.1} parent=1 // pred_check_branch
      %23 = sbr.rel (0) target = $region13
    $region12: #{small_model_forward.1} parent=1 // pred_region
      _
    $region13: #{small_model_forward.1} parent=1 // pred_fallthru
      _
    // Predicated region
    $region14: #{small_model_forward.1} parent=1 // pred_check
      _
    $region15: #{small_model_forward.1} parent=1 // pred_check_branch
      %25 = sbr.rel (0) target = $region17
    $region16: #{small_model_forward.1} parent=1 // pred_region
      _
    $region17: #{small_model_forward.1} parent=1 // pred_fallthru
      _
    // Predicated region
    $region18: #{small_model_forward.1} parent=1 // pred_check
      _
    $region19: #{small_model_forward.1} parent=1 // pred_check_branch
      %27 = sbr.rel (0) target = $region21
    $region20: #{small_model_forward.1} parent=1 // pred_region
      _
    $region21: #{small_model_forward.1} parent=1 // pred_fallthru
      _
    // Predicated region
    $region22: #{small_model_forward.1} parent=1 // pred_check
      _
    $region23: #{small_model_forward.1} parent=1 // pred_check_branch
      %29 = sbr.rel (0) target = $region25
    $region24: #{small_model_forward.1} parent=1 // pred_region
      _
    $region25: #{small_model_forward.1} parent=1 // pred_fallthru
      _
    // Predicated region
    $region26: #{small_model_forward.1} parent=1 // pred_check
      _
    $region27: #{small_model_forward.1} parent=1 // pred_check_branch
      %31 = sbr.rel (0) target = $region29
    $region28: #{small_model_forward.1} parent=1 // pred_region
      _
    $region29: #{small_model_forward.1} parent=1 // pred_fallthru
      _
    // Predicated region
    $region30: #{small_model_forward.1} parent=1 // pred_check
      _
    $region31: #{small_model_forward.1} parent=1 // pred_check_branch
      %33 = sbr.rel (0) target = $region33
    $region32: #{small_model_forward.1} parent=1 // pred_region
      _
    $region33: #{small_model_forward.1} parent=1 // pred_fallthru
      _
    // Predicated region
    $region34: #{small_model_forward.1} parent=1 // pred_check
      _
    $region35: #{small_model_forward.1} parent=1 // pred_check_branch
      %35 = sbr.rel (0) target = $region37
    $region36: #{small_model_forward.1} parent=1 // pred_region
      _
    $region37: #{small_model_forward.1} parent=1 // pred_fallthru
      _
    // Predicated region
    $region38: #{small_model_forward.1} parent=1 // pred_check
      _
    $region39: #{small_model_forward.1} parent=1 // pred_check_branch
      %37 = sbr.rel (0) target = $region41
    $region40: #{small_model_forward.1} parent=1 // pred_region
      _
    $region41: #{small_model_forward.1} parent=1 // pred_fallthru
      _
    // Predicated region
    $region42: #{small_model_forward.1} parent=1 // pred_check
      _
    $region43: #{small_model_forward.1} parent=1 // pred_check_branch
      %39 = sbr.rel (0) target = $region45
    $region44: #{small_model_forward.1} parent=1 // pred_region
      _
    $region45: #{small_model_forward.1} parent=1 // pred_fallthru
      _
    // Predicated region
    $region46: #{small_model_forward.1} parent=1 // pred_check
      _
    $region47: #{small_model_forward.1} parent=1 // pred_check_branch
      %41 = sbr.rel (0) target = $region49
    $region48: #{small_model_forward.1} parent=1 // pred_region
      _
    $region49: #{small_model_forward.1} parent=1 // pred_fallthru
      _
    %v42 = vld [vmem:[%s2] sm:$0xff]
    %v43 = vld [vmem:[%s1] sm:$0xff]
    %v44 = vld [vmem:[%s0] sm:$0xff]
    %v45 = vld [vmem:[%s0 + $0x8] sm:$0xff]
    %v46 = vld [vmem:[%s0 + $0x10] sm:$0xff]
    %v47 = vld [vmem:[%s0 + $0x18] sm:$0xff]
    %v48 = vld [vmem:[%s0 + $0x20] sm:$0xff]
    %v49 = vld [vmem:[%s0 + $0x28] sm:$0xff]
    %v50 = vld [vmem:[%s0 + $0x30] sm:$0xff]
    %v51 = vld [vmem:[%s0 + $0x38] sm:$0xff]
    %v52 = vld [vmem:[%s0 + $0x40] sm:$0xff]
    %v53 = vld [vmem:[%s0 + $0x48] sm:$0xff]
    %v54 = vld [vmem:[%s0 + $0x50] sm:$0xff]
    %v55 = vld [vmem:[%s0 + $0x58] sm:$0xff]
    %v56 = vld [vmem:[%s0 + $0x60] sm:$0xff]
    %v57 = vld [vmem:[%s0 + $0x68] sm:$0xff]
    %v58 = vld [vmem:[%s0 + $0x70] sm:$0xff]
    %v59 = vld [vmem:[%s0 + $0x78] sm:$0xff]
    %v60 = vld [vmem:[%s0 + $0x80] sm:$0xff]
    %v61 = vld [vmem:[%s0 + $0x88] sm:$0xff]
    %v62 = vld [vmem:[%s0 + $0x90] sm:$0xff]
    %v63 = vld [vmem:[%s0 + $0x98] sm:$0xff]
    %v64 = vld [vmem:[%s0 + $0xa0] sm:$0xff]
    %v65 = vld [vmem:[%s0 + $0xa8] sm:$0xff]
    %v66 = vld [vmem:[%s0 + $0xb0] sm:$0xff]
    %v67 = vld [vmem:[%s0 + $0xb8] sm:$0xff]
    %v68 = vld [vmem:[%s0 + $0xc0] sm:$0xff]
    %v69 = vld [vmem:[%s0 + $0xc8] sm:$0xff]
    %v70 = vld [vmem:[%s0 + $0xd0] sm:$0xff]
    %v71 = vld [vmem:[%s0 + $0xd8] sm:$0xff]
    %v72 = vld [vmem:[%s0 + $0xe0] sm:$0xff]
    %v73 = vld [vmem:[%s0 + $0xe8] sm:$0xff]
    %v74 = vld [vmem:[%s0 + $0xf0] sm:$0xff]
    %v75 = vld [vmem:[%s0 + $0xf8] sm:$0xff]
    %v76 = vld [vmem:[%s0 + $0x100] sm:$0xff]
    %v77 = vld [vmem:[%s0 + $0x108] sm:$0xff]
    %v78 = vld [vmem:[%s0 + $0x110] sm:$0xff]
    %v79 = vld [vmem:[%s0 + $0x118] sm:$0xff]
    %v80 = vld [vmem:[%s0 + $0x120] sm:$0xff]
    %v81 = vld [vmem:[%s0 + $0x128] sm:$0xff]
    %v82 = vld [vmem:[%s0 + $0x130] sm:$0xff]
    %v83 = vld [vmem:[%s0 + $0x138] sm:$0xff]
    %85 = vset.pattern.permute.xlu0 0
    %86 = vperm.xlu0 %85, %v42
    %v87 = vpop.permute.xlu0 %86
    %vm89 = vcmask 654336
    %v91 = vsel %vm89, %v43, 0
    %93 = vmatprep.subr.mxu0 %v45
    %94 = vmatpush1.msra.mxu0 %v44
    %95 = vmatprep.subr.mxu0 %v49
    %96 = vmatpush1.msra.mxu0 %v48
    %97 = vmatprep.subr.mxu0 %v53
    %98 = vmatpush1.msra.mxu0 %v52
    %99 = vmatprep.subr.mxu0 %v57
    %100 = vmatpush1.msra.mxu0 %v56
    %101 = vmatprep.subr.mxu0 %v61
    %102 = vmatpush1.msra.mxu0 %v60
    %103 = vmatprep.subr.mxu0 %v65
    %104 = vmatpush1.msra.mxu0 %v64
    %105 = vmatprep.subr.mxu0 %v69
    %106 = vmatpush1.msra.mxu0 %v68
    %107 = vmatprep.subr.mxu0 %v73
    %108 = vmatpush1.msra.mxu0 %v72
    %109 = vmatprep.subr.mxu0 %v77
    %110 = vmatpush1.msra.mxu0 %v76
    %111 = vmatprep.subr.mxu0 %v81
    %112 = vmatpush1.msra.mxu0 %v80
    %113 = vmatprep.subr.mxu0 0.0
    %114 = vmatpush1.msra.mxu0 0.0
    %115 = vmatprep.subr.mxu0 0.0
    %116 = vmatpush1.msra.mxu0 0.0
    %117 = vmatprep.subr.mxu0 0.0
    %118 = vmatpush1.msra.mxu0 0.0
    %119 = vmatprep.subr.mxu0 0.0
    %120 = vmatpush1.msra.mxu0 0.0
    %121 = vmatprep.subr.mxu0 0.0
    %122 = vmatpush1.msra.mxu0 0.0
    %123 = vmatprep.subr.mxu0 0.0
    %124 = vmatpush1.msra.mxu0 0.0
    %125 = vmatprep.subr.mxu0 0.0
    %126 = vmatpush1.msra.mxu0 0.0
    %127 = vmatprep.subr.mxu0 0.0
    %128 = vmatpush1.msra.mxu0 0.0
    %129 = vmatprep.subr.mxu0 0.0
    %130 = vmatpush1.msra.mxu0 0.0
    %131 = vmatprep.subr.mxu0 0.0
    %132 = vmatpush1.msra.mxu0 0.0
    %133 = vmatprep.subr.mxu0 0.0
    %134 = vmatpush1.msra.mxu0 0.0
    %135 = vmatprep.subr.mxu0 0.0
    %136 = vmatpush1.msra.mxu0 0.0
    %137 = vmatprep.subr.mxu0 0.0
    %138 = vmatpush1.msra.mxu0 0.0
    %139 = vmatprep.subr.mxu0 0.0
    %140 = vmatpush1.msra.mxu0 0.0
    %141 = vmatprep.subr.mxu0 0.0
    %142 = vmatpush1.msra.mxu0 0.0
    %143 = vmatprep.subr.mxu0 0.0
    %144 = vmatpush1.msra.mxu0 0.0
    %145 = vmatprep.subr.mxu0 0.0
    %146 = vmatpush1.msra.mxu0 0.0
    %147 = vmatprep.subr.mxu0 0.0
    %148 = vmatpush1.msra.mxu0 0.0
    %149 = vmatprep.subr.mxu0 0.0
    %150 = vmatpush1.msra.mxu0 0.0
    %151 = vmatprep.subr.mxu0 0.0
    %152 = vmatpush1.msra.mxu0 0.0
    %153 = vmatprep.subr.mxu0 0.0
    %154 = vmatpush1.msra.mxu0 0.0
    %155 = vmatprep.subr.mxu0 0.0
    %156 = vmatpush1.msra.mxu0 0.0
    %157 = vmatprep.mubr.f32.mxu0 0.0
    %158 = vmatmul.mubr.f32.gmra.mrb[0].mxu0 %v91
    %v159 = vpop.f32.mrb[0].mxu0
    %v160 = vadd.f32 %v87, %v159
    %v161 = vpop.f32.mrb[0].mxu0
    %v162 = vadd.f32 %v87, %v161
    %163 = vdwg.mxu0
    %164 = vmatprep.subr.mxu0 %v47
    %165 = vmatpush1.msra.mxu0 %v46
    %166 = vmatprep.subr.mxu0 %v51
    %167 = vmatpush1.msra.mxu0 %v50
    %168 = vmatprep.subr.mxu0 %v55
    %169 = vmatpush1.msra.mxu0 %v54
    %170 = vmatprep.subr.mxu0 %v59
    %171 = vmatpush1.msra.mxu0 %v58
    %172 = vmatprep.subr.mxu0 %v63
    %173 = vmatpush1.msra.mxu0 %v62
    %174 = vmatprep.subr.mxu0 %v67
    %175 = vmatpush1.msra.mxu0 %v66
    %176 = vmatprep.subr.mxu0 %v71
    %177 = vmatpush1.msra.mxu0 %v70
    %178 = vmatprep.subr.mxu0 %v75
    %179 = vmatpush1.msra.mxu0 %v74
    %180 = vmatprep.subr.mxu0 %v79
    %181 = vmatpush1.msra.mxu0 %v78
    %182 = vmatprep.subr.mxu0 %v83
    %183 = vmatpush1.msra.mxu0 %v82
    %184 = vmatprep.subr.mxu0 0.0
    %185 = vmatpush1.msra.mxu0 0.0
    %186 = vmatprep.subr.mxu0 0.0
    %187 = vmatpush1.msra.mxu0 0.0
    %188 = vmatprep.subr.mxu0 0.0
    %189 = vmatpush1.msra.mxu0 0.0
    %190 = vmatprep.subr.mxu0 0.0
    %191 = vmatpush1.msra.mxu0 0.0
    %192 = vmatprep.subr.mxu0 0.0
    %193 = vmatpush1.msra.mxu0 0.0
    %194 = vmatprep.subr.mxu0 0.0
    %195 = vmatpush1.msra.mxu0 0.0
    %196 = vmatprep.subr.mxu0 0.0
    %197 = vmatpush1.msra.mxu0 0.0
    %198 = vmatprep.subr.mxu0 0.0
    %199 = vmatpush1.msra.mxu0 0.0
    %200 = vmatprep.subr.mxu0 0.0
    %201 = vmatpush1.msra.mxu0 0.0
    %202 = vmatprep.subr.mxu0 0.0
    %203 = vmatpush1.msra.mxu0 0.0
    %204 = vmatprep.subr.mxu0 0.0
    %205 = vmatpush1.msra.mxu0 0.0
    %206 = vmatprep.subr.mxu0 0.0
    %207 = vmatpush1.msra.mxu0 0.0
    %208 = vmatprep.subr.mxu0 0.0
    %209 = vmatpush1.msra.mxu0 0.0
    %210 = vmatprep.subr.mxu0 0.0
    %211 = vmatpush1.msra.mxu0 0.0
    %212 = vmatprep.subr.mxu0 0.0
    %213 = vmatpush1.msra.mxu0 0.0
    %214 = vmatprep.subr.mxu0 0.0
    %215 = vmatpush1.msra.mxu0 0.0
    %216 = vmatprep.subr.mxu0 0.0
    %217 = vmatpush1.msra.mxu0 0.0
    %218 = vmatprep.subr.mxu0 0.0
    %219 = vmatpush1.msra.mxu0 0.0
    %220 = vmatprep.subr.mxu0 0.0
    %221 = vmatpush1.msra.mxu0 0.0
    %222 = vmatprep.subr.mxu0 0.0
    %223 = vmatpush1.msra.mxu0 0.0
    %224 = vmatprep.subr.mxu0 0.0
    %225 = vmatpush1.msra.mxu0 0.0
    %226 = vmatprep.subr.mxu0 0.0
    %227 = vmatpush1.msra.mxu0 0.0
    %228 = vmatprep.mubr.f32.mxu0 0.0
    %229 = vmatmul.mubr.f32.gmra.mrb[0].mxu0 %v91
    %v230 = vpop.f32.mrb[0].mxu0
    %v231 = vadd.f32 %v87, %v230
    %v232 = vpop.f32.mrb[0].mxu0
    %v233 = vadd.f32 %v87, %v232
    %234 = vdwg.mxu0
    %v235 = vmax.f32 %v160, 0.0
    %v236 = vmax.f32 %v162, 0.0
    %v237 = vmax.f32 %v231, 0.0
    %v238 = vmax.f32 %v233, 0.0
    %s239 = scalar_lea.vmem %s0, 320
    %v240 = vld [vmem:[%s239] sm:$0xff]
    %v241 = vld [vmem:[%s239 + $0x8] sm:$0xff]
    %v242 = vld [vmem:[%s239 + $0x10] sm:$0xff]
    %v243 = vld [vmem:[%s239 + $0x18] sm:$0xff]
    %v244 = vld [vmem:[%s239 + $0x20] sm:$0xff]
    %v245 = vld [vmem:[%s239 + $0x28] sm:$0xff]
    %v246 = vld [vmem:[%s239 + $0x30] sm:$0xff]
    %v247 = vld [vmem:[%s239 + $0x38] sm:$0xff]
    %v248 = vld [vmem:[%s239 + $0x40] sm:$0xff]
    %v249 = vld [vmem:[%s239 + $0x48] sm:$0xff]
    %v250 = vld [vmem:[%s239 + $0x50] sm:$0xff]
    %v251 = vld [vmem:[%s239 + $0x58] sm:$0xff]
    %v252 = vld [vmem:[%s239 + $0x60] sm:$0xff]
    %v253 = vld [vmem:[%s239 + $0x68] sm:$0xff]
    %v254 = vld [vmem:[%s239 + $0x70] sm:$0xff]
    %v255 = vld [vmem:[%s239 + $0x78] sm:$0xff]
    %v256 = vld [vmem:[%s239 + $0x80] sm:$0xff]
    %v257 = vld [vmem:[%s239 + $0x88] sm:$0xff]
    %v258 = vld [vmem:[%s239 + $0x90] sm:$0xff]
    %v259 = vld [vmem:[%s239 + $0x98] sm:$0xff]
    %v260 = vld [vmem:[%s239 + $0xa0] sm:$0xff]
    %v261 = vld [vmem:[%s239 + $0xa8] sm:$0xff]
    %v262 = vld [vmem:[%s239 + $0xb0] sm:$0xff]
    %v263 = vld [vmem:[%s239 + $0xb8] sm:$0xff]
    %v264 = vld [vmem:[%s239 + $0xc0] sm:$0xff]
    %v265 = vld [vmem:[%s239 + $0xc8] sm:$0xff]
    %v266 = vld [vmem:[%s239 + $0xd0] sm:$0xff]
    %v267 = vld [vmem:[%s239 + $0xd8] sm:$0xff]
    %v268 = vld [vmem:[%s239 + $0xe0] sm:$0xff]
    %v269 = vld [vmem:[%s239 + $0xe8] sm:$0xff]
    %v270 = vld [vmem:[%s239 + $0xf0] sm:$0xff]
    %v271 = vld [vmem:[%s239 + $0xf8] sm:$0xff]
    %v272 = vld [vmem:[%s239 + $0x100] sm:$0xff]
    %v273 = vld [vmem:[%s239 + $0x108] sm:$0xff]
    %v274 = vld [vmem:[%s239 + $0x110] sm:$0xff]
    %v275 = vld [vmem:[%s239 + $0x118] sm:$0xff]
    %v276 = vld [vmem:[%s239 + $0x120] sm:$0xff]
    %v277 = vld [vmem:[%s239 + $0x128] sm:$0xff]
    %v278 = vld [vmem:[%s239 + $0x130] sm:$0xff]
    %v279 = vld [vmem:[%s239 + $0x138] sm:$0xff]
    %280 = vmatprep.subr.mxu0 %v241
    %281 = vmatpush1.msra.mxu0 %v240
    %282 = vmatprep.subr.mxu0 %v245
    %283 = vmatpush1.msra.mxu0 %v244
    %284 = vmatprep.subr.mxu0 %v249
    %285 = vmatpush1.msra.mxu0 %v248
    %286 = vmatprep.subr.mxu0 %v253
    %287 = vmatpush1.msra.mxu0 %v252
    %288 = vmatprep.subr.mxu0 %v257
    %289 = vmatpush1.msra.mxu0 %v256
    %290 = vmatprep.subr.mxu0 %v261
    %291 = vmatpush1.msra.mxu0 %v260
    %292 = vmatprep.subr.mxu0 %v265
    %293 = vmatpush1.msra.mxu0 %v264
    %294 = vmatprep.subr.mxu0 %v269
    %295 = vmatpush1.msra.mxu0 %v268
    %296 = vmatprep.subr.mxu0 %v273
    %297 = vmatpush1.msra.mxu0 %v272
    %298 = vmatprep.subr.mxu0 %v277
    %299 = vmatpush1.msra.mxu0 %v276
    %300 = vmatprep.subr.mxu0 0.0
    %301 = vmatpush1.msra.mxu0 0.0
    %302 = vmatprep.subr.mxu0 0.0
    %303 = vmatpush1.msra.mxu0 0.0
    %304 = vmatprep.subr.mxu0 0.0
    %305 = vmatpush1.msra.mxu0 0.0
    %306 = vmatprep.subr.mxu0 0.0
    %307 = vmatpush1.msra.mxu0 0.0
    %308 = vmatprep.subr.mxu0 0.0
    %309 = vmatpush1.msra.mxu0 0.0
    %310 = vmatprep.subr.mxu0 0.0
    %311 = vmatpush1.msra.mxu0 0.0
    %312 = vmatprep.subr.mxu0 0.0
    %313 = vmatpush1.msra.mxu0 0.0
    %314 = vmatprep.subr.mxu0 0.0
    %315 = vmatpush1.msra.mxu0 0.0
    %316 = vmatprep.subr.mxu0 0.0
    %317 = vmatpush1.msra.mxu0 0.0
    %318 = vmatprep.subr.mxu0 0.0
    %319 = vmatpush1.msra.mxu0 0.0
    %320 = vmatprep.subr.mxu0 0.0
    %321 = vmatpush1.msra.mxu0 0.0
    %322 = vmatprep.subr.mxu0 0.0
    %323 = vmatpush1.msra.mxu0 0.0
    %324 = vmatprep.subr.mxu0 0.0
    %325 = vmatpush1.msra.mxu0 0.0
    %326 = vmatprep.subr.mxu0 0.0
    %327 = vmatpush1.msra.mxu0 0.0
    %328 = vmatprep.subr.mxu0 0.0
    %329 = vmatpush1.msra.mxu0 0.0
    %330 = vmatprep.subr.mxu0 0.0
    %331 = vmatpush1.msra.mxu0 0.0
    %332 = vmatprep.subr.mxu0 0.0
    %333 = vmatpush1.msra.mxu0 0.0
    %334 = vmatprep.subr.mxu0 0.0
    %335 = vmatpush1.msra.mxu0 0.0
    %336 = vmatprep.subr.mxu0 0.0
    %337 = vmatpush1.msra.mxu0 0.0
    %338 = vmatprep.subr.mxu0 0.0
    %339 = vmatpush1.msra.mxu0 0.0
    %340 = vmatprep.subr.mxu0 0.0
    %341 = vmatpush1.msra.mxu0 0.0
    %342 = vmatprep.subr.mxu0 0.0
    %343 = vmatpush1.msra.mxu0 0.0
    %344 = vmatprep.mubr.f32.mxu0 0.0
    %345 = vmatmul.mubr.f32.gmra.mrb[0].mxu0 %v91
    %v346 = vpop.f32.mrb[0].mxu0
    %v347 = vadd.f32 %v87, %v346
    %v348 = vpop.f32.mrb[0].mxu0
    %v349 = vadd.f32 %v87, %v348
    %350 = vdwg.mxu0
    %351 = vmatprep.subr.mxu0 %v243
    %352 = vmatpush1.msra.mxu0 %v242
    %353 = vmatprep.subr.mxu0 %v247
    %354 = vmatpush1.msra.mxu0 %v246
    %355 = vmatprep.subr.mxu0 %v251
    %356 = vmatpush1.msra.mxu0 %v250
    %357 = vmatprep.subr.mxu0 %v255
    %358 = vmatpush1.msra.mxu0 %v254
    %359 = vmatprep.subr.mxu0 %v259
    %360 = vmatpush1.msra.mxu0 %v258
    %361 = vmatprep.subr.mxu0 %v263
    %362 = vmatpush1.msra.mxu0 %v262
    %363 = vmatprep.subr.mxu0 %v267
    %364 = vmatpush1.msra.mxu0 %v266
    %365 = vmatprep.subr.mxu0 %v271
    %366 = vmatpush1.msra.mxu0 %v270
    %367 = vmatprep.subr.mxu0 %v275
    %368 = vmatpush1.msra.mxu0 %v274
    %369 = vmatprep.subr.mxu0 %v279
    %370 = vmatpush1.msra.mxu0 %v278
    %371 = vmatprep.subr.mxu0 0.0
    %372 = vmatpush1.msra.mxu0 0.0
    %373 = vmatprep.subr.mxu0 0.0
    %374 = vmatpush1.msra.mxu0 0.0
    %375 = vmatprep.subr.mxu0 0.0
    %376 = vmatpush1.msra.mxu0 0.0
    %377 = vmatprep.subr.mxu0 0.0
    %378 = vmatpush1.msra.mxu0 0.0
    %379 = vmatprep.subr.mxu0 0.0
    %380 = vmatpush1.msra.mxu0 0.0
    %381 = vmatprep.subr.mxu0 0.0
    %382 = vmatpush1.msra.mxu0 0.0
    %383 = vmatprep.subr.mxu0 0.0
    %384 = vmatpush1.msra.mxu0 0.0
    %385 = vmatprep.subr.mxu0 0.0
    %386 = vmatpush1.msra.mxu0 0.0
    %387 = vmatprep.subr.mxu0 0.0
    %388 = vmatpush1.msra.mxu0 0.0
    %389 = vmatprep.subr.mxu0 0.0
    %390 = vmatpush1.msra.mxu0 0.0
    %391 = vmatprep.subr.mxu0 0.0
    %392 = vmatpush1.msra.mxu0 0.0
    %393 = vmatprep.subr.mxu0 0.0
    %394 = vmatpush1.msra.mxu0 0.0
    %395 = vmatprep.subr.mxu0 0.0
    %396 = vmatpush1.msra.mxu0 0.0
    %397 = vmatprep.subr.mxu0 0.0
    %398 = vmatpush1.msra.mxu0 0.0
    %399 = vmatprep.subr.mxu0 0.0
    %400 = vmatpush1.msra.mxu0 0.0
    %401 = vmatprep.subr.mxu0 0.0
    %402 = vmatpush1.msra.mxu0 0.0
    %403 = vmatprep.subr.mxu0 0.0
    %404 = vmatpush1.msra.mxu0 0.0
    %405 = vmatprep.subr.mxu0 0.0
    %406 = vmatpush1.msra.mxu0 0.0
    %407 = vmatprep.subr.mxu0 0.0
    %408 = vmatpush1.msra.mxu0 0.0
    %409 = vmatprep.subr.mxu0 0.0
    %410 = vmatpush1.msra.mxu0 0.0
    %411 = vmatprep.subr.mxu0 0.0
    %412 = vmatpush1.msra.mxu0 0.0
    %413 = vmatprep.subr.mxu0 0.0
    %414 = vmatpush1.msra.mxu0 0.0
    %415 = vmatprep.mubr.f32.mxu0 0.0
    %416 = vmatmul.mubr.f32.gmra.mrb[0].mxu0 %v91
    %v417 = vpop.f32.mrb[0].mxu0
    %v418 = vadd.f32 %v87, %v417
    %v419 = vpop.f32.mrb[0].mxu0
    %v420 = vadd.f32 %v87, %v419
    %421 = vdwg.mxu0
    %v422 = vmax.f32 %v347, 0.0
    %v423 = vmax.f32 %v349, 0.0
    %v424 = vmax.f32 %v418, 0.0
    %v425 = vmax.f32 %v420, 0.0
    %v426 = vadd.f32 %v235, %v422
    %v427 = vadd.f32 %v236, %v423
    %v428 = vadd.f32 %v237, %v424
    %v429 = vadd.f32 %v238, %v425
    %s430 = scalar_lea.vmem %s0, 640
    %v431 = vld [vmem:[%s430] sm:$0xff]
    %v432 = vld [vmem:[%s430 + $0x8] sm:$0xff]
    %v433 = vld [vmem:[%s430 + $0x10] sm:$0xff]
    %v434 = vld [vmem:[%s430 + $0x18] sm:$0xff]
    %v435 = vld [vmem:[%s430 + $0x20] sm:$0xff]
    %v436 = vld [vmem:[%s430 + $0x28] sm:$0xff]
    %v437 = vld [vmem:[%s430 + $0x30] sm:$0xff]
    %v438 = vld [vmem:[%s430 + $0x38] sm:$0xff]
    %v439 = vld [vmem:[%s430 + $0x40] sm:$0xff]
    %v440 = vld [vmem:[%s430 + $0x48] sm:$0xff]
    %v441 = vld [vmem:[%s430 + $0x50] sm:$0xff]
    %v442 = vld [vmem:[%s430 + $0x58] sm:$0xff]
    %v443 = vld [vmem:[%s430 + $0x60] sm:$0xff]
    %v444 = vld [vmem:[%s430 + $0x68] sm:$0xff]
    %v445 = vld [vmem:[%s430 + $0x70] sm:$0xff]
    %v446 = vld [vmem:[%s430 + $0x78] sm:$0xff]
    %v447 = vld [vmem:[%s430 + $0x80] sm:$0xff]
    %v448 = vld [vmem:[%s430 + $0x88] sm:$0xff]
    %v449 = vld [vmem:[%s430 + $0x90] sm:$0xff]
    %v450 = vld [vmem:[%s430 + $0x98] sm:$0xff]
    %v451 = vld [vmem:[%s430 + $0xa0] sm:$0xff]
    %v452 = vld [vmem:[%s430 + $0xa8] sm:$0xff]
    %v453 = vld [vmem:[%s430 + $0xb0] sm:$0xff]
    %v454 = vld [vmem:[%s430 + $0xb8] sm:$0xff]
    %v455 = vld [vmem:[%s430 + $0xc0] sm:$0xff]
    %v456 = vld [vmem:[%s430 + $0xc8] sm:$0xff]
    %v457 = vld [vmem:[%s430 + $0xd0] sm:$0xff]
    %v458 = vld [vmem:[%s430 + $0xd8] sm:$0xff]
    %v459 = vld [vmem:[%s430 + $0xe0] sm:$0xff]
    %v460 = vld [vmem:[%s430 + $0xe8] sm:$0xff]
    %v461 = vld [vmem:[%s430 + $0xf0] sm:$0xff]
    %v462 = vld [vmem:[%s430 + $0xf8] sm:$0xff]
    %v463 = vld [vmem:[%s430 + $0x100] sm:$0xff]
    %v464 = vld [vmem:[%s430 + $0x108] sm:$0xff]
    %v465 = vld [vmem:[%s430 + $0x110] sm:$0xff]
    %v466 = vld [vmem:[%s430 + $0x118] sm:$0xff]
    %v467 = vld [vmem:[%s430 + $0x120] sm:$0xff]
    %v468 = vld [vmem:[%s430 + $0x128] sm:$0xff]
    %v469 = vld [vmem:[%s430 + $0x130] sm:$0xff]
    %v470 = vld [vmem:[%s430 + $0x138] sm:$0xff]
    %471 = vmatprep.subr.mxu0 %v432
    %472 = vmatpush1.msra.mxu0 %v431
    %473 = vmatprep.subr.mxu0 %v436
    %474 = vmatpush1.msra.mxu0 %v435
    %475 = vmatprep.subr.mxu0 %v440
    %476 = vmatpush1.msra.mxu0 %v439
    %477 = vmatprep.subr.mxu0 %v444
    %478 = vmatpush1.msra.mxu0 %v443
    %479 = vmatprep.subr.mxu0 %v448
    %480 = vmatpush1.msra.mxu0 %v447
    %481 = vmatprep.subr.mxu0 %v452
    %482 = vmatpush1.msra.mxu0 %v451
    %483 = vmatprep.subr.mxu0 %v456
    %484 = vmatpush1.msra.mxu0 %v455
    %485 = vmatprep.subr.mxu0 %v460
    %486 = vmatpush1.msra.mxu0 %v459
    %487 = vmatprep.subr.mxu0 %v464
    %488 = vmatpush1.msra.mxu0 %v463
    %489 = vmatprep.subr.mxu0 %v468
    %490 = vmatpush1.msra.mxu0 %v467
    %491 = vmatprep.subr.mxu0 0.0
    %492 = vmatpush1.msra.mxu0 0.0
    %493 = vmatprep.subr.mxu0 0.0
    %494 = vmatpush1.msra.mxu0 0.0
    %495 = vmatprep.subr.mxu0 0.0
    %496 = vmatpush1.msra.mxu0 0.0
    %497 = vmatprep.subr.mxu0 0.0
    %498 = vmatpush1.msra.mxu0 0.0
    %499 = vmatprep.subr.mxu0 0.0
    %500 = vmatpush1.msra.mxu0 0.0
    %501 = vmatprep.subr.mxu0 0.0
    %502 = vmatpush1.msra.mxu0 0.0
    %503 = vmatprep.subr.mxu0 0.0
    %504 = vmatpush1.msra.mxu0 0.0
    %505 = vmatprep.subr.mxu0 0.0
    %506 = vmatpush1.msra.mxu0 0.0
    %507 = vmatprep.subr.mxu0 0.0
    %508 = vmatpush1.msra.mxu0 0.0
    %509 = vmatprep.subr.mxu0 0.0
    %510 = vmatpush1.msra.mxu0 0.0
    %511 = vmatprep.subr.mxu0 0.0
    %512 = vmatpush1.msra.mxu0 0.0
    %513 = vmatprep.subr.mxu0 0.0
    %514 = vmatpush1.msra.mxu0 0.0
    %515 = vmatprep.subr.mxu0 0.0
    %516 = vmatpush1.msra.mxu0 0.0
    %517 = vmatprep.subr.mxu0 0.0
    %518 = vmatpush1.msra.mxu0 0.0
    %519 = vmatprep.subr.mxu0 0.0
    %520 = vmatpush1.msra.mxu0 0.0
    %521 = vmatprep.subr.mxu0 0.0
    %522 = vmatpush1.msra.mxu0 0.0
    %523 = vmatprep.subr.mxu0 0.0
    %524 = vmatpush1.msra.mxu0 0.0
    %525 = vmatprep.subr.mxu0 0.0
    %526 = vmatpush1.msra.mxu0 0.0
    %527 = vmatprep.subr.mxu0 0.0
    %528 = vmatpush1.msra.mxu0 0.0
    %529 = vmatprep.subr.mxu0 0.0
    %530 = vmatpush1.msra.mxu0 0.0
    %531 = vmatprep.subr.mxu0 0.0
    %532 = vmatpush1.msra.mxu0 0.0
    %533 = vmatprep.subr.mxu0 0.0
    %534 = vmatpush1.msra.mxu0 0.0
    %535 = vmatprep.mubr.f32.mxu0 0.0
    %536 = vmatmul.mubr.f32.gmra.mrb[0].mxu0 %v91
    %v537 = vpop.f32.mrb[0].mxu0
    %v538 = vadd.f32 %v87, %v537
    %v539 = vpop.f32.mrb[0].mxu0
    %v540 = vadd.f32 %v87, %v539
    %541 = vdwg.mxu0
    %542 = vmatprep.subr.mxu0 %v434
    %543 = vmatpush1.msra.mxu0 %v433
    %544 = vmatprep.subr.mxu0 %v438
    %545 = vmatpush1.msra.mxu0 %v437
    %546 = vmatprep.subr.mxu0 %v442
    %547 = vmatpush1.msra.mxu0 %v441
    %548 = vmatprep.subr.mxu0 %v446
    %549 = vmatpush1.msra.mxu0 %v445
    %550 = vmatprep.subr.mxu0 %v450
    %551 = vmatpush1.msra.mxu0 %v449
    %552 = vmatprep.subr.mxu0 %v454
    %553 = vmatpush1.msra.mxu0 %v453
    %554 = vmatprep.subr.mxu0 %v458
    %555 = vmatpush1.msra.mxu0 %v457
    %556 = vmatprep.subr.mxu0 %v462
    %557 = vmatpush1.msra.mxu0 %v461
    %558 = vmatprep.subr.mxu0 %v466
    %559 = vmatpush1.msra.mxu0 %v465
    %560 = vmatprep.subr.mxu0 %v470
    %561 = vmatpush1.msra.mxu0 %v469
    %562 = vmatprep.subr.mxu0 0.0
    %563 = vmatpush1.msra.mxu0 0.0
    %564 = vmatprep.subr.mxu0 0.0
    %565 = vmatpush1.msra.mxu0 0.0
    %566 = vmatprep.subr.mxu0 0.0
    %567 = vmatpush1.msra.mxu0 0.0
    %568 = vmatprep.subr.mxu0 0.0
    %569 = vmatpush1.msra.mxu0 0.0
    %570 = vmatprep.subr.mxu0 0.0
    %571 = vmatpush1.msra.mxu0 0.0
    %572 = vmatprep.subr.mxu0 0.0
    %573 = vmatpush1.msra.mxu0 0.0
    %574 = vmatprep.subr.mxu0 0.0
    %575 = vmatpush1.msra.mxu0 0.0
    %576 = vmatprep.subr.mxu0 0.0
    %577 = vmatpush1.msra.mxu0 0.0
    %578 = vmatprep.subr.mxu0 0.0
    %579 = vmatpush1.msra.mxu0 0.0
    %580 = vmatprep.subr.mxu0 0.0
    %581 = vmatpush1.msra.mxu0 0.0
    %582 = vmatprep.subr.mxu0 0.0
    %583 = vmatpush1.msra.mxu0 0.0
    %584 = vmatprep.subr.mxu0 0.0
    %585 = vmatpush1.msra.mxu0 0.0
    %586 = vmatprep.subr.mxu0 0.0
    %587 = vmatpush1.msra.mxu0 0.0
    %588 = vmatprep.subr.mxu0 0.0
    %589 = vmatpush1.msra.mxu0 0.0
    %590 = vmatprep.subr.mxu0 0.0
    %591 = vmatpush1.msra.mxu0 0.0
    %592 = vmatprep.subr.mxu0 0.0
    %593 = vmatpush1.msra.mxu0 0.0
    %594 = vmatprep.subr.mxu0 0.0
    %595 = vmatpush1.msra.mxu0 0.0
    %596 = vmatprep.subr.mxu0 0.0
    %597 = vmatpush1.msra.mxu0 0.0
    %598 = vmatprep.subr.mxu0 0.0
    %599 = vmatpush1.msra.mxu0 0.0
    %600 = vmatprep.subr.mxu0 0.0
    %601 = vmatpush1.msra.mxu0 0.0
    %602 = vmatprep.subr.mxu0 0.0
    %603 = vmatpush1.msra.mxu0 0.0
    %604 = vmatprep.subr.mxu0 0.0
    %605 = vmatpush1.msra.mxu0 0.0
    %606 = vmatprep.mubr.f32.mxu0 0.0
    %607 = vmatmul.mubr.f32.gmra.mrb[0].mxu0 %v91
    %v608 = vpop.f32.mrb[0].mxu0
    %v609 = vadd.f32 %v87, %v608
    %v610 = vpop.f32.mrb[0].mxu0
    %v611 = vadd.f32 %v87, %v610
    %612 = vdwg.mxu0
    %v613 = vmax.f32 %v538, 0.0
    %v614 = vmax.f32 %v540, 0.0
    %v615 = vmax.f32 %v609, 0.0
    %v616 = vmax.f32 %v611, 0.0
    %v617 = vadd.f32 %v426, %v613
    %v618 = vadd.f32 %v427, %v614
    %v619 = vadd.f32 %v428, %v615
    %v620 = vadd.f32 %v429, %v616
    %s621 = scalar_lea.vmem %s0, 960
    %v622 = vld [vmem:[%s621] sm:$0xff]
    %v623 = vld [vmem:[%s621 + $0x8] sm:$0xff]
    %v624 = vld [vmem:[%s621 + $0x10] sm:$0xff]
    %v625 = vld [vmem:[%s621 + $0x18] sm:$0xff]
    %v626 = vld [vmem:[%s621 + $0x20] sm:$0xff]
    %v627 = vld [vmem:[%s621 + $0x28] sm:$0xff]
    %v628 = vld [vmem:[%s621 + $0x30] sm:$0xff]
    %v629 = vld [vmem:[%s621 + $0x38] sm:$0xff]
    %v630 = vld [vmem:[%s621 + $0x40] sm:$0xff]
    %v631 = vld [vmem:[%s621 + $0x48] sm:$0xff]
    %v632 = vld [vmem:[%s621 + $0x50] sm:$0xff]
    %v633 = vld [vmem:[%s621 + $0x58] sm:$0xff]
    %v634 = vld [vmem:[%s621 + $0x60] sm:$0xff]
    %v635 = vld [vmem:[%s621 + $0x68] sm:$0xff]
    %v636 = vld [vmem:[%s621 + $0x70] sm:$0xff]
    %v637 = vld [vmem:[%s621 + $0x78] sm:$0xff]
    %v638 = vld [vmem:[%s621 + $0x80] sm:$0xff]
    %v639 = vld [vmem:[%s621 + $0x88] sm:$0xff]
    %v640 = vld [vmem:[%s621 + $0x90] sm:$0xff]
    %v641 = vld [vmem:[%s621 + $0x98] sm:$0xff]
    %v642 = vld [vmem:[%s621 + $0xa0] sm:$0xff]
    %v643 = vld [vmem:[%s621 + $0xa8] sm:$0xff]
    %v644 = vld [vmem:[%s621 + $0xb0] sm:$0xff]
    %v645 = vld [vmem:[%s621 + $0xb8] sm:$0xff]
    %v646 = vld [vmem:[%s621 + $0xc0] sm:$0xff]
    %v647 = vld [vmem:[%s621 + $0xc8] sm:$0xff]
    %v648 = vld [vmem:[%s621 + $0xd0] sm:$0xff]
    %v649 = vld [vmem:[%s621 + $0xd8] sm:$0xff]
    %v650 = vld [vmem:[%s621 + $0xe0] sm:$0xff]
    %v651 = vld [vmem:[%s621 + $0xe8] sm:$0xff]
    %v652 = vld [vmem:[%s621 + $0xf0] sm:$0xff]
    %v653 = vld [vmem:[%s621 + $0xf8] sm:$0xff]
    %v654 = vld [vmem:[%s621 + $0x100] sm:$0xff]
    %v655 = vld [vmem:[%s621 + $0x108] sm:$0xff]
    %v656 = vld [vmem:[%s621 + $0x110] sm:$0xff]
    %v657 = vld [vmem:[%s621 + $0x118] sm:$0xff]
    %v658 = vld [vmem:[%s621 + $0x120] sm:$0xff]
    %v659 = vld [vmem:[%s621 + $0x128] sm:$0xff]
    %v660 = vld [vmem:[%s621 + $0x130] sm:$0xff]
    %v661 = vld [vmem:[%s621 + $0x138] sm:$0xff]
    %662 = vmatprep.subr.mxu0 %v623
    %663 = vmatpush1.msra.mxu0 %v622
    %664 = vmatprep.subr.mxu0 %v627
    %665 = vmatpush1.msra.mxu0 %v626
    %666 = vmatprep.subr.mxu0 %v631
    %667 = vmatpush1.msra.mxu0 %v630
    %668 = vmatprep.subr.mxu0 %v635
    %669 = vmatpush1.msra.mxu0 %v634
    %670 = vmatprep.subr.mxu0 %v639
    %671 = vmatpush1.msra.mxu0 %v638
    %672 = vmatprep.subr.mxu0 %v643
    %673 = vmatpush1.msra.mxu0 %v642
    %674 = vmatprep.subr.mxu0 %v647
    %675 = vmatpush1.msra.mxu0 %v646
    %676 = vmatprep.subr.mxu0 %v651
    %677 = vmatpush1.msra.mxu0 %v650
    %678 = vmatprep.subr.mxu0 %v655
    %679 = vmatpush1.msra.mxu0 %v654
    %680 = vmatprep.subr.mxu0 %v659
    %681 = vmatpush1.msra.mxu0 %v658
    %682 = vmatprep.subr.mxu0 0.0
    %683 = vmatpush1.msra.mxu0 0.0
    %684 = vmatprep.subr.mxu0 0.0
    %685 = vmatpush1.msra.mxu0 0.0
    %686 = vmatprep.subr.mxu0 0.0
    %687 = vmatpush1.msra.mxu0 0.0
    %688 = vmatprep.subr.mxu0 0.0
    %689 = vmatpush1.msra.mxu0 0.0
    %690 = vmatprep.subr.mxu0 0.0
    %691 = vmatpush1.msra.mxu0 0.0
    %692 = vmatprep.subr.mxu0 0.0
    %693 = vmatpush1.msra.mxu0 0.0
    %694 = vmatprep.subr.mxu0 0.0
    %695 = vmatpush1.msra.mxu0 0.0
    %696 = vmatprep.subr.mxu0 0.0
    %697 = vmatpush1.msra.mxu0 0.0
    %698 = vmatprep.subr.mxu0 0.0
    %699 = vmatpush1.msra.mxu0 0.0
    %700 = vmatprep.subr.mxu0 0.0
    %701 = vmatpush1.msra.mxu0 0.0
    %702 = vmatprep.subr.mxu0 0.0
    %703 = vmatpush1.msra.mxu0 0.0
    %704 = vmatprep.subr.mxu0 0.0
    %705 = vmatpush1.msra.mxu0 0.0
    %706 = vmatprep.subr.mxu0 0.0
    %707 = vmatpush1.msra.mxu0 0.0
    %708 = vmatprep.subr.mxu0 0.0
    %709 = vmatpush1.msra.mxu0 0.0
    %710 = vmatprep.subr.mxu0 0.0
    %711 = vmatpush1.msra.mxu0 0.0
    %712 = vmatprep.subr.mxu0 0.0
    %713 = vmatpush1.msra.mxu0 0.0
    %714 = vmatprep.subr.mxu0 0.0
    %715 = vmatpush1.msra.mxu0 0.0
    %716 = vmatprep.subr.mxu0 0.0
    %717 = vmatpush1.msra.mxu0 0.0
    %718 = vmatprep.subr.mxu0 0.0
    %719 = vmatpush1.msra.mxu0 0.0
    %720 = vmatprep.subr.mxu0 0.0
    %721 = vmatpush1.msra.mxu0 0.0
    %722 = vmatprep.subr.mxu0 0.0
    %723 = vmatpush1.msra.mxu0 0.0
    %724 = vmatprep.subr.mxu0 0.0
    %725 = vmatpush1.msra.mxu0 0.0
    %726 = vmatprep.mubr.f32.mxu0 0.0
    %727 = vmatmul.mubr.f32.gmra.mrb[0].mxu0 %v91
    %v728 = vpop.f32.mrb[0].mxu0
    %v729 = vadd.f32 %v87, %v728
    %v730 = vpop.f32.mrb[0].mxu0
    %v731 = vadd.f32 %v87, %v730
    %732 = vdwg.mxu0
    %733 = vmatprep.subr.mxu0 %v625
    %734 = vmatpush1.msra.mxu0 %v624
    %735 = vmatprep.subr.mxu0 %v629
    %736 = vmatpush1.msra.mxu0 %v628
    %737 = vmatprep.subr.mxu0 %v633
    %738 = vmatpush1.msra.mxu0 %v632
    %739 = vmatprep.subr.mxu0 %v637
    %740 = vmatpush1.msra.mxu0 %v636
    %741 = vmatprep.subr.mxu0 %v641
    %742 = vmatpush1.msra.mxu0 %v640
    %743 = vmatprep.subr.mxu0 %v645
    %744 = vmatpush1.msra.mxu0 %v644
    %745 = vmatprep.subr.mxu0 %v649
    %746 = vmatpush1.msra.mxu0 %v648
    %747 = vmatprep.subr.mxu0 %v653
    %748 = vmatpush1.msra.mxu0 %v652
    %749 = vmatprep.subr.mxu0 %v657
    %750 = vmatpush1.msra.mxu0 %v656
    %751 = vmatprep.subr.mxu0 %v661
    %752 = vmatpush1.msra.mxu0 %v660
    %753 = vmatprep.subr.mxu0 0.0
    %754 = vmatpush1.msra.mxu0 0.0
    %755 = vmatprep.subr.mxu0 0.0
    %756 = vmatpush1.msra.mxu0 0.0
    %757 = vmatprep.subr.mxu0 0.0
    %758 = vmatpush1.msra.mxu0 0.0
    %759 = vmatprep.subr.mxu0 0.0
    %760 = vmatpush1.msra.mxu0 0.0
    %761 = vmatprep.subr.mxu0 0.0
    %762 = vmatpush1.msra.mxu0 0.0
    %763 = vmatprep.subr.mxu0 0.0
    %764 = vmatpush1.msra.mxu0 0.0
    %765 = vmatprep.subr.mxu0 0.0
    %766 = vmatpush1.msra.mxu0 0.0
    %767 = vmatprep.subr.mxu0 0.0
    %768 = vmatpush1.msra.mxu0 0.0
    %769 = vmatprep.subr.mxu0 0.0
    %770 = vmatpush1.msra.mxu0 0.0
    %771 = vmatprep.subr.mxu0 0.0
    %772 = vmatpush1.msra.mxu0 0.0
    %773 = vmatprep.subr.mxu0 0.0
    %774 = vmatpush1.msra.mxu0 0.0
    %775 = vmatprep.subr.mxu0 0.0
    %776 = vmatpush1.msra.mxu0 0.0
    %777 = vmatprep.subr.mxu0 0.0
    %778 = vmatpush1.msra.mxu0 0.0
    %779 = vmatprep.subr.mxu0 0.0
    %780 = vmatpush1.msra.mxu0 0.0
    %781 = vmatprep.subr.mxu0 0.0
    %782 = vmatpush1.msra.mxu0 0.0
    %783 = vmatprep.subr.mxu0 0.0
    %784 = vmatpush1.msra.mxu0 0.0
    %785 = vmatprep.subr.mxu0 0.0
    %786 = vmatpush1.msra.mxu0 0.0
    %787 = vmatprep.subr.mxu0 0.0
    %788 = vmatpush1.msra.mxu0 0.0
    %789 = vmatprep.subr.mxu0 0.0
    %790 = vmatpush1.msra.mxu0 0.0
    %791 = vmatprep.subr.mxu0 0.0
    %792 = vmatpush1.msra.mxu0 0.0
    %793 = vmatprep.subr.mxu0 0.0
    %794 = vmatpush1.msra.mxu0 0.0
    %795 = vmatprep.subr.mxu0 0.0
    %796 = vmatpush1.msra.mxu0 0.0
    %797 = vmatprep.mubr.f32.mxu0 0.0
    %798 = vmatmul.mubr.f32.gmra.mrb[0].mxu0 %v91
    %v799 = vpop.f32.mrb[0].mxu0
    %v800 = vadd.f32 %v87, %v799
    %v801 = vpop.f32.mrb[0].mxu0
    %v802 = vadd.f32 %v87, %v801
    %803 = vdwg.mxu0
    %v804 = vmax.f32 %v729, 0.0
    %v805 = vmax.f32 %v731, 0.0
    %v806 = vmax.f32 %v800, 0.0
    %v807 = vmax.f32 %v802, 0.0
    %v808 = vadd.f32 %v617, %v804
    %v809 = vadd.f32 %v618, %v805
    %v810 = vadd.f32 %v619, %v806
    %v811 = vadd.f32 %v620, %v807
    %v812 = vmul.f32 %v808, 0.25
    %v813 = vmul.f32 %v809, 0.25
    %v814 = vmul.f32 %v810, 0.25
    %v815 = vmul.f32 %v811, 0.25
    %816 = vst [vmem:[#allocation2] sm:$0xff] %v812
    %817 = vst [vmem:[#allocation2 + $0x8] sm:$0xff] %v813
    %818 = vst [vmem:[#allocation2 + $0x10] sm:$0xff] %v814
    %vm819 = vcmask 556032
    %820 = vst.msk [vmem:[#allocation2 + $0x18] sm:$0xff] %vm819, %v815
    %v821 = vld [vmem:[%s3] sm:$0xff]
    %v822 = vld [vmem:[#allocation2] sm:$0xff]
    %v823 = vld [vmem:[#allocation2 + $0x8] sm:$0xff]
    %v824 = vld [vmem:[#allocation2 + $0x10] sm:$0xff]
    %v825 = vld [vmem:[#allocation2 + $0x18] sm:$0xff]
    %s826 = scalar_lea.vmem %s3, 8
    %v827 = vld [vmem:[%s826] sm:$0xff]
    %832 = vrot.lane.b32.xlu0 %v822, 127
    %v833 = vpop.permute.xlu0 %832
    %834 = vrot.lane.b32.xlu0 %v823, 127
    %v835 = vpop.permute.xlu0 %834
    %836 = vrot.lane.b32.xlu0 %v824, 127
    %v837 = vpop.permute.xlu0 %836
    %838 = vrot.lane.b32.xlu0 %v825, 127
    %v839 = vpop.permute.xlu0 %838
    %vm840 = vcmask 1039360
    %v841 = vsel %vm840, %v833, %v835
    %v842 = vsel %vm840, %v835, %v837
    %v843 = vsel %vm840, %v837, %v839
    %vm848 = vcmask 64512
    %v850 = vsel %vm848, %v827, 0
    %852 = vmatprep.subr.mxu0 %v842
    %853 = vmatpush1.msra.mxu0 %v841
    %854 = vmatprep.subr.mxu0 0.0
    %855 = vmatpush1.msra.mxu0 0.0
    %856 = vmatprep.subr.mxu0 0.0
    %857 = vmatpush1.msra.mxu0 0.0
    %858 = vmatprep.subr.mxu0 0.0
    %859 = vmatpush1.msra.mxu0 0.0
    %860 = vmatprep.subr.mxu0 0.0
    %861 = vmatpush1.msra.mxu0 0.0
    %862 = vmatprep.subr.mxu0 0.0
    %863 = vmatpush1.msra.mxu0 0.0
    %864 = vmatprep.subr.mxu0 0.0
    %865 = vmatpush1.msra.mxu0 0.0
    %866 = vmatprep.subr.mxu0 0.0
    %867 = vmatpush1.msra.mxu0 0.0
    %868 = vmatprep.subr.mxu0 0.0
    %869 = vmatpush1.msra.mxu0 0.0
    %870 = vmatprep.subr.mxu0 0.0
    %871 = vmatpush1.msra.mxu0 0.0
    %872 = vmatprep.subr.mxu0 0.0
    %873 = vmatpush1.msra.mxu0 0.0
    %874 = vmatprep.subr.mxu0 0.0
    %875 = vmatpush1.msra.mxu0 0.0
    %876 = vmatprep.subr.mxu0 0.0
    %877 = vmatpush1.msra.mxu0 0.0
    %878 = vmatprep.subr.mxu0 0.0
    %879 = vmatpush1.msra.mxu0 0.0
    %880 = vmatprep.subr.mxu0 0.0
    %881 = vmatpush1.msra.mxu0 0.0
    %882 = vmatprep.subr.mxu0 0.0
    %883 = vmatpush1.msra.mxu0 0.0
    %884 = vmatprep.subr.mxu0 0.0
    %885 = vmatpush1.msra.mxu0 0.0
    %886 = vmatprep.subr.mxu0 0.0
    %887 = vmatpush1.msra.mxu0 0.0
    %888 = vmatprep.subr.mxu0 0.0
    %889 = vmatpush1.msra.mxu0 0.0
    %890 = vmatprep.subr.mxu0 0.0
    %891 = vmatpush1.msra.mxu0 0.0
    %892 = vmatprep.subr.mxu0 0.0
    %893 = vmatpush1.msra.mxu0 0.0
    %894 = vmatprep.subr.mxu0 0.0
    %895 = vmatpush1.msra.mxu0 0.0
    %896 = vmatprep.subr.mxu0 0.0
    %897 = vmatpush1.msra.mxu0 0.0
    %898 = vmatprep.subr.mxu0 0.0
    %899 = vmatpush1.msra.mxu0 0.0
    %900 = vmatprep.subr.mxu0 0.0
    %901 = vmatpush1.msra.mxu0 0.0
    %902 = vmatprep.subr.mxu0 0.0
    %903 = vmatpush1.msra.mxu0 0.0
    %904 = vmatprep.subr.mxu0 0.0
    %905 = vmatpush1.msra.mxu0 0.0
    %906 = vmatprep.subr.mxu0 0.0
    %907 = vmatpush1.msra.mxu0 0.0
    %908 = vmatprep.subr.mxu0 0.0
    %909 = vmatpush1.msra.mxu0 0.0
    %910 = vmatprep.subr.mxu0 0.0
    %911 = vmatpush1.msra.mxu0 0.0
    %912 = vmatprep.subr.mxu0 0.0
    %913 = vmatpush1.msra.mxu0 0.0
    %914 = vmatprep.subr.mxu0 0.0
    %915 = vmatpush1.msra.mxu0 0.0
    %916 = vmatprep.mubr.f32.mxu0 0.0
    %917 = vmatmul.mubr.f32.gmra.mrb[0].mxu0 %v850
    %v918 = vpop.f32.mrb[0].mxu0
    %v919 = vadd.f32 0.0, %v918
    %v920 = vpop.f32.mrb[0].mxu0
    %v921 = vadd.f32 0.0, %v920
    %922 = vdwg.mxu0
    %923 = vmatprep.subr.mxu0 %v839
    %924 = vmatpush1.msra.mxu0 %v843
    %925 = vmatprep.subr.mxu0 0.0
    %926 = vmatpush1.msra.mxu0 0.0
    %927 = vmatprep.subr.mxu0 0.0
    %928 = vmatpush1.msra.mxu0 0.0
    %929 = vmatprep.subr.mxu0 0.0
    %930 = vmatpush1.msra.mxu0 0.0
    %931 = vmatprep.subr.mxu0 0.0
    %932 = vmatpush1.msra.mxu0 0.0
    %933 = vmatprep.subr.mxu0 0.0
    %934 = vmatpush1.msra.mxu0 0.0
    %935 = vmatprep.subr.mxu0 0.0
    %936 = vmatpush1.msra.mxu0 0.0
    %937 = vmatprep.subr.mxu0 0.0
    %938 = vmatpush1.msra.mxu0 0.0
    %939 = vmatprep.subr.mxu0 0.0
    %940 = vmatpush1.msra.mxu0 0.0
    %941 = vmatprep.subr.mxu0 0.0
    %942 = vmatpush1.msra.mxu0 0.0
    %943 = vmatprep.subr.mxu0 0.0
    %944 = vmatpush1.msra.mxu0 0.0
    %945 = vmatprep.subr.mxu0 0.0
    %946 = vmatpush1.msra.mxu0 0.0
    %947 = vmatprep.subr.mxu0 0.0
    %948 = vmatpush1.msra.mxu0 0.0
    %949 = vmatprep.subr.mxu0 0.0
    %950 = vmatpush1.msra.mxu0 0.0
    %951 = vmatprep.subr.mxu0 0.0
    %952 = vmatpush1.msra.mxu0 0.0
    %953 = vmatprep.subr.mxu0 0.0
    %954 = vmatpush1.msra.mxu0 0.0
    %955 = vmatprep.subr.mxu0 0.0
    %956 = vmatpush1.msra.mxu0 0.0
    %957 = vmatprep.subr.mxu0 0.0
    %958 = vmatpush1.msra.mxu0 0.0
    %959 = vmatprep.subr.mxu0 0.0
    %960 = vmatpush1.msra.mxu0 0.0
    %961 = vmatprep.subr.mxu0 0.0
    %962 = vmatpush1.msra.mxu0 0.0
    %963 = vmatprep.subr.mxu0 0.0
    %964 = vmatpush1.msra.mxu0 0.0
    %965 = vmatprep.subr.mxu0 0.0
    %966 = vmatpush1.msra.mxu0 0.0
    %967 = vmatprep.subr.mxu0 0.0
    %968 = vmatpush1.msra.mxu0 0.0
    %969 = vmatprep.subr.mxu0 0.0
    %970 = vmatpush1.msra.mxu0 0.0
    %971 = vmatprep.subr.mxu0 0.0
    %972 = vmatpush1.msra.mxu0 0.0
    %973 = vmatprep.subr.mxu0 0.0
    %974 = vmatpush1.msra.mxu0 0.0
    %975 = vmatprep.subr.mxu0 0.0
    %976 = vmatpush1.msra.mxu0 0.0
    %977 = vmatprep.subr.mxu0 0.0
    %978 = vmatpush1.msra.mxu0 0.0
    %979 = vmatprep.subr.mxu0 0.0
    %980 = vmatpush1.msra.mxu0 0.0
    %981 = vmatprep.subr.mxu0 0.0
    %982 = vmatpush1.msra.mxu0 0.0
    %983 = vmatprep.subr.mxu0 0.0
    %984 = vmatpush1.msra.mxu0 0.0
    %985 = vmatprep.subr.mxu0 0.0
    %986 = vmatpush1.msra.mxu0 0.0
    %987 = vmatprep.mubr.f32.mxu0 0.0
    %988 = vmatmul.mubr.f32.gmra.mrb[0].mxu0 %v850
    %v989 = vpop.f32.mrb[0].mxu0
    %v990 = vadd.f32 0.0, %v989
    %v991 = vpop.f32.mrb[0].mxu0
    %v992 = vadd.f32 0.0, %v991
    %993 = vdwg.mxu0
    %v995 = vsel %vm848, %v821, 0
    %997 = vmatprep.subr.mxu0 %v823
    %998 = vmatpush1.msra.mxu0 %v822
    %999 = vmatprep.subr.mxu0 0.0
    %1000 = vmatpush1.msra.mxu0 0.0
    %1001 = vmatprep.subr.mxu0 0.0
    %1002 = vmatpush1.msra.mxu0 0.0
    %1003 = vmatprep.subr.mxu0 0.0
    %1004 = vmatpush1.msra.mxu0 0.0
    %1005 = vmatprep.subr.mxu0 0.0
    %1006 = vmatpush1.msra.mxu0 0.0
    %1007 = vmatprep.subr.mxu0 0.0
    %1008 = vmatpush1.msra.mxu0 0.0
    %1009 = vmatprep.subr.mxu0 0.0
    %1010 = vmatpush1.msra.mxu0 0.0
    %1011 = vmatprep.subr.mxu0 0.0
    %1012 = vmatpush1.msra.mxu0 0.0
    %1013 = vmatprep.subr.mxu0 0.0
    %1014 = vmatpush1.msra.mxu0 0.0
    %1015 = vmatprep.subr.mxu0 0.0
    %1016 = vmatpush1.msra.mxu0 0.0
    %1017 = vmatprep.subr.mxu0 0.0
    %1018 = vmatpush1.msra.mxu0 0.0
    %1019 = vmatprep.subr.mxu0 0.0
    %1020 = vmatpush1.msra.mxu0 0.0
    %1021 = vmatprep.subr.mxu0 0.0
    %1022 = vmatpush1.msra.mxu0 0.0
    %1023 = vmatprep.subr.mxu0 0.0
    %1024 = vmatpush1.msra.mxu0 0.0
    %1025 = vmatprep.subr.mxu0 0.0
    %1026 = vmatpush1.msra.mxu0 0.0
    %1027 = vmatprep.subr.mxu0 0.0
    %1028 = vmatpush1.msra.mxu0 0.0
    %1029 = vmatprep.subr.mxu0 0.0
    %1030 = vmatpush1.msra.mxu0 0.0
    %1031 = vmatprep.subr.mxu0 0.0
    %1032 = vmatpush1.msra.mxu0 0.0
    %1033 = vmatprep.subr.mxu0 0.0
    %1034 = vmatpush1.msra.mxu0 0.0
    %1035 = vmatprep.subr.mxu0 0.0
    %1036 = vmatpush1.msra.mxu0 0.0
    %1037 = vmatprep.subr.mxu0 0.0
    %1038 = vmatpush1.msra.mxu0 0.0
    %1039 = vmatprep.subr.mxu0 0.0
    %1040 = vmatpush1.msra.mxu0 0.0
    %1041 = vmatprep.subr.mxu0 0.0
    %1042 = vmatpush1.msra.mxu0 0.0
    %1043 = vmatprep.subr.mxu0 0.0
    %1044 = vmatpush1.msra.mxu0 0.0
    %1045 = vmatprep.subr.mxu0 0.0
    %1046 = vmatpush1.msra.mxu0 0.0
    %1047 = vmatprep.subr.mxu0 0.0
    %1048 = vmatpush1.msra.mxu0 0.0
    %1049 = vmatprep.subr.mxu0 0.0
    %1050 = vmatpush1.msra.mxu0 0.0
    %1051 = vmatprep.subr.mxu0 0.0
    %1052 = vmatpush1.msra.mxu0 0.0
    %1053 = vmatprep.subr.mxu0 0.0
    %1054 = vmatpush1.msra.mxu0 0.0
    %1055 = vmatprep.subr.mxu0 0.0
    %1056 = vmatpush1.msra.mxu0 0.0
    %1057 = vmatprep.subr.mxu0 0.0
    %1058 = vmatpush1.msra.mxu0 0.0
    %1059 = vmatprep.subr.mxu0 0.0
    %1060 = vmatpush1.msra.mxu0 0.0
    %1061 = vmatprep.mubr.f32.mxu0 0.0
    %1062 = vmatmul.mubr.f32.gmra.mrb[0].mxu0 %v995
    %v1063 = vpop.f32.mrb[0].mxu0
    %v1064 = vadd.f32 %v919, %v1063
    %v1065 = vpop.f32.mrb[0].mxu0
    %v1066 = vadd.f32 %v921, %v1065
    %1067 = vdwg.mxu0
    %1068 = vmatprep.subr.mxu0 %v825
    %1069 = vmatpush1.msra.mxu0 %v824
    %1070 = vmatprep.subr.mxu0 0.0
    %1071 = vmatpush1.msra.mxu0 0.0
    %1072 = vmatprep.subr.mxu0 0.0
    %1073 = vmatpush1.msra.mxu0 0.0
    %1074 = vmatprep.subr.mxu0 0.0
    %1075 = vmatpush1.msra.mxu0 0.0
    %1076 = vmatprep.subr.mxu0 0.0
    %1077 = vmatpush1.msra.mxu0 0.0
    %1078 = vmatprep.subr.mxu0 0.0
    %1079 = vmatpush1.msra.mxu0 0.0
    %1080 = vmatprep.subr.mxu0 0.0
    %1081 = vmatpush1.msra.mxu0 0.0
    %1082 = vmatprep.subr.mxu0 0.0
    %1083 = vmatpush1.msra.mxu0 0.0
    %1084 = vmatprep.subr.mxu0 0.0
    %1085 = vmatpush1.msra.mxu0 0.0
    %1086 = vmatprep.subr.mxu0 0.0
    %1087 = vmatpush1.msra.mxu0 0.0
    %1088 = vmatprep.subr.mxu0 0.0
    %1089 = vmatpush1.msra.mxu0 0.0
    %1090 = vmatprep.subr.mxu0 0.0
    %1091 = vmatpush1.msra.mxu0 0.0
    %1092 = vmatprep.subr.mxu0 0.0
    %1093 = vmatpush1.msra.mxu0 0.0
    %1094 = vmatprep.subr.mxu0 0.0
    %1095 = vmatpush1.msra.mxu0 0.0
    %1096 = vmatprep.subr.mxu0 0.0
    %1097 = vmatpush1.msra.mxu0 0.0
    %1098 = vmatprep.subr.mxu0 0.0
    %1099 = vmatpush1.msra.mxu0 0.0
    %1100 = vmatprep.subr.mxu0 0.0
    %1101 = vmatpush1.msra.mxu0 0.0
    %1102 = vmatprep.subr.mxu0 0.0
    %1103 = vmatpush1.msra.mxu0 0.0
    %1104 = vmatprep.subr.mxu0 0.0
    %1105 = vmatpush1.msra.mxu0 0.0
    %1106 = vmatprep.subr.mxu0 0.0
    %1107 = vmatpush1.msra.mxu0 0.0
    %1108 = vmatprep.subr.mxu0 0.0
    %1109 = vmatpush1.msra.mxu0 0.0
    %1110 = vmatprep.subr.mxu0 0.0
    %1111 = vmatpush1.msra.mxu0 0.0
    %1112 = vmatprep.subr.mxu0 0.0
    %1113 = vmatpush1.msra.mxu0 0.0
    %1114 = vmatprep.subr.mxu0 0.0
    %1115 = vmatpush1.msra.mxu0 0.0
    %1116 = vmatprep.subr.mxu0 0.0
    %1117 = vmatpush1.msra.mxu0 0.0
    %1118 = vmatprep.subr.mxu0 0.0
    %1119 = vmatpush1.msra.mxu0 0.0
    %1120 = vmatprep.subr.mxu0 0.0
    %1121 = vmatpush1.msra.mxu0 0.0
    %1122 = vmatprep.subr.mxu0 0.0
    %1123 = vmatpush1.msra.mxu0 0.0
    %1124 = vmatprep.subr.mxu0 0.0
    %1125 = vmatpush1.msra.mxu0 0.0
    %1126 = vmatprep.subr.mxu0 0.0
    %1127 = vmatpush1.msra.mxu0 0.0
    %1128 = vmatprep.subr.mxu0 0.0
    %1129 = vmatpush1.msra.mxu0 0.0
    %1130 = vmatprep.subr.mxu0 0.0
    %1131 = vmatpush1.msra.mxu0 0.0
    %1132 = vmatprep.mubr.f32.mxu0 0.0
    %1133 = vmatmul.mubr.f32.gmra.mrb[0].mxu0 %v995
    %v1134 = vpop.f32.mrb[0].mxu0
    %v1135 = vadd.f32 %v990, %v1134
    %v1136 = vpop.f32.mrb[0].mxu0
    %v1137 = vadd.f32 %v992, %v1136
    %1138 = vdwg.mxu0
    %s1139 = scalar_lea.vmem %s3, 16
    %v1140 = vld [vmem:[%s1139] sm:$0xff]
    %1141 = vrot.lane.b32.xlu0 %v822, 126
    %v1142 = vpop.permute.xlu0 %1141
    %1143 = vrot.lane.b32.xlu0 %v823, 126
    %v1144 = vpop.permute.xlu0 %1143
    %1145 = vrot.lane.b32.xlu0 %v824, 126
    %v1146 = vpop.permute.xlu0 %1145
    %1147 = vrot.lane.b32.xlu0 %v825, 126
    %v1148 = vpop.permute.xlu0 %1147
    %vm1149 = vcmask 1031168
    %v1150 = vsel %vm1149, %v1142, %v1144
    %v1151 = vsel %vm1149, %v1144, %v1146
    %v1152 = vsel %vm1149, %v1146, %v1148
    %v1158 = vsel %vm848, %v1140, 0
    %1160 = vmatprep.subr.mxu0 %v1151
    %1161 = vmatpush1.msra.mxu0 %v1150
    %1162 = vmatprep.subr.mxu0 0.0
    %1163 = vmatpush1.msra.mxu0 0.0
    %1164 = vmatprep.subr.mxu0 0.0
    %1165 = vmatpush1.msra.mxu0 0.0
    %1166 = vmatprep.subr.mxu0 0.0
    %1167 = vmatpush1.msra.mxu0 0.0
    %1168 = vmatprep.subr.mxu0 0.0
    %1169 = vmatpush1.msra.mxu0 0.0
    %1170 = vmatprep.subr.mxu0 0.0
    %1171 = vmatpush1.msra.mxu0 0.0
    %1172 = vmatprep.subr.mxu0 0.0
    %1173 = vmatpush1.msra.mxu0 0.0
    %1174 = vmatprep.subr.mxu0 0.0
    %1175 = vmatpush1.msra.mxu0 0.0
    %1176 = vmatprep.subr.mxu0 0.0
    %1177 = vmatpush1.msra.mxu0 0.0
    %1178 = vmatprep.subr.mxu0 0.0
    %1179 = vmatpush1.msra.mxu0 0.0
    %1180 = vmatprep.subr.mxu0 0.0
    %1181 = vmatpush1.msra.mxu0 0.0
    %1182 = vmatprep.subr.mxu0 0.0
    %1183 = vmatpush1.msra.mxu0 0.0
    %1184 = vmatprep.subr.mxu0 0.0
    %1185 = vmatpush1.msra.mxu0 0.0
    %1186 = vmatprep.subr.mxu0 0.0
    %1187 = vmatpush1.msra.mxu0 0.0
    %1188 = vmatprep.subr.mxu0 0.0
    %1189 = vmatpush1.msra.mxu0 0.0
    %1190 = vmatprep.subr.mxu0 0.0
    %1191 = vmatpush1.msra.mxu0 0.0
    %1192 = vmatprep.subr.mxu0 0.0
    %1193 = vmatpush1.msra.mxu0 0.0
    %1194 = vmatprep.subr.mxu0 0.0
    %1195 = vmatpush1.msra.mxu0 0.0
    %1196 = vmatprep.subr.mxu0 0.0
    %1197 = vmatpush1.msra.mxu0 0.0
    %1198 = vmatprep.subr.mxu0 0.0
    %1199 = vmatpush1.msra.mxu0 0.0
    %1200 = vmatprep.subr.mxu0 0.0
    %1201 = vmatpush1.msra.mxu0 0.0
    %1202 = vmatprep.subr.mxu0 0.0
    %1203 = vmatpush1.msra.mxu0 0.0
    %1204 = vmatprep.subr.mxu0 0.0
    %1205 = vmatpush1.msra.mxu0 0.0
    %1206 = vmatprep.subr.mxu0 0.0
    %1207 = vmatpush1.msra.mxu0 0.0
    %1208 = vmatprep.subr.mxu0 0.0
    %1209 = vmatpush1.msra.mxu0 0.0
    %1210 = vmatprep.subr.mxu0 0.0
    %1211 = vmatpush1.msra.mxu0 0.0
    %1212 = vmatprep.subr.mxu0 0.0
    %1213 = vmatpush1.msra.mxu0 0.0
    %1214 = vmatprep.subr.mxu0 0.0
    %1215 = vmatpush1.msra.mxu0 0.0
    %1216 = vmatprep.subr.mxu0 0.0
    %1217 = vmatpush1.msra.mxu0 0.0
    %1218 = vmatprep.subr.mxu0 0.0
    %1219 = vmatpush1.msra.mxu0 0.0
    %1220 = vmatprep.subr.mxu0 0.0
    %1221 = vmatpush1.msra.mxu0 0.0
    %1222 = vmatprep.subr.mxu0 0.0
    %1223 = vmatpush1.msra.mxu0 0.0
    %1224 = vmatprep.mubr.f32.mxu0 0.0
    %1225 = vmatmul.mubr.f32.gmra.mrb[0].mxu0 %v1158
    %v1226 = vpop.f32.mrb[0].mxu0
    %v1227 = vadd.f32 0.0, %v1226
    %v1228 = vpop.f32.mrb[0].mxu0
    %v1229 = vadd.f32 0.0, %v1228
    %1230 = vdwg.mxu0
    %1231 = vmatprep.subr.mxu0 %v1148
    %1232 = vmatpush1.msra.mxu0 %v1152
    %1233 = vmatprep.subr.mxu0 0.0
    %1234 = vmatpush1.msra.mxu0 0.0
    %1235 = vmatprep.subr.mxu0 0.0
    %1236 = vmatpush1.msra.mxu0 0.0
    %1237 = vmatprep.subr.mxu0 0.0
    %1238 = vmatpush1.msra.mxu0 0.0
    %1239 = vmatprep.subr.mxu0 0.0
    %1240 = vmatpush1.msra.mxu0 0.0
    %1241 = vmatprep.subr.mxu0 0.0
    %1242 = vmatpush1.msra.mxu0 0.0
    %1243 = vmatprep.subr.mxu0 0.0
    %1244 = vmatpush1.msra.mxu0 0.0
    %1245 = vmatprep.subr.mxu0 0.0
    %1246 = vmatpush1.msra.mxu0 0.0
    %1247 = vmatprep.subr.mxu0 0.0
    %1248 = vmatpush1.msra.mxu0 0.0
    %1249 = vmatprep.subr.mxu0 0.0
    %1250 = vmatpush1.msra.mxu0 0.0
    %1251 = vmatprep.subr.mxu0 0.0
    %1252 = vmatpush1.msra.mxu0 0.0
    %1253 = vmatprep.subr.mxu0 0.0
    %1254 = vmatpush1.msra.mxu0 0.0
    %1255 = vmatprep.subr.mxu0 0.0
    %1256 = vmatpush1.msra.mxu0 0.0
    %1257 = vmatprep.subr.mxu0 0.0
    %1258 = vmatpush1.msra.mxu0 0.0
    %1259 = vmatprep.subr.mxu0 0.0
    %1260 = vmatpush1.msra.mxu0 0.0
    %1261 = vmatprep.subr.mxu0 0.0
    %1262 = vmatpush1.msra.mxu0 0.0
    %1263 = vmatprep.subr.mxu0 0.0
    %1264 = vmatpush1.msra.mxu0 0.0
    %1265 = vmatprep.subr.mxu0 0.0
    %1266 = vmatpush1.msra.mxu0 0.0
    %1267 = vmatprep.subr.mxu0 0.0
    %1268 = vmatpush1.msra.mxu0 0.0
    %1269 = vmatprep.subr.mxu0 0.0
    %1270 = vmatpush1.msra.mxu0 0.0
    %1271 = vmatprep.subr.mxu0 0.0
    %1272 = vmatpush1.msra.mxu0 0.0
    %1273 = vmatprep.subr.mxu0 0.0
    %1274 = vmatpush1.msra.mxu0 0.0
    %1275 = vmatprep.subr.mxu0 0.0
    %1276 = vmatpush1.msra.mxu0 0.0
    %1277 = vmatprep.subr.mxu0 0.0
    %1278 = vmatpush1.msra.mxu0 0.0
    %1279 = vmatprep.subr.mxu0 0.0
    %1280 = vmatpush1.msra.mxu0 0.0
    %1281 = vmatprep.subr.mxu0 0.0
    %1282 = vmatpush1.msra.mxu0 0.0
    %1283 = vmatprep.subr.mxu0 0.0
    %1284 = vmatpush1.msra.mxu0 0.0
    %1285 = vmatprep.subr.mxu0 0.0
    %1286 = vmatpush1.msra.mxu0 0.0
    %1287 = vmatprep.subr.mxu0 0.0
    %1288 = vmatpush1.msra.mxu0 0.0
    %1289 = vmatprep.subr.mxu0 0.0
    %1290 = vmatpush1.msra.mxu0 0.0
    %1291 = vmatprep.subr.mxu0 0.0
    %1292 = vmatpush1.msra.mxu0 0.0
    %1293 = vmatprep.subr.mxu0 0.0
    %1294 = vmatpush1.msra.mxu0 0.0
    %1295 = vmatprep.mubr.f32.mxu0 0.0
    %1296 = vmatmul.mubr.f32.gmra.mrb[0].mxu0 %v1158
    %v1297 = vpop.f32.mrb[0].mxu0
    %v1298 = vadd.f32 0.0, %v1297
    %v1299 = vpop.f32.mrb[0].mxu0
    %v1300 = vadd.f32 0.0, %v1299
    %1301 = vdwg.mxu0
    %v1302 = vadd.f32 %v1064, %v1227
    %v1303 = vadd.f32 %v1066, %v1229
    %v1304 = vadd.f32 %v1135, %v1298
    %v1305 = vadd.f32 %v1137, %v1300
    %s1306 = scalar_lea.vmem %s3, 24
    %v1307 = vld [vmem:[%s1306] sm:$0xff]
    %1308 = vrot.lane.b32.xlu0 %v822, 125
    %v1309 = vpop.permute.xlu0 %1308
    %1310 = vrot.lane.b32.xlu0 %v823, 125
    %v1311 = vpop.permute.xlu0 %1310
    %1312 = vrot.lane.b32.xlu0 %v824, 125
    %v1313 = vpop.permute.xlu0 %1312
    %1314 = vrot.lane.b32.xlu0 %v825, 125
    %v1315 = vpop.permute.xlu0 %1314
    %vm1316 = vcmask 1022976
    %v1317 = vsel %vm1316, %v1309, %v1311
    %v1318 = vsel %vm1316, %v1311, %v1313
    %v1319 = vsel %vm1316, %v1313, %v1315
    %v1325 = vsel %vm848, %v1307, 0
    %1327 = vmatprep.subr.mxu0 %v1318
    %1328 = vmatpush1.msra.mxu0 %v1317
    %1329 = vmatprep.subr.mxu0 0.0
    %1330 = vmatpush1.msra.mxu0 0.0
    %1331 = vmatprep.subr.mxu0 0.0
    %1332 = vmatpush1.msra.mxu0 0.0
    %1333 = vmatprep.subr.mxu0 0.0
    %1334 = vmatpush1.msra.mxu0 0.0
    %1335 = vmatprep.subr.mxu0 0.0
    %1336 = vmatpush1.msra.mxu0 0.0
    %1337 = vmatprep.subr.mxu0 0.0
    %1338 = vmatpush1.msra.mxu0 0.0
    %1339 = vmatprep.subr.mxu0 0.0
    %1340 = vmatpush1.msra.mxu0 0.0
    %1341 = vmatprep.subr.mxu0 0.0
    %1342 = vmatpush1.msra.mxu0 0.0
    %1343 = vmatprep.subr.mxu0 0.0
    %1344 = vmatpush1.msra.mxu0 0.0
    %1345 = vmatprep.subr.mxu0 0.0
    %1346 = vmatpush1.msra.mxu0 0.0
    %1347 = vmatprep.subr.mxu0 0.0
    %1348 = vmatpush1.msra.mxu0 0.0
    %1349 = vmatprep.subr.mxu0 0.0
    %1350 = vmatpush1.msra.mxu0 0.0
    %1351 = vmatprep.subr.mxu0 0.0
    %1352 = vmatpush1.msra.mxu0 0.0
    %1353 = vmatprep.subr.mxu0 0.0
    %1354 = vmatpush1.msra.mxu0 0.0
    %1355 = vmatprep.subr.mxu0 0.0
    %1356 = vmatpush1.msra.mxu0 0.0
    %1357 = vmatprep.subr.mxu0 0.0
    %1358 = vmatpush1.msra.mxu0 0.0
    %1359 = vmatprep.subr.mxu0 0.0
    %1360 = vmatpush1.msra.mxu0 0.0
    %1361 = vmatprep.subr.mxu0 0.0
    %1362 = vmatpush1.msra.mxu0 0.0
    %1363 = vmatprep.subr.mxu0 0.0
    %1364 = vmatpush1.msra.mxu0 0.0
    %1365 = vmatprep.subr.mxu0 0.0
    %1366 = vmatpush1.msra.mxu0 0.0
    %1367 = vmatprep.subr.mxu0 0.0
    %1368 = vmatpush1.msra.mxu0 0.0
    %1369 = vmatprep.subr.mxu0 0.0
    %1370 = vmatpush1.msra.mxu0 0.0
    %1371 = vmatprep.subr.mxu0 0.0
    %1372 = vmatpush1.msra.mxu0 0.0
    %1373 = vmatprep.subr.mxu0 0.0
    %1374 = vmatpush1.msra.mxu0 0.0
    %1375 = vmatprep.subr.mxu0 0.0
    %1376 = vmatpush1.msra.mxu0 0.0
    %1377 = vmatprep.subr.mxu0 0.0
    %1378 = vmatpush1.msra.mxu0 0.0
    %1379 = vmatprep.subr.mxu0 0.0
    %1380 = vmatpush1.msra.mxu0 0.0
    %1381 = vmatprep.subr.mxu0 0.0
    %1382 = vmatpush1.msra.mxu0 0.0
    %1383 = vmatprep.subr.mxu0 0.0
    %1384 = vmatpush1.msra.mxu0 0.0
    %1385 = vmatprep.subr.mxu0 0.0
    %1386 = vmatpush1.msra.mxu0 0.0
    %1387 = vmatprep.subr.mxu0 0.0
    %1388 = vmatpush1.msra.mxu0 0.0
    %1389 = vmatprep.subr.mxu0 0.0
    %1390 = vmatpush1.msra.mxu0 0.0
    %1391 = vmatprep.mubr.f32.mxu0 0.0
    %1392 = vmatmul.mubr.f32.gmra.mrb[0].mxu0 %v1325
    %v1393 = vpop.f32.mrb[0].mxu0
    %v1394 = vadd.f32 0.0, %v1393
    %v1395 = vpop.f32.mrb[0].mxu0
    %v1396 = vadd.f32 0.0, %v1395
    %1397 = vdwg.mxu0
    %1398 = vmatprep.subr.mxu0 %v1315
    %1399 = vmatpush1.msra.mxu0 %v1319
    %1400 = vmatprep.subr.mxu0 0.0
    %1401 = vmatpush1.msra.mxu0 0.0
    %1402 = vmatprep.subr.mxu0 0.0
    %1403 = vmatpush1.msra.mxu0 0.0
    %1404 = vmatprep.subr.mxu0 0.0
    %1405 = vmatpush1.msra.mxu0 0.0
    %1406 = vmatprep.subr.mxu0 0.0
    %1407 = vmatpush1.msra.mxu0 0.0
    %1408 = vmatprep.subr.mxu0 0.0
    %1409 = vmatpush1.msra.mxu0 0.0
    %1410 = vmatprep.subr.mxu0 0.0
    %1411 = vmatpush1.msra.mxu0 0.0
    %1412 = vmatprep.subr.mxu0 0.0
    %1413 = vmatpush1.msra.mxu0 0.0
    %1414 = vmatprep.subr.mxu0 0.0
    %1415 = vmatpush1.msra.mxu0 0.0
    %1416 = vmatprep.subr.mxu0 0.0
    %1417 = vmatpush1.msra.mxu0 0.0
    %1418 = vmatprep.subr.mxu0 0.0
    %1419 = vmatpush1.msra.mxu0 0.0
    %1420 = vmatprep.subr.mxu0 0.0
    %1421 = vmatpush1.msra.mxu0 0.0
    %1422 = vmatprep.subr.mxu0 0.0
    %1423 = vmatpush1.msra.mxu0 0.0
    %1424 = vmatprep.subr.mxu0 0.0
    %1425 = vmatpush1.msra.mxu0 0.0
    %1426 = vmatprep.subr.mxu0 0.0
    %1427 = vmatpush1.msra.mxu0 0.0
    %1428 = vmatprep.subr.mxu0 0.0
    %1429 = vmatpush1.msra.mxu0 0.0
    %1430 = vmatprep.subr.mxu0 0.0
    %1431 = vmatpush1.msra.mxu0 0.0
    %1432 = vmatprep.subr.mxu0 0.0
    %1433 = vmatpush1.msra.mxu0 0.0
    %1434 = vmatprep.subr.mxu0 0.0
    %1435 = vmatpush1.msra.mxu0 0.0
    %1436 = vmatprep.subr.mxu0 0.0
    %1437 = vmatpush1.msra.mxu0 0.0
    %1438 = vmatprep.subr.mxu0 0.0
    %1439 = vmatpush1.msra.mxu0 0.0
    %1440 = vmatprep.subr.mxu0 0.0
    %1441 = vmatpush1.msra.mxu0 0.0
    %1442 = vmatprep.subr.mxu0 0.0
    %1443 = vmatpush1.msra.mxu0 0.0
    %1444 = vmatprep.subr.mxu0 0.0
    %1445 = vmatpush1.msra.mxu0 0.0
    %1446 = vmatprep.subr.mxu0 0.0
    %1447 = vmatpush1.msra.mxu0 0.0
    %1448 = vmatprep.subr.mxu0 0.0
    %1449 = vmatpush1.msra.mxu0 0.0
    %1450 = vmatprep.subr.mxu0 0.0
    %1451 = vmatpush1.msra.mxu0 0.0
    %1452 = vmatprep.subr.mxu0 0.0
    %1453 = vmatpush1.msra.mxu0 0.0
    %1454 = vmatprep.subr.mxu0 0.0
    %1455 = vmatpush1.msra.mxu0 0.0
    %1456 = vmatprep.subr.mxu0 0.0
    %1457 = vmatpush1.msra.mxu0 0.0
    %1458 = vmatprep.subr.mxu0 0.0
    %1459 = vmatpush1.msra.mxu0 0.0
    %1460 = vmatprep.subr.mxu0 0.0
    %1461 = vmatpush1.msra.mxu0 0.0
    %1462 = vmatprep.mubr.f32.mxu0 0.0
    %1463 = vmatmul.mubr.f32.gmra.mrb[0].mxu0 %v1325
    %v1464 = vpop.f32.mrb[0].mxu0
    %v1465 = vadd.f32 0.0, %v1464
    %v1466 = vpop.f32.mrb[0].mxu0
    %v1467 = vadd.f32 0.0, %v1466
    %1468 = vdwg.mxu0
    %v1469 = vadd.f32 %v1302, %v1394
    %v1470 = vadd.f32 %v1303, %v1396
    %v1471 = vadd.f32 %v1304, %v1465
    %v1472 = vadd.f32 %v1305, %v1467
    %s1473 = scalar_lea.vmem %s3, 32
    %v1474 = vld [vmem:[%s1473] sm:$0xff]
    %1475 = vrot.lane.b32.xlu0 %v822, 124
    %v1476 = vpop.permute.xlu0 %1475
    %1477 = vrot.lane.b32.xlu0 %v823, 124
    %v1478 = vpop.permute.xlu0 %1477
    %1479 = vrot.lane.b32.xlu0 %v824, 124
    %v1480 = vpop.permute.xlu0 %1479
    %1481 = vrot.lane.b32.xlu0 %v825, 124
    %v1482 = vpop.permute.xlu0 %1481
    %vm1483 = vcmask 1014784
    %v1484 = vsel %vm1483, %v1476, %v1478
    %v1485 = vsel %vm1483, %v1478, %v1480
    %v1486 = vsel %vm1483, %v1480, %v1482
    %v1492 = vsel %vm848, %v1474, 0
    %1494 = vmatprep.subr.mxu0 %v1485
    %1495 = vmatpush1.msra.mxu0 %v1484
    %1496 = vmatprep.subr.mxu0 0.0
    %1497 = vmatpush1.msra.mxu0 0.0
    %1498 = vmatprep.subr.mxu0 0.0
    %1499 = vmatpush1.msra.mxu0 0.0
    %1500 = vmatprep.subr.mxu0 0.0
    %1501 = vmatpush1.msra.mxu0 0.0
    %1502 = vmatprep.subr.mxu0 0.0
    %1503 = vmatpush1.msra.mxu0 0.0
    %1504 = vmatprep.subr.mxu0 0.0
    %1505 = vmatpush1.msra.mxu0 0.0
    %1506 = vmatprep.subr.mxu0 0.0
    %1507 = vmatpush1.msra.mxu0 0.0
    %1508 = vmatprep.subr.mxu0 0.0
    %1509 = vmatpush1.msra.mxu0 0.0
    %1510 = vmatprep.subr.mxu0 0.0
    %1511 = vmatpush1.msra.mxu0 0.0
    %1512 = vmatprep.subr.mxu0 0.0
    %1513 = vmatpush1.msra.mxu0 0.0
    %1514 = vmatprep.subr.mxu0 0.0
    %1515 = vmatpush1.msra.mxu0 0.0
    %1516 = vmatprep.subr.mxu0 0.0
    %1517 = vmatpush1.msra.mxu0 0.0
    %1518 = vmatprep.subr.mxu0 0.0
    %1519 = vmatpush1.msra.mxu0 0.0
    %1520 = vmatprep.subr.mxu0 0.0
    %1521 = vmatpush1.msra.mxu0 0.0
    %1522 = vmatprep.subr.mxu0 0.0
    %1523 = vmatpush1.msra.mxu0 0.0
    %1524 = vmatprep.subr.mxu0 0.0
    %1525 = vmatpush1.msra.mxu0 0.0
    %1526 = vmatprep.subr.mxu0 0.0
    %1527 = vmatpush1.msra.mxu0 0.0
    %1528 = vmatprep.subr.mxu0 0.0
    %1529 = vmatpush1.msra.mxu0 0.0
    %1530 = vmatprep.subr.mxu0 0.0
    %1531 = vmatpush1.msra.mxu0 0.0
    %1532 = vmatprep.subr.mxu0 0.0
    %1533 = vmatpush1.msra.mxu0 0.0
    %1534 = vmatprep.subr.mxu0 0.0
    %1535 = vmatpush1.msra.mxu0 0.0
    %1536 = vmatprep.subr.mxu0 0.0
    %1537 = vmatpush1.msra.mxu0 0.0
    %1538 = vmatprep.subr.mxu0 0.0
    %1539 = vmatpush1.msra.mxu0 0.0
    %1540 = vmatprep.subr.mxu0 0.0
    %1541 = vmatpush1.msra.mxu0 0.0
    %1542 = vmatprep.subr.mxu0 0.0
    %1543 = vmatpush1.msra.mxu0 0.0
    %1544 = vmatprep.subr.mxu0 0.0
    %1545 = vmatpush1.msra.mxu0 0.0
    %1546 = vmatprep.subr.mxu0 0.0
    %1547 = vmatpush1.msra.mxu0 0.0
    %1548 = vmatprep.subr.mxu0 0.0
    %1549 = vmatpush1.msra.mxu0 0.0
    %1550 = vmatprep.subr.mxu0 0.0
    %1551 = vmatpush1.msra.mxu0 0.0
    %1552 = vmatprep.subr.mxu0 0.0
    %1553 = vmatpush1.msra.mxu0 0.0
    %1554 = vmatprep.subr.mxu0 0.0
    %1555 = vmatpush1.msra.mxu0 0.0
    %1556 = vmatprep.subr.mxu0 0.0
    %1557 = vmatpush1.msra.mxu0 0.0
    %1558 = vmatprep.mubr.f32.mxu0 0.0
    %1559 = vmatmul.mubr.f32.gmra.mrb[0].mxu0 %v1492
    %v1560 = vpop.f32.mrb[0].mxu0
    %v1561 = vadd.f32 0.0, %v1560
    %v1562 = vpop.f32.mrb[0].mxu0
    %v1563 = vadd.f32 0.0, %v1562
    %1564 = vdwg.mxu0
    %1565 = vmatprep.subr.mxu0 %v1482
    %1566 = vmatpush1.msra.mxu0 %v1486
    %1567 = vmatprep.subr.mxu0 0.0
    %1568 = vmatpush1.msra.mxu0 0.0
    %1569 = vmatprep.subr.mxu0 0.0
    %1570 = vmatpush1.msra.mxu0 0.0
    %1571 = vmatprep.subr.mxu0 0.0
    %1572 = vmatpush1.msra.mxu0 0.0
    %1573 = vmatprep.subr.mxu0 0.0
    %1574 = vmatpush1.msra.mxu0 0.0
    %1575 = vmatprep.subr.mxu0 0.0
    %1576 = vmatpush1.msra.mxu0 0.0
    %1577 = vmatprep.subr.mxu0 0.0
    %1578 = vmatpush1.msra.mxu0 0.0
    %1579 = vmatprep.subr.mxu0 0.0
    %1580 = vmatpush1.msra.mxu0 0.0
    %1581 = vmatprep.subr.mxu0 0.0
    %1582 = vmatpush1.msra.mxu0 0.0
    %1583 = vmatprep.subr.mxu0 0.0
    %1584 = vmatpush1.msra.mxu0 0.0
    %1585 = vmatprep.subr.mxu0 0.0
    %1586 = vmatpush1.msra.mxu0 0.0
    %1587 = vmatprep.subr.mxu0 0.0
    %1588 = vmatpush1.msra.mxu0 0.0
    %1589 = vmatprep.subr.mxu0 0.0
    %1590 = vmatpush1.msra.mxu0 0.0
    %1591 = vmatprep.subr.mxu0 0.0
    %1592 = vmatpush1.msra.mxu0 0.0
    %1593 = vmatprep.subr.mxu0 0.0
    %1594 = vmatpush1.msra.mxu0 0.0
    %1595 = vmatprep.subr.mxu0 0.0
    %1596 = vmatpush1.msra.mxu0 0.0
    %1597 = vmatprep.subr.mxu0 0.0
    %1598 = vmatpush1.msra.mxu0 0.0
    %1599 = vmatprep.subr.mxu0 0.0
    %1600 = vmatpush1.msra.mxu0 0.0
    %1601 = vmatprep.subr.mxu0 0.0
    %1602 = vmatpush1.msra.mxu0 0.0
    %1603 = vmatprep.subr.mxu0 0.0
    %1604 = vmatpush1.msra.mxu0 0.0
    %1605 = vmatprep.subr.mxu0 0.0
    %1606 = vmatpush1.msra.mxu0 0.0
    %1607 = vmatprep.subr.mxu0 0.0
    %1608 = vmatpush1.msra.mxu0 0.0
    %1609 = vmatprep.subr.mxu0 0.0
    %1610 = vmatpush1.msra.mxu0 0.0
    %1611 = vmatprep.subr.mxu0 0.0
    %1612 = vmatpush1.msra.mxu0 0.0
    %1613 = vmatprep.subr.mxu0 0.0
    %1614 = vmatpush1.msra.mxu0 0.0
    %1615 = vmatprep.subr.mxu0 0.0
    %1616 = vmatpush1.msra.mxu0 0.0
    %1617 = vmatprep.subr.mxu0 0.0
    %1618 = vmatpush1.msra.mxu0 0.0
    %1619 = vmatprep.subr.mxu0 0.0
    %1620 = vmatpush1.msra.mxu0 0.0
    %1621 = vmatprep.subr.mxu0 0.0
    %1622 = vmatpush1.msra.mxu0 0.0
    %1623 = vmatprep.subr.mxu0 0.0
    %1624 = vmatpush1.msra.mxu0 0.0
    %1625 = vmatprep.subr.mxu0 0.0
    %1626 = vmatpush1.msra.mxu0 0.0
    %1627 = vmatprep.subr.mxu0 0.0
    %1628 = vmatpush1.msra.mxu0 0.0
    %1629 = vmatprep.mubr.f32.mxu0 0.0
    %1630 = vmatmul.mubr.f32.gmra.mrb[0].mxu0 %v1492
    %v1631 = vpop.f32.mrb[0].mxu0
    %v1632 = vadd.f32 0.0, %v1631
    %v1633 = vpop.f32.mrb[0].mxu0
    %v1634 = vadd.f32 0.0, %v1633
    %1635 = vdwg.mxu0
    %v1636 = vadd.f32 %v1469, %v1561
    %v1637 = vadd.f32 %v1470, %v1563
    %v1638 = vadd.f32 %v1471, %v1632
    %v1639 = vadd.f32 %v1472, %v1634
    %s1640 = scalar_lea.vmem %s3, 40
    %v1641 = vld [vmem:[%s1640] sm:$0xff]
    %1642 = vrot.lane.b32.xlu0 %v822, 114
    %v1643 = vpop.permute.xlu0 %1642
    %1644 = vrot.lane.b32.xlu0 %v823, 114
    %v1645 = vpop.permute.xlu0 %1644
    %1646 = vrot.lane.b32.xlu0 %v824, 114
    %v1647 = vpop.permute.xlu0 %1646
    %1648 = vrot.lane.b32.xlu0 %v825, 114
    %v1649 = vpop.permute.xlu0 %1648
    %vm1650 = vcmask 932864
    %v1651 = vsel %vm1650, %v1643, %v1645
    %v1652 = vsel %vm1650, %v1645, %v1647
    %v1653 = vsel %vm1650, %v1647, %v1649
    %v1659 = vsel %vm848, %v1641, 0
    %1661 = vmatprep.subr.mxu0 %v1652
    %1662 = vmatpush1.msra.mxu0 %v1651
    %1663 = vmatprep.subr.mxu0 0.0
    %1664 = vmatpush1.msra.mxu0 0.0
    %1665 = vmatprep.subr.mxu0 0.0
    %1666 = vmatpush1.msra.mxu0 0.0
    %1667 = vmatprep.subr.mxu0 0.0
    %1668 = vmatpush1.msra.mxu0 0.0
    %1669 = vmatprep.subr.mxu0 0.0
    %1670 = vmatpush1.msra.mxu0 0.0
    %1671 = vmatprep.subr.mxu0 0.0
    %1672 = vmatpush1.msra.mxu0 0.0
    %1673 = vmatprep.subr.mxu0 0.0
    %1674 = vmatpush1.msra.mxu0 0.0
    %1675 = vmatprep.subr.mxu0 0.0
    %1676 = vmatpush1.msra.mxu0 0.0
    %1677 = vmatprep.subr.mxu0 0.0
    %1678 = vmatpush1.msra.mxu0 0.0
    %1679 = vmatprep.subr.mxu0 0.0
    %1680 = vmatpush1.msra.mxu0 0.0
    %1681 = vmatprep.subr.mxu0 0.0
    %1682 = vmatpush1.msra.mxu0 0.0
    %1683 = vmatprep.subr.mxu0 0.0
    %1684 = vmatpush1.msra.mxu0 0.0
    %1685 = vmatprep.subr.mxu0 0.0
    %1686 = vmatpush1.msra.mxu0 0.0
    %1687 = vmatprep.subr.mxu0 0.0
    %1688 = vmatpush1.msra.mxu0 0.0
    %1689 = vmatprep.subr.mxu0 0.0
    %1690 = vmatpush1.msra.mxu0 0.0
    %1691 = vmatprep.subr.mxu0 0.0
    %1692 = vmatpush1.msra.mxu0 0.0
    %1693 = vmatprep.subr.mxu0 0.0
    %1694 = vmatpush1.msra.mxu0 0.0
    %1695 = vmatprep.subr.mxu0 0.0
    %1696 = vmatpush1.msra.mxu0 0.0
    %1697 = vmatprep.subr.mxu0 0.0
    %1698 = vmatpush1.msra.mxu0 0.0
    %1699 = vmatprep.subr.mxu0 0.0
    %1700 = vmatpush1.msra.mxu0 0.0
    %1701 = vmatprep.subr.mxu0 0.0
    %1702 = vmatpush1.msra.mxu0 0.0
    %1703 = vmatprep.subr.mxu0 0.0
    %1704 = vmatpush1.msra.mxu0 0.0
    %1705 = vmatprep.subr.mxu0 0.0
    %1706 = vmatpush1.msra.mxu0 0.0
    %1707 = vmatprep.subr.mxu0 0.0
    %1708 = vmatpush1.msra.mxu0 0.0
    %1709 = vmatprep.subr.mxu0 0.0
    %1710 = vmatpush1.msra.mxu0 0.0
    %1711 = vmatprep.subr.mxu0 0.0
    %1712 = vmatpush1.msra.mxu0 0.0
    %1713 = vmatprep.subr.mxu0 0.0
    %1714 = vmatpush1.msra.mxu0 0.0
    %1715 = vmatprep.subr.mxu0 0.0
    %1716 = vmatpush1.msra.mxu0 0.0
    %1717 = vmatprep.subr.mxu0 0.0
    %1718 = vmatpush1.msra.mxu0 0.0
    %1719 = vmatprep.subr.mxu0 0.0
    %1720 = vmatpush1.msra.mxu0 0.0
    %1721 = vmatprep.subr.mxu0 0.0
    %1722 = vmatpush1.msra.mxu0 0.0
    %1723 = vmatprep.subr.mxu0 0.0
    %1724 = vmatpush1.msra.mxu0 0.0
    %1725 = vmatprep.mubr.f32.mxu0 0.0
    %1726 = vmatmul.mubr.f32.gmra.mrb[0].mxu0 %v1659
    %v1727 = vpop.f32.mrb[0].mxu0
    %v1728 = vadd.f32 0.0, %v1727
    %v1729 = vpop.f32.mrb[0].mxu0
    %v1730 = vadd.f32 0.0, %v1729
    %1731 = vdwg.mxu0
    %1732 = vmatprep.subr.mxu0 %v1649
    %1733 = vmatpush1.msra.mxu0 %v1653
    %1734 = vmatprep.subr.mxu0 0.0
    %1735 = vmatpush1.msra.mxu0 0.0
    %1736 = vmatprep.subr.mxu0 0.0
    %1737 = vmatpush1.msra.mxu0 0.0
    %1738 = vmatprep.subr.mxu0 0.0
    %1739 = vmatpush1.msra.mxu0 0.0
    %1740 = vmatprep.subr.mxu0 0.0
    %1741 = vmatpush1.msra.mxu0 0.0
    %1742 = vmatprep.subr.mxu0 0.0
    %1743 = vmatpush1.msra.mxu0 0.0
    %1744 = vmatprep.subr.mxu0 0.0
    %1745 = vmatpush1.msra.mxu0 0.0
    %1746 = vmatprep.subr.mxu0 0.0
    %1747 = vmatpush1.msra.mxu0 0.0
    %1748 = vmatprep.subr.mxu0 0.0
    %1749 = vmatpush1.msra.mxu0 0.0
    %1750 = vmatprep.subr.mxu0 0.0
    %1751 = vmatpush1.msra.mxu0 0.0
    %1752 = vmatprep.subr.mxu0 0.0
    %1753 = vmatpush1.msra.mxu0 0.0
    %1754 = vmatprep.subr.mxu0 0.0
    %1755 = vmatpush1.msra.mxu0 0.0
    %1756 = vmatprep.subr.mxu0 0.0
    %1757 = vmatpush1.msra.mxu0 0.0
    %1758 = vmatprep.subr.mxu0 0.0
    %1759 = vmatpush1.msra.mxu0 0.0
    %1760 = vmatprep.subr.mxu0 0.0
    %1761 = vmatpush1.msra.mxu0 0.0
    %1762 = vmatprep.subr.mxu0 0.0
    %1763 = vmatpush1.msra.mxu0 0.0
    %1764 = vmatprep.subr.mxu0 0.0
    %1765 = vmatpush1.msra.mxu0 0.0
    %1766 = vmatprep.subr.mxu0 0.0
    %1767 = vmatpush1.msra.mxu0 0.0
    %1768 = vmatprep.subr.mxu0 0.0
    %1769 = vmatpush1.msra.mxu0 0.0
    %1770 = vmatprep.subr.mxu0 0.0
    %1771 = vmatpush1.msra.mxu0 0.0
    %1772 = vmatprep.subr.mxu0 0.0
    %1773 = vmatpush1.msra.mxu0 0.0
    %1774 = vmatprep.subr.mxu0 0.0
    %1775 = vmatpush1.msra.mxu0 0.0
    %1776 = vmatprep.subr.mxu0 0.0
    %1777 = vmatpush1.msra.mxu0 0.0
    %1778 = vmatprep.subr.mxu0 0.0
    %1779 = vmatpush1.msra.mxu0 0.0
    %1780 = vmatprep.subr.mxu0 0.0
    %1781 = vmatpush1.msra.mxu0 0.0
    %1782 = vmatprep.subr.mxu0 0.0
    %1783 = vmatpush1.msra.mxu0 0.0
    %1784 = vmatprep.subr.mxu0 0.0
    %1785 = vmatpush1.msra.mxu0 0.0
    %1786 = vmatprep.subr.mxu0 0.0
    %1787 = vmatpush1.msra.mxu0 0.0
    %1788 = vmatprep.subr.mxu0 0.0
    %1789 = vmatpush1.msra.mxu0 0.0
    %1790 = vmatprep.subr.mxu0 0.0
    %1791 = vmatpush1.msra.mxu0 0.0
    %1792 = vmatprep.subr.mxu0 0.0
    %1793 = vmatpush1.msra.mxu0 0.0
    %1794 = vmatprep.subr.mxu0 0.0
    %1795 = vmatpush1.msra.mxu0 0.0
    %1796 = vmatprep.mubr.f32.mxu0 0.0
    %1797 = vmatmul.mubr.f32.gmra.mrb[0].mxu0 %v1659
    %v1798 = vpop.f32.mrb[0].mxu0
    %v1799 = vadd.f32 0.0, %v1798
    %v1800 = vpop.f32.mrb[0].mxu0
    %v1801 = vadd.f32 0.0, %v1800
    %1802 = vdwg.mxu0
    %v1803 = vadd.f32 %v1636, %v1728
    %v1804 = vadd.f32 %v1637, %v1730
    %v1805 = vadd.f32 %v1638, %v1799
    %v1806 = vadd.f32 %v1639, %v1801
    %s1807 = scalar_lea.vmem %s3, 48
    %v1808 = vld [vmem:[%s1807] sm:$0xff]
    %1809 = vrot.lane.b32.xlu0 %v822, 113
    %v1810 = vpop.permute.xlu0 %1809
    %1811 = vrot.lane.b32.xlu0 %v823, 113
    %v1812 = vpop.permute.xlu0 %1811
    %1813 = vrot.lane.b32.xlu0 %v824, 113
    %v1814 = vpop.permute.xlu0 %1813
    %1815 = vrot.lane.b32.xlu0 %v825, 113
    %v1816 = vpop.permute.xlu0 %1815
    %vm1817 = vcmask 924672
    %v1818 = vsel %vm1817, %v1810, %v1812
    %v1819 = vsel %vm1817, %v1812, %v1814
    %v1820 = vsel %vm1817, %v1814, %v1816
    %v1826 = vsel %vm848, %v1808, 0
    %1828 = vmatprep.subr.mxu0 %v1819
    %1829 = vmatpush1.msra.mxu0 %v1818
    %1830 = vmatprep.subr.mxu0 0.0
    %1831 = vmatpush1.msra.mxu0 0.0
    %1832 = vmatprep.subr.mxu0 0.0
    %1833 = vmatpush1.msra.mxu0 0.0
    %1834 = vmatprep.subr.mxu0 0.0
    %1835 = vmatpush1.msra.mxu0 0.0
    %1836 = vmatprep.subr.mxu0 0.0
    %1837 = vmatpush1.msra.mxu0 0.0
    %1838 = vmatprep.subr.mxu0 0.0
    %1839 = vmatpush1.msra.mxu0 0.0
    %1840 = vmatprep.subr.mxu0 0.0
    %1841 = vmatpush1.msra.mxu0 0.0
    %1842 = vmatprep.subr.mxu0 0.0
    %1843 = vmatpush1.msra.mxu0 0.0
    %1844 = vmatprep.subr.mxu0 0.0
    %1845 = vmatpush1.msra.mxu0 0.0
    %1846 = vmatprep.subr.mxu0 0.0
    %1847 = vmatpush1.msra.mxu0 0.0
    %1848 = vmatprep.subr.mxu0 0.0
    %1849 = vmatpush1.msra.mxu0 0.0
    %1850 = vmatprep.subr.mxu0 0.0
    %1851 = vmatpush1.msra.mxu0 0.0
    %1852 = vmatprep.subr.mxu0 0.0
    %1853 = vmatpush1.msra.mxu0 0.0
    %1854 = vmatprep.subr.mxu0 0.0
    %1855 = vmatpush1.msra.mxu0 0.0
    %1856 = vmatprep.subr.mxu0 0.0
    %1857 = vmatpush1.msra.mxu0 0.0
    %1858 = vmatprep.subr.mxu0 0.0
    %1859 = vmatpush1.msra.mxu0 0.0
    %1860 = vmatprep.subr.mxu0 0.0
    %1861 = vmatpush1.msra.mxu0 0.0
    %1862 = vmatprep.subr.mxu0 0.0
    %1863 = vmatpush1.msra.mxu0 0.0
    %1864 = vmatprep.subr.mxu0 0.0
    %1865 = vmatpush1.msra.mxu0 0.0
    %1866 = vmatprep.subr.mxu0 0.0
    %1867 = vmatpush1.msra.mxu0 0.0
    %1868 = vmatprep.subr.mxu0 0.0
    %1869 = vmatpush1.msra.mxu0 0.0
    %1870 = vmatprep.subr.mxu0 0.0
    %1871 = vmatpush1.msra.mxu0 0.0
    %1872 = vmatprep.subr.mxu0 0.0
    %1873 = vmatpush1.msra.mxu0 0.0
    %1874 = vmatprep.subr.mxu0 0.0
    %1875 = vmatpush1.msra.mxu0 0.0
    %1876 = vmatprep.subr.mxu0 0.0
    %1877 = vmatpush1.msra.mxu0 0.0
    %1878 = vmatprep.subr.mxu0 0.0
    %1879 = vmatpush1.msra.mxu0 0.0
    %1880 = vmatprep.subr.mxu0 0.0
    %1881 = vmatpush1.msra.mxu0 0.0
    %1882 = vmatprep.subr.mxu0 0.0
    %1883 = vmatpush1.msra.mxu0 0.0
    %1884 = vmatprep.subr.mxu0 0.0
    %1885 = vmatpush1.msra.mxu0 0.0
    %1886 = vmatprep.subr.mxu0 0.0
    %1887 = vmatpush1.msra.mxu0 0.0
    %1888 = vmatprep.subr.mxu0 0.0
    %1889 = vmatpush1.msra.mxu0 0.0
    %1890 = vmatprep.subr.mxu0 0.0
    %1891 = vmatpush1.msra.mxu0 0.0
    %1892 = vmatprep.mubr.f32.mxu0 0.0
    %1893 = vmatmul.mubr.f32.gmra.mrb[0].mxu0 %v1826
    %v1894 = vpop.f32.mrb[0].mxu0
    %v1895 = vadd.f32 0.0, %v1894
    %v1896 = vpop.f32.mrb[0].mxu0
    %v1897 = vadd.f32 0.0, %v1896
    %1898 = vdwg.mxu0
    %1899 = vmatprep.subr.mxu0 %v1816
    %1900 = vmatpush1.msra.mxu0 %v1820
    %1901 = vmatprep.subr.mxu0 0.0
    %1902 = vmatpush1.msra.mxu0 0.0
    %1903 = vmatprep.subr.mxu0 0.0
    %1904 = vmatpush1.msra.mxu0 0.0
    %1905 = vmatprep.subr.mxu0 0.0
    %1906 = vmatpush1.msra.mxu0 0.0
    %1907 = vmatprep.subr.mxu0 0.0
    %1908 = vmatpush1.msra.mxu0 0.0
    %1909 = vmatprep.subr.mxu0 0.0
    %1910 = vmatpush1.msra.mxu0 0.0
    %1911 = vmatprep.subr.mxu0 0.0
    %1912 = vmatpush1.msra.mxu0 0.0
    %1913 = vmatprep.subr.mxu0 0.0
    %1914 = vmatpush1.msra.mxu0 0.0
    %1915 = vmatprep.subr.mxu0 0.0
    %1916 = vmatpush1.msra.mxu0 0.0
    %1917 = vmatprep.subr.mxu0 0.0
    %1918 = vmatpush1.msra.mxu0 0.0
    %1919 = vmatprep.subr.mxu0 0.0
    %1920 = vmatpush1.msra.mxu0 0.0
    %1921 = vmatprep.subr.mxu0 0.0
    %1922 = vmatpush1.msra.mxu0 0.0
    %1923 = vmatprep.subr.mxu0 0.0
    %1924 = vmatpush1.msra.mxu0 0.0
    %1925 = vmatprep.subr.mxu0 0.0
    %1926 = vmatpush1.msra.mxu0 0.0
    %1927 = vmatprep.subr.mxu0 0.0
    %1928 = vmatpush1.msra.mxu0 0.0
    %1929 = vmatprep.subr.mxu0 0.0
    %1930 = vmatpush1.msra.mxu0 0.0
    %1931 = vmatprep.subr.mxu0 0.0
    %1932 = vmatpush1.msra.mxu0 0.0
    %1933 = vmatprep.subr.mxu0 0.0
    %1934 = vmatpush1.msra.mxu0 0.0
    %1935 = vmatprep.subr.mxu0 0.0
    %1936 = vmatpush1.msra.mxu0 0.0
    %1937 = vmatprep.subr.mxu0 0.0
    %1938 = vmatpush1.msra.mxu0 0.0
    %1939 = vmatprep.subr.mxu0 0.0
    %1940 = vmatpush1.msra.mxu0 0.0
    %1941 = vmatprep.subr.mxu0 0.0
    %1942 = vmatpush1.msra.mxu0 0.0
    %1943 = vmatprep.subr.mxu0 0.0
    %1944 = vmatpush1.msra.mxu0 0.0
    %1945 = vmatprep.subr.mxu0 0.0
    %1946 = vmatpush1.msra.mxu0 0.0
    %1947 = vmatprep.subr.mxu0 0.0
    %1948 = vmatpush1.msra.mxu0 0.0
    %1949 = vmatprep.subr.mxu0 0.0
    %1950 = vmatpush1.msra.mxu0 0.0
    %1951 = vmatprep.subr.mxu0 0.0
    %1952 = vmatpush1.msra.mxu0 0.0
    %1953 = vmatprep.subr.mxu0 0.0
    %1954 = vmatpush1.msra.mxu0 0.0
    %1955 = vmatprep.subr.mxu0 0.0
    %1956 = vmatpush1.msra.mxu0 0.0
    %1957 = vmatprep.subr.mxu0 0.0
    %1958 = vmatpush1.msra.mxu0 0.0
    %1959 = vmatprep.subr.mxu0 0.0
    %1960 = vmatpush1.msra.mxu0 0.0
    %1961 = vmatprep.subr.mxu0 0.0
    %1962 = vmatpush1.msra.mxu0 0.0
    %1963 = vmatprep.mubr.f32.mxu0 0.0
    %1964 = vmatmul.mubr.f32.gmra.mrb[0].mxu0 %v1826
    %v1965 = vpop.f32.mrb[0].mxu0
    %v1966 = vadd.f32 0.0, %v1965
    %v1967 = vpop.f32.mrb[0].mxu0
    %v1968 = vadd.f32 0.0, %v1967
    %1969 = vdwg.mxu0
    %v1970 = vadd.f32 %v1803, %v1895
    %v1971 = vadd.f32 %v1804, %v1897
    %v1972 = vadd.f32 %v1805, %v1966
    %v1973 = vadd.f32 %v1806, %v1968
    %s1974 = scalar_lea.vmem %s3, 56
    %v1975 = vld [vmem:[%s1974] sm:$0xff]
    %1976 = vrot.lane.b32.xlu0 %v822, 112
    %v1977 = vpop.permute.xlu0 %1976
    %1978 = vrot.lane.b32.xlu0 %v823, 112
    %v1979 = vpop.permute.xlu0 %1978
    %1980 = vrot.lane.b32.xlu0 %v824, 112
    %v1981 = vpop.permute.xlu0 %1980
    %1982 = vrot.lane.b32.xlu0 %v825, 112
    %v1983 = vpop.permute.xlu0 %1982
    %vm1984 = vcmask 916480
    %v1985 = vsel %vm1984, %v1977, %v1979
    %v1986 = vsel %vm1984, %v1979, %v1981
    %v1987 = vsel %vm1984, %v1981, %v1983
    %v1993 = vsel %vm848, %v1975, 0
    %1995 = vmatprep.subr.mxu0 %v1986
    %1996 = vmatpush1.msra.mxu0 %v1985
    %1997 = vmatprep.subr.mxu0 0.0
    %1998 = vmatpush1.msra.mxu0 0.0
    %1999 = vmatprep.subr.mxu0 0.0
    %2000 = vmatpush1.msra.mxu0 0.0
    %2001 = vmatprep.subr.mxu0 0.0
    %2002 = vmatpush1.msra.mxu0 0.0
    %2003 = vmatprep.subr.mxu0 0.0
    %2004 = vmatpush1.msra.mxu0 0.0
    %2005 = vmatprep.subr.mxu0 0.0
    %2006 = vmatpush1.msra.mxu0 0.0
    %2007 = vmatprep.subr.mxu0 0.0
    %2008 = vmatpush1.msra.mxu0 0.0
    %2009 = vmatprep.subr.mxu0 0.0
    %2010 = vmatpush1.msra.mxu0 0.0
    %2011 = vmatprep.subr.mxu0 0.0
    %2012 = vmatpush1.msra.mxu0 0.0
    %2013 = vmatprep.subr.mxu0 0.0
    %2014 = vmatpush1.msra.mxu0 0.0
    %2015 = vmatprep.subr.mxu0 0.0
    %2016 = vmatpush1.msra.mxu0 0.0
    %2017 = vmatprep.subr.mxu0 0.0
    %2018 = vmatpush1.msra.mxu0 0.0
    %2019 = vmatprep.subr.mxu0 0.0
    %2020 = vmatpush1.msra.mxu0 0.0
    %2021 = vmatprep.subr.mxu0 0.0
    %2022 = vmatpush1.msra.mxu0 0.0
    %2023 = vmatprep.subr.mxu0 0.0
    %2024 = vmatpush1.msra.mxu0 0.0
    %2025 = vmatprep.subr.mxu0 0.0
    %2026 = vmatpush1.msra.mxu0 0.0
    %2027 = vmatprep.subr.mxu0 0.0
    %2028 = vmatpush1.msra.mxu0 0.0
    %2029 = vmatprep.subr.mxu0 0.0
    %2030 = vmatpush1.msra.mxu0 0.0
    %2031 = vmatprep.subr.mxu0 0.0
    %2032 = vmatpush1.msra.mxu0 0.0
    %2033 = vmatprep.subr.mxu0 0.0
    %2034 = vmatpush1.msra.mxu0 0.0
    %2035 = vmatprep.subr.mxu0 0.0
    %2036 = vmatpush1.msra.mxu0 0.0
    %2037 = vmatprep.subr.mxu0 0.0
    %2038 = vmatpush1.msra.mxu0 0.0
    %2039 = vmatprep.subr.mxu0 0.0
    %2040 = vmatpush1.msra.mxu0 0.0
    %2041 = vmatprep.subr.mxu0 0.0
    %2042 = vmatpush1.msra.mxu0 0.0
    %2043 = vmatprep.subr.mxu0 0.0
    %2044 = vmatpush1.msra.mxu0 0.0
    %2045 = vmatprep.subr.mxu0 0.0
    %2046 = vmatpush1.msra.mxu0 0.0
    %2047 = vmatprep.subr.mxu0 0.0
    %2048 = vmatpush1.msra.mxu0 0.0
    %2049 = vmatprep.subr.mxu0 0.0
    %2050 = vmatpush1.msra.mxu0 0.0
    %2051 = vmatprep.subr.mxu0 0.0
    %2052 = vmatpush1.msra.mxu0 0.0
    %2053 = vmatprep.subr.mxu0 0.0
    %2054 = vmatpush1.msra.mxu0 0.0
    %2055 = vmatprep.subr.mxu0 0.0
    %2056 = vmatpush1.msra.mxu0 0.0
    %2057 = vmatprep.subr.mxu0 0.0
    %2058 = vmatpush1.msra.mxu0 0.0
    %2059 = vmatprep.mubr.f32.mxu0 0.0
    %2060 = vmatmul.mubr.f32.gmra.mrb[0].mxu0 %v1993
    %v2061 = vpop.f32.mrb[0].mxu0
    %v2062 = vadd.f32 0.0, %v2061
    %v2063 = vpop.f32.mrb[0].mxu0
    %v2064 = vadd.f32 0.0, %v2063
    %2065 = vdwg.mxu0
    %2066 = vmatprep.subr.mxu0 %v1983
    %2067 = vmatpush1.msra.mxu0 %v1987
    %2068 = vmatprep.subr.mxu0 0.0
    %2069 = vmatpush1.msra.mxu0 0.0
    %2070 = vmatprep.subr.mxu0 0.0
    %2071 = vmatpush1.msra.mxu0 0.0
    %2072 = vmatprep.subr.mxu0 0.0
    %2073 = vmatpush1.msra.mxu0 0.0
    %2074 = vmatprep.subr.mxu0 0.0
    %2075 = vmatpush1.msra.mxu0 0.0
    %2076 = vmatprep.subr.mxu0 0.0
    %2077 = vmatpush1.msra.mxu0 0.0
    %2078 = vmatprep.subr.mxu0 0.0
    %2079 = vmatpush1.msra.mxu0 0.0
    %2080 = vmatprep.subr.mxu0 0.0
    %2081 = vmatpush1.msra.mxu0 0.0
    %2082 = vmatprep.subr.mxu0 0.0
    %2083 = vmatpush1.msra.mxu0 0.0
    %2084 = vmatprep.subr.mxu0 0.0
    %2085 = vmatpush1.msra.mxu0 0.0
    %2086 = vmatprep.subr.mxu0 0.0
    %2087 = vmatpush1.msra.mxu0 0.0
    %2088 = vmatprep.subr.mxu0 0.0
    %2089 = vmatpush1.msra.mxu0 0.0
    %2090 = vmatprep.subr.mxu0 0.0
    %2091 = vmatpush1.msra.mxu0 0.0
    %2092 = vmatprep.subr.mxu0 0.0
    %2093 = vmatpush1.msra.mxu0 0.0
    %2094 = vmatprep.subr.mxu0 0.0
    %2095 = vmatpush1.msra.mxu0 0.0
    %2096 = vmatprep.subr.mxu0 0.0
    %2097 = vmatpush1.msra.mxu0 0.0
    %2098 = vmatprep.subr.mxu0 0.0
    %2099 = vmatpush1.msra.mxu0 0.0
    %2100 = vmatprep.subr.mxu0 0.0
    %2101 = vmatpush1.msra.mxu0 0.0
    %2102 = vmatprep.subr.mxu0 0.0
    %2103 = vmatpush1.msra.mxu0 0.0
    %2104 = vmatprep.subr.mxu0 0.0
    %2105 = vmatpush1.msra.mxu0 0.0
    %2106 = vmatprep.subr.mxu0 0.0
    %2107 = vmatpush1.msra.mxu0 0.0
    %2108 = vmatprep.subr.mxu0 0.0
    %2109 = vmatpush1.msra.mxu0 0.0
    %2110 = vmatprep.subr.mxu0 0.0
    %2111 = vmatpush1.msra.mxu0 0.0
    %2112 = vmatprep.subr.mxu0 0.0
    %2113 = vmatpush1.msra.mxu0 0.0
    %2114 = vmatprep.subr.mxu0 0.0
    %2115 = vmatpush1.msra.mxu0 0.0
    %2116 = vmatprep.subr.mxu0 0.0
    %2117 = vmatpush1.msra.mxu0 0.0
    %2118 = vmatprep.subr.mxu0 0.0
    %2119 = vmatpush1.msra.mxu0 0.0
    %2120 = vmatprep.subr.mxu0 0.0
    %2121 = vmatpush1.msra.mxu0 0.0
    %2122 = vmatprep.subr.mxu0 0.0
    %2123 = vmatpush1.msra.mxu0 0.0
    %2124 = vmatprep.subr.mxu0 0.0
    %2125 = vmatpush1.msra.mxu0 0.0
    %2126 = vmatprep.subr.mxu0 0.0
    %2127 = vmatpush1.msra.mxu0 0.0
    %2128 = vmatprep.subr.mxu0 0.0
    %2129 = vmatpush1.msra.mxu0 0.0
    %2130 = vmatprep.mubr.f32.mxu0 0.0
    %2131 = vmatmul.mubr.f32.gmra.mrb[0].mxu0 %v1993
    %v2132 = vpop.f32.mrb[0].mxu0
    %v2133 = vadd.f32 0.0, %v2132
    %v2134 = vpop.f32.mrb[0].mxu0
    %v2135 = vadd.f32 0.0, %v2134
    %2136 = vdwg.mxu0
    %v2137 = vadd.f32 %v1970, %v2062
    %v2138 = vadd.f32 %v1971, %v2064
    %v2139 = vadd.f32 %v1972, %v2133
    %v2140 = vadd.f32 %v1973, %v2135
    %s2141 = scalar_lea.vmem %s3, 64
    %v2142 = vld [vmem:[%s2141] sm:$0xff]
    %2143 = vrot.lane.b32.xlu0 %v822, 111
    %v2144 = vpop.permute.xlu0 %2143
    %2145 = vrot.lane.b32.xlu0 %v823, 111
    %v2146 = vpop.permute.xlu0 %2145
    %2147 = vrot.lane.b32.xlu0 %v824, 111
    %v2148 = vpop.permute.xlu0 %2147
    %2149 = vrot.lane.b32.xlu0 %v825, 111
    %v2150 = vpop.permute.xlu0 %2149
    %vm2151 = vcmask 908288
    %v2152 = vsel %vm2151, %v2144, %v2146
    %v2153 = vsel %vm2151, %v2146, %v2148
    %v2154 = vsel %vm2151, %v2148, %v2150
    %v2160 = vsel %vm848, %v2142, 0
    %2162 = vmatprep.subr.mxu0 %v2153
    %2163 = vmatpush1.msra.mxu0 %v2152
    %2164 = vmatprep.subr.mxu0 0.0
    %2165 = vmatpush1.msra.mxu0 0.0
    %2166 = vmatprep.subr.mxu0 0.0
    %2167 = vmatpush1.msra.mxu0 0.0
    %2168 = vmatprep.subr.mxu0 0.0
    %2169 = vmatpush1.msra.mxu0 0.0
    %2170 = vmatprep.subr.mxu0 0.0
    %2171 = vmatpush1.msra.mxu0 0.0
    %2172 = vmatprep.subr.mxu0 0.0
    %2173 = vmatpush1.msra.mxu0 0.0
    %2174 = vmatprep.subr.mxu0 0.0
    %2175 = vmatpush1.msra.mxu0 0.0
    %2176 = vmatprep.subr.mxu0 0.0
    %2177 = vmatpush1.msra.mxu0 0.0
    %2178 = vmatprep.subr.mxu0 0.0
    %2179 = vmatpush1.msra.mxu0 0.0
    %2180 = vmatprep.subr.mxu0 0.0
    %2181 = vmatpush1.msra.mxu0 0.0
    %2182 = vmatprep.subr.mxu0 0.0
    %2183 = vmatpush1.msra.mxu0 0.0
    %2184 = vmatprep.subr.mxu0 0.0
    %2185 = vmatpush1.msra.mxu0 0.0
    %2186 = vmatprep.subr.mxu0 0.0
    %2187 = vmatpush1.msra.mxu0 0.0
    %2188 = vmatprep.subr.mxu0 0.0
    %2189 = vmatpush1.msra.mxu0 0.0
    %2190 = vmatprep.subr.mxu0 0.0
    %2191 = vmatpush1.msra.mxu0 0.0
    %2192 = vmatprep.subr.mxu0 0.0
    %2193 = vmatpush1.msra.mxu0 0.0
    %2194 = vmatprep.subr.mxu0 0.0
    %2195 = vmatpush1.msra.mxu0 0.0
    %2196 = vmatprep.subr.mxu0 0.0
    %2197 = vmatpush1.msra.mxu0 0.0
    %2198 = vmatprep.subr.mxu0 0.0
    %2199 = vmatpush1.msra.mxu0 0.0
    %2200 = vmatprep.subr.mxu0 0.0
    %2201 = vmatpush1.msra.mxu0 0.0
    %2202 = vmatprep.subr.mxu0 0.0
    %2203 = vmatpush1.msra.mxu0 0.0
    %2204 = vmatprep.subr.mxu0 0.0
    %2205 = vmatpush1.msra.mxu0 0.0
    %2206 = vmatprep.subr.mxu0 0.0
    %2207 = vmatpush1.msra.mxu0 0.0
    %2208 = vmatprep.subr.mxu0 0.0
    %2209 = vmatpush1.msra.mxu0 0.0
    %2210 = vmatprep.subr.mxu0 0.0
    %2211 = vmatpush1.msra.mxu0 0.0
    %2212 = vmatprep.subr.mxu0 0.0
    %2213 = vmatpush1.msra.mxu0 0.0
    %2214 = vmatprep.subr.mxu0 0.0
    %2215 = vmatpush1.msra.mxu0 0.0
    %2216 = vmatprep.subr.mxu0 0.0
    %2217 = vmatpush1.msra.mxu0 0.0
    %2218 = vmatprep.subr.mxu0 0.0
    %2219 = vmatpush1.msra.mxu0 0.0
    %2220 = vmatprep.subr.mxu0 0.0
    %2221 = vmatpush1.msra.mxu0 0.0
    %2222 = vmatprep.subr.mxu0 0.0
    %2223 = vmatpush1.msra.mxu0 0.0
    %2224 = vmatprep.subr.mxu0 0.0
    %2225 = vmatpush1.msra.mxu0 0.0
    %2226 = vmatprep.mubr.f32.mxu0 0.0
    %2227 = vmatmul.mubr.f32.gmra.mrb[0].mxu0 %v2160
    %v2228 = vpop.f32.mrb[0].mxu0
    %v2229 = vadd.f32 0.0, %v2228
    %v2230 = vpop.f32.mrb[0].mxu0
    %v2231 = vadd.f32 0.0, %v2230
    %2232 = vdwg.mxu0
    %2233 = vmatprep.subr.mxu0 %v2150
    %2234 = vmatpush1.msra.mxu0 %v2154
    %2235 = vmatprep.subr.mxu0 0.0
    %2236 = vmatpush1.msra.mxu0 0.0
    %2237 = vmatprep.subr.mxu0 0.0
    %2238 = vmatpush1.msra.mxu0 0.0
    %2239 = vmatprep.subr.mxu0 0.0
    %2240 = vmatpush1.msra.mxu0 0.0
    %2241 = vmatprep.subr.mxu0 0.0
    %2242 = vmatpush1.msra.mxu0 0.0
    %2243 = vmatprep.subr.mxu0 0.0
    %2244 = vmatpush1.msra.mxu0 0.0
    %2245 = vmatprep.subr.mxu0 0.0
    %2246 = vmatpush1.msra.mxu0 0.0
    %2247 = vmatprep.subr.mxu0 0.0
    %2248 = vmatpush1.msra.mxu0 0.0
    %2249 = vmatprep.subr.mxu0 0.0
    %2250 = vmatpush1.msra.mxu0 0.0
    %2251 = vmatprep.subr.mxu0 0.0
    %2252 = vmatpush1.msra.mxu0 0.0
    %2253 = vmatprep.subr.mxu0 0.0
    %2254 = vmatpush1.msra.mxu0 0.0
    %2255 = vmatprep.subr.mxu0 0.0
    %2256 = vmatpush1.msra.mxu0 0.0
    %2257 = vmatprep.subr.mxu0 0.0
    %2258 = vmatpush1.msra.mxu0 0.0
    %2259 = vmatprep.subr.mxu0 0.0
    %2260 = vmatpush1.msra.mxu0 0.0
    %2261 = vmatprep.subr.mxu0 0.0
    %2262 = vmatpush1.msra.mxu0 0.0
    %2263 = vmatprep.subr.mxu0 0.0
    %2264 = vmatpush1.msra.mxu0 0.0
    %2265 = vmatprep.subr.mxu0 0.0
    %2266 = vmatpush1.msra.mxu0 0.0
    %2267 = vmatprep.subr.mxu0 0.0
    %2268 = vmatpush1.msra.mxu0 0.0
    %2269 = vmatprep.subr.mxu0 0.0
    %2270 = vmatpush1.msra.mxu0 0.0
    %2271 = vmatprep.subr.mxu0 0.0
    %2272 = vmatpush1.msra.mxu0 0.0
    %2273 = vmatprep.subr.mxu0 0.0
    %2274 = vmatpush1.msra.mxu0 0.0
    %2275 = vmatprep.subr.mxu0 0.0
    %2276 = vmatpush1.msra.mxu0 0.0
    %2277 = vmatprep.subr.mxu0 0.0
    %2278 = vmatpush1.msra.mxu0 0.0
    %2279 = vmatprep.subr.mxu0 0.0
    %2280 = vmatpush1.msra.mxu0 0.0
    %2281 = vmatprep.subr.mxu0 0.0
    %2282 = vmatpush1.msra.mxu0 0.0
    %2283 = vmatprep.subr.mxu0 0.0
    %2284 = vmatpush1.msra.mxu0 0.0
    %2285 = vmatprep.subr.mxu0 0.0
    %2286 = vmatpush1.msra.mxu0 0.0
    %2287 = vmatprep.subr.mxu0 0.0
    %2288 = vmatpush1.msra.mxu0 0.0
    %2289 = vmatprep.subr.mxu0 0.0
    %2290 = vmatpush1.msra.mxu0 0.0
    %2291 = vmatprep.subr.mxu0 0.0
    %2292 = vmatpush1.msra.mxu0 0.0
    %2293 = vmatprep.subr.mxu0 0.0
    %2294 = vmatpush1.msra.mxu0 0.0
    %2295 = vmatprep.subr.mxu0 0.0
    %2296 = vmatpush1.msra.mxu0 0.0
    %2297 = vmatprep.mubr.f32.mxu0 0.0
    %2298 = vmatmul.mubr.f32.gmra.mrb[0].mxu0 %v2160
    %v2299 = vpop.f32.mrb[0].mxu0
    %v2300 = vadd.f32 0.0, %v2299
    %v2301 = vpop.f32.mrb[0].mxu0
    %v2302 = vadd.f32 0.0, %v2301
    %2303 = vdwg.mxu0
    %v2304 = vadd.f32 %v2137, %v2229
    %v2305 = vadd.f32 %v2138, %v2231
    %v2306 = vadd.f32 %v2139, %v2300
    %v2307 = vadd.f32 %v2140, %v2302
    %s2308 = scalar_lea.vmem %s3, 72
    %v2309 = vld [vmem:[%s2308] sm:$0xff]
    %2310 = vrot.lane.b32.xlu0 %v822, 110
    %v2311 = vpop.permute.xlu0 %2310
    %2312 = vrot.lane.b32.xlu0 %v823, 110
    %v2313 = vpop.permute.xlu0 %2312
    %2314 = vrot.lane.b32.xlu0 %v824, 110
    %v2315 = vpop.permute.xlu0 %2314
    %2316 = vrot.lane.b32.xlu0 %v825, 110
    %v2317 = vpop.permute.xlu0 %2316
    %vm2318 = vcmask 900096
    %v2319 = vsel %vm2318, %v2311, %v2313
    %v2320 = vsel %vm2318, %v2313, %v2315
    %v2321 = vsel %vm2318, %v2315, %v2317
    %v2327 = vsel %vm848, %v2309, 0
    %2329 = vmatprep.subr.mxu0 %v2320
    %2330 = vmatpush1.msra.mxu0 %v2319
    %2331 = vmatprep.subr.mxu0 0.0
    %2332 = vmatpush1.msra.mxu0 0.0
    %2333 = vmatprep.subr.mxu0 0.0
    %2334 = vmatpush1.msra.mxu0 0.0
    %2335 = vmatprep.subr.mxu0 0.0
    %2336 = vmatpush1.msra.mxu0 0.0
    %2337 = vmatprep.subr.mxu0 0.0
    %2338 = vmatpush1.msra.mxu0 0.0
    %2339 = vmatprep.subr.mxu0 0.0
    %2340 = vmatpush1.msra.mxu0 0.0
    %2341 = vmatprep.subr.mxu0 0.0
    %2342 = vmatpush1.msra.mxu0 0.0
    %2343 = vmatprep.subr.mxu0 0.0
    %2344 = vmatpush1.msra.mxu0 0.0
    %2345 = vmatprep.subr.mxu0 0.0
    %2346 = vmatpush1.msra.mxu0 0.0
    %2347 = vmatprep.subr.mxu0 0.0
    %2348 = vmatpush1.msra.mxu0 0.0
    %2349 = vmatprep.subr.mxu0 0.0
    %2350 = vmatpush1.msra.mxu0 0.0
    %2351 = vmatprep.subr.mxu0 0.0
    %2352 = vmatpush1.msra.mxu0 0.0
    %2353 = vmatprep.subr.mxu0 0.0
    %2354 = vmatpush1.msra.mxu0 0.0
    %2355 = vmatprep.subr.mxu0 0.0
    %2356 = vmatpush1.msra.mxu0 0.0
    %2357 = vmatprep.subr.mxu0 0.0
    %2358 = vmatpush1.msra.mxu0 0.0
    %2359 = vmatprep.subr.mxu0 0.0
    %2360 = vmatpush1.msra.mxu0 0.0
    %2361 = vmatprep.subr.mxu0 0.0
    %2362 = vmatpush1.msra.mxu0 0.0
    %2363 = vmatprep.subr.mxu0 0.0
    %2364 = vmatpush1.msra.mxu0 0.0
    %2365 = vmatprep.subr.mxu0 0.0
    %2366 = vmatpush1.msra.mxu0 0.0
    %2367 = vmatprep.subr.mxu0 0.0
    %2368 = vmatpush1.msra.mxu0 0.0
    %2369 = vmatprep.subr.mxu0 0.0
    %2370 = vmatpush1.msra.mxu0 0.0
    %2371 = vmatprep.subr.mxu0 0.0
    %2372 = vmatpush1.msra.mxu0 0.0
    %2373 = vmatprep.subr.mxu0 0.0
    %2374 = vmatpush1.msra.mxu0 0.0
    %2375 = vmatprep.subr.mxu0 0.0
    %2376 = vmatpush1.msra.mxu0 0.0
    %2377 = vmatprep.subr.mxu0 0.0
    %2378 = vmatpush1.msra.mxu0 0.0
    %2379 = vmatprep.subr.mxu0 0.0
    %2380 = vmatpush1.msra.mxu0 0.0
    %2381 = vmatprep.subr.mxu0 0.0
    %2382 = vmatpush1.msra.mxu0 0.0
    %2383 = vmatprep.subr.mxu0 0.0
    %2384 = vmatpush1.msra.mxu0 0.0
    %2385 = vmatprep.subr.mxu0 0.0
    %2386 = vmatpush1.msra.mxu0 0.0
    %2387 = vmatprep.subr.mxu0 0.0
    %2388 = vmatpush1.msra.mxu0 0.0
    %2389 = vmatprep.subr.mxu0 0.0
    %2390 = vmatpush1.msra.mxu0 0.0
    %2391 = vmatprep.subr.mxu0 0.0
    %2392 = vmatpush1.msra.mxu0 0.0
    %2393 = vmatprep.mubr.f32.mxu0 0.0
    %2394 = vmatmul.mubr.f32.gmra.mrb[0].mxu0 %v2327
    %v2395 = vpop.f32.mrb[0].mxu0
    %v2396 = vadd.f32 0.0, %v2395
    %v2397 = vpop.f32.mrb[0].mxu0
    %v2398 = vadd.f32 0.0, %v2397
    %2399 = vdwg.mxu0
    %2400 = vmatprep.subr.mxu0 %v2317
    %2401 = vmatpush1.msra.mxu0 %v2321
    %2402 = vmatprep.subr.mxu0 0.0
    %2403 = vmatpush1.msra.mxu0 0.0
    %2404 = vmatprep.subr.mxu0 0.0
    %2405 = vmatpush1.msra.mxu0 0.0
    %2406 = vmatprep.subr.mxu0 0.0
    %2407 = vmatpush1.msra.mxu0 0.0
    %2408 = vmatprep.subr.mxu0 0.0
    %2409 = vmatpush1.msra.mxu0 0.0
    %2410 = vmatprep.subr.mxu0 0.0
    %2411 = vmatpush1.msra.mxu0 0.0
    %2412 = vmatprep.subr.mxu0 0.0
    %2413 = vmatpush1.msra.mxu0 0.0
    %2414 = vmatprep.subr.mxu0 0.0
    %2415 = vmatpush1.msra.mxu0 0.0
    %2416 = vmatprep.subr.mxu0 0.0
    %2417 = vmatpush1.msra.mxu0 0.0
    %2418 = vmatprep.subr.mxu0 0.0
    %2419 = vmatpush1.msra.mxu0 0.0
    %2420 = vmatprep.subr.mxu0 0.0
    %2421 = vmatpush1.msra.mxu0 0.0
    %2422 = vmatprep.subr.mxu0 0.0
    %2423 = vmatpush1.msra.mxu0 0.0
    %2424 = vmatprep.subr.mxu0 0.0
    %2425 = vmatpush1.msra.mxu0 0.0
    %2426 = vmatprep.subr.mxu0 0.0
    %2427 = vmatpush1.msra.mxu0 0.0
    %2428 = vmatprep.subr.mxu0 0.0
    %2429 = vmatpush1.msra.mxu0 0.0
    %2430 = vmatprep.subr.mxu0 0.0
    %2431 = vmatpush1.msra.mxu0 0.0
    %2432 = vmatprep.subr.mxu0 0.0
    %2433 = vmatpush1.msra.mxu0 0.0
    %2434 = vmatprep.subr.mxu0 0.0
    %2435 = vmatpush1.msra.mxu0 0.0
    %2436 = vmatprep.subr.mxu0 0.0
    %2437 = vmatpush1.msra.mxu0 0.0
    %2438 = vmatprep.subr.mxu0 0.0
    %2439 = vmatpush1.msra.mxu0 0.0
    %2440 = vmatprep.subr.mxu0 0.0
    %2441 = vmatpush1.msra.mxu0 0.0
    %2442 = vmatprep.subr.mxu0 0.0
    %2443 = vmatpush1.msra.mxu0 0.0
    %2444 = vmatprep.subr.mxu0 0.0
    %2445 = vmatpush1.msra.mxu0 0.0
    %2446 = vmatprep.subr.mxu0 0.0
    %2447 = vmatpush1.msra.mxu0 0.0
    %2448 = vmatprep.subr.mxu0 0.0
    %2449 = vmatpush1.msra.mxu0 0.0
    %2450 = vmatprep.subr.mxu0 0.0
    %2451 = vmatpush1.msra.mxu0 0.0
    %2452 = vmatprep.subr.mxu0 0.0
    %2453 = vmatpush1.msra.mxu0 0.0
    %2454 = vmatprep.subr.mxu0 0.0
    %2455 = vmatpush1.msra.mxu0 0.0
    %2456 = vmatprep.subr.mxu0 0.0
    %2457 = vmatpush1.msra.mxu0 0.0
    %2458 = vmatprep.subr.mxu0 0.0
    %2459 = vmatpush1.msra.mxu0 0.0
    %2460 = vmatprep.subr.mxu0 0.0
    %2461 = vmatpush1.msra.mxu0 0.0
    %2462 = vmatprep.subr.mxu0 0.0
    %2463 = vmatpush1.msra.mxu0 0.0
    %2464 = vmatprep.mubr.f32.mxu0 0.0
    %2465 = vmatmul.mubr.f32.gmra.mrb[0].mxu0 %v2327
    %v2466 = vpop.f32.mrb[0].mxu0
    %v2467 = vadd.f32 0.0, %v2466
    %v2468 = vpop.f32.mrb[0].mxu0
    %v2469 = vadd.f32 0.0, %v2468
    %2470 = vdwg.mxu0
    %v2471 = vadd.f32 %v2304, %v2396
    %v2472 = vadd.f32 %v2305, %v2398
    %v2473 = vadd.f32 %v2306, %v2467
    %v2474 = vadd.f32 %v2307, %v2469
    %s2475 = scalar_lea.vmem %s3, 80
    %v2476 = vld [vmem:[%s2475] sm:$0xff]
    %2477 = vrot.lane.b32.xlu0 %v822, 100
    %v2478 = vpop.permute.xlu0 %2477
    %2479 = vrot.lane.b32.xlu0 %v823, 100
    %v2480 = vpop.permute.xlu0 %2479
    %2481 = vrot.lane.b32.xlu0 %v824, 100
    %v2482 = vpop.permute.xlu0 %2481
    %2483 = vrot.lane.b32.xlu0 %v825, 100
    %v2484 = vpop.permute.xlu0 %2483
    %vm2485 = vcmask 818176
    %v2486 = vsel %vm2485, %v2478, %v2480
    %v2487 = vsel %vm2485, %v2480, %v2482
    %v2488 = vsel %vm2485, %v2482, %v2484
    %v2494 = vsel %vm848, %v2476, 0
    %2496 = vmatprep.subr.mxu0 %v2487
    %2497 = vmatpush1.msra.mxu0 %v2486
    %2498 = vmatprep.subr.mxu0 0.0
    %2499 = vmatpush1.msra.mxu0 0.0
    %2500 = vmatprep.subr.mxu0 0.0
    %2501 = vmatpush1.msra.mxu0 0.0
    %2502 = vmatprep.subr.mxu0 0.0
    %2503 = vmatpush1.msra.mxu0 0.0
    %2504 = vmatprep.subr.mxu0 0.0
    %2505 = vmatpush1.msra.mxu0 0.0
    %2506 = vmatprep.subr.mxu0 0.0
    %2507 = vmatpush1.msra.mxu0 0.0
    %2508 = vmatprep.subr.mxu0 0.0
    %2509 = vmatpush1.msra.mxu0 0.0
    %2510 = vmatprep.subr.mxu0 0.0
    %2511 = vmatpush1.msra.mxu0 0.0
    %2512 = vmatprep.subr.mxu0 0.0
    %2513 = vmatpush1.msra.mxu0 0.0
    %2514 = vmatprep.subr.mxu0 0.0
    %2515 = vmatpush1.msra.mxu0 0.0
    %2516 = vmatprep.subr.mxu0 0.0
    %2517 = vmatpush1.msra.mxu0 0.0
    %2518 = vmatprep.subr.mxu0 0.0
    %2519 = vmatpush1.msra.mxu0 0.0
    %2520 = vmatprep.subr.mxu0 0.0
    %2521 = vmatpush1.msra.mxu0 0.0
    %2522 = vmatprep.subr.mxu0 0.0
    %2523 = vmatpush1.msra.mxu0 0.0
    %2524 = vmatprep.subr.mxu0 0.0
    %2525 = vmatpush1.msra.mxu0 0.0
    %2526 = vmatprep.subr.mxu0 0.0
    %2527 = vmatpush1.msra.mxu0 0.0
    %2528 = vmatprep.subr.mxu0 0.0
    %2529 = vmatpush1.msra.mxu0 0.0
    %2530 = vmatprep.subr.mxu0 0.0
    %2531 = vmatpush1.msra.mxu0 0.0
    %2532 = vmatprep.subr.mxu0 0.0
    %2533 = vmatpush1.msra.mxu0 0.0
    %2534 = vmatprep.subr.mxu0 0.0
    %2535 = vmatpush1.msra.mxu0 0.0
    %2536 = vmatprep.subr.mxu0 0.0
    %2537 = vmatpush1.msra.mxu0 0.0
    %2538 = vmatprep.subr.mxu0 0.0
    %2539 = vmatpush1.msra.mxu0 0.0
    %2540 = vmatprep.subr.mxu0 0.0
    %2541 = vmatpush1.msra.mxu0 0.0
    %2542 = vmatprep.subr.mxu0 0.0
    %2543 = vmatpush1.msra.mxu0 0.0
    %2544 = vmatprep.subr.mxu0 0.0
    %2545 = vmatpush1.msra.mxu0 0.0
    %2546 = vmatprep.subr.mxu0 0.0
    %2547 = vmatpush1.msra.mxu0 0.0
    %2548 = vmatprep.subr.mxu0 0.0
    %2549 = vmatpush1.msra.mxu0 0.0
    %2550 = vmatprep.subr.mxu0 0.0
    %2551 = vmatpush1.msra.mxu0 0.0
    %2552 = vmatprep.subr.mxu0 0.0
    %2553 = vmatpush1.msra.mxu0 0.0
    %2554 = vmatprep.subr.mxu0 0.0
    %2555 = vmatpush1.msra.mxu0 0.0
    %2556 = vmatprep.subr.mxu0 0.0
    %2557 = vmatpush1.msra.mxu0 0.0
    %2558 = vmatprep.subr.mxu0 0.0
    %2559 = vmatpush1.msra.mxu0 0.0
    %2560 = vmatprep.mubr.f32.mxu0 0.0
    %2561 = vmatmul.mubr.f32.gmra.mrb[0].mxu0 %v2494
    %v2562 = vpop.f32.mrb[0].mxu0
    %v2563 = vadd.f32 0.0, %v2562
    %v2564 = vpop.f32.mrb[0].mxu0
    %v2565 = vadd.f32 0.0, %v2564
    %2566 = vdwg.mxu0
    %2567 = vmatprep.subr.mxu0 %v2484
    %2568 = vmatpush1.msra.mxu0 %v2488
    %2569 = vmatprep.subr.mxu0 0.0
    %2570 = vmatpush1.msra.mxu0 0.0
    %2571 = vmatprep.subr.mxu0 0.0
    %2572 = vmatpush1.msra.mxu0 0.0
    %2573 = vmatprep.subr.mxu0 0.0
    %2574 = vmatpush1.msra.mxu0 0.0
    %2575 = vmatprep.subr.mxu0 0.0
    %2576 = vmatpush1.msra.mxu0 0.0
    %2577 = vmatprep.subr.mxu0 0.0
    %2578 = vmatpush1.msra.mxu0 0.0
    %2579 = vmatprep.subr.mxu0 0.0
    %2580 = vmatpush1.msra.mxu0 0.0
    %2581 = vmatprep.subr.mxu0 0.0
    %2582 = vmatpush1.msra.mxu0 0.0
    %2583 = vmatprep.subr.mxu0 0.0
    %2584 = vmatpush1.msra.mxu0 0.0
    %2585 = vmatprep.subr.mxu0 0.0
    %2586 = vmatpush1.msra.mxu0 0.0
    %2587 = vmatprep.subr.mxu0 0.0
    %2588 = vmatpush1.msra.mxu0 0.0
    %2589 = vmatprep.subr.mxu0 0.0
    %2590 = vmatpush1.msra.mxu0 0.0
    %2591 = vmatprep.subr.mxu0 0.0
    %2592 = vmatpush1.msra.mxu0 0.0
    %2593 = vmatprep.subr.mxu0 0.0
    %2594 = vmatpush1.msra.mxu0 0.0
    %2595 = vmatprep.subr.mxu0 0.0
    %2596 = vmatpush1.msra.mxu0 0.0
    %2597 = vmatprep.subr.mxu0 0.0
    %2598 = vmatpush1.msra.mxu0 0.0
    %2599 = vmatprep.subr.mxu0 0.0
    %2600 = vmatpush1.msra.mxu0 0.0
    %2601 = vmatprep.subr.mxu0 0.0
    %2602 = vmatpush1.msra.mxu0 0.0
    %2603 = vmatprep.subr.mxu0 0.0
    %2604 = vmatpush1.msra.mxu0 0.0
    %2605 = vmatprep.subr.mxu0 0.0
    %2606 = vmatpush1.msra.mxu0 0.0
    %2607 = vmatprep.subr.mxu0 0.0
    %2608 = vmatpush1.msra.mxu0 0.0
    %2609 = vmatprep.subr.mxu0 0.0
    %2610 = vmatpush1.msra.mxu0 0.0
    %2611 = vmatprep.subr.mxu0 0.0
    %2612 = vmatpush1.msra.mxu0 0.0
    %2613 = vmatprep.subr.mxu0 0.0
    %2614 = vmatpush1.msra.mxu0 0.0
    %2615 = vmatprep.subr.mxu0 0.0
    %2616 = vmatpush1.msra.mxu0 0.0
    %2617 = vmatprep.subr.mxu0 0.0
    %2618 = vmatpush1.msra.mxu0 0.0
    %2619 = vmatprep.subr.mxu0 0.0
    %2620 = vmatpush1.msra.mxu0 0.0
    %2621 = vmatprep.subr.mxu0 0.0
    %2622 = vmatpush1.msra.mxu0 0.0
    %2623 = vmatprep.subr.mxu0 0.0
    %2624 = vmatpush1.msra.mxu0 0.0
    %2625 = vmatprep.subr.mxu0 0.0
    %2626 = vmatpush1.msra.mxu0 0.0
    %2627 = vmatprep.subr.mxu0 0.0
    %2628 = vmatpush1.msra.mxu0 0.0
    %2629 = vmatprep.subr.mxu0 0.0
    %2630 = vmatpush1.msra.mxu0 0.0
    %2631 = vmatprep.mubr.f32.mxu0 0.0
    %2632 = vmatmul.mubr.f32.gmra.mrb[0].mxu0 %v2494
    %v2633 = vpop.f32.mrb[0].mxu0
    %v2634 = vadd.f32 0.0, %v2633
    %v2635 = vpop.f32.mrb[0].mxu0
    %v2636 = vadd.f32 0.0, %v2635
    %2637 = vdwg.mxu0
    %v2638 = vadd.f32 %v2471, %v2563
    %v2639 = vadd.f32 %v2472, %v2565
    %v2640 = vadd.f32 %v2473, %v2634
    %v2641 = vadd.f32 %v2474, %v2636
    %s2642 = scalar_lea.vmem %s3, 88
    %v2643 = vld [vmem:[%s2642] sm:$0xff]
    %2644 = vrot.lane.b32.xlu0 %v822, 99
    %v2645 = vpop.permute.xlu0 %2644
    %2646 = vrot.lane.b32.xlu0 %v823, 99
    %v2647 = vpop.permute.xlu0 %2646
    %2648 = vrot.lane.b32.xlu0 %v824, 99
    %v2649 = vpop.permute.xlu0 %2648
    %2650 = vrot.lane.b32.xlu0 %v825, 99
    %v2651 = vpop.permute.xlu0 %2650
    %vm2652 = vcmask 809984
    %v2653 = vsel %vm2652, %v2645, %v2647
    %v2654 = vsel %vm2652, %v2647, %v2649
    %v2655 = vsel %vm2652, %v2649, %v2651
    %v2661 = vsel %vm848, %v2643, 0
    %2663 = vmatprep.subr.mxu0 %v2654
    %2664 = vmatpush1.msra.mxu0 %v2653
    %2665 = vmatprep.subr.mxu0 0.0
    %2666 = vmatpush1.msra.mxu0 0.0
    %2667 = vmatprep.subr.mxu0 0.0
    %2668 = vmatpush1.msra.mxu0 0.0
    %2669 = vmatprep.subr.mxu0 0.0
    %2670 = vmatpush1.msra.mxu0 0.0
    %2671 = vmatprep.subr.mxu0 0.0
    %2672 = vmatpush1.msra.mxu0 0.0
    %2673 = vmatprep.subr.mxu0 0.0
    %2674 = vmatpush1.msra.mxu0 0.0
    %2675 = vmatprep.subr.mxu0 0.0
    %2676 = vmatpush1.msra.mxu0 0.0
    %2677 = vmatprep.subr.mxu0 0.0
    %2678 = vmatpush1.msra.mxu0 0.0
    %2679 = vmatprep.subr.mxu0 0.0
    %2680 = vmatpush1.msra.mxu0 0.0
    %2681 = vmatprep.subr.mxu0 0.0
    %2682 = vmatpush1.msra.mxu0 0.0
    %2683 = vmatprep.subr.mxu0 0.0
    %2684 = vmatpush1.msra.mxu0 0.0
    %2685 = vmatprep.subr.mxu0 0.0
    %2686 = vmatpush1.msra.mxu0 0.0
    %2687 = vmatprep.subr.mxu0 0.0
    %2688 = vmatpush1.msra.mxu0 0.0
    %2689 = vmatprep.subr.mxu0 0.0
    %2690 = vmatpush1.msra.mxu0 0.0
    %2691 = vmatprep.subr.mxu0 0.0
    %2692 = vmatpush1.msra.mxu0 0.0
    %2693 = vmatprep.subr.mxu0 0.0
    %2694 = vmatpush1.msra.mxu0 0.0
    %2695 = vmatprep.subr.mxu0 0.0
    %2696 = vmatpush1.msra.mxu0 0.0
    %2697 = vmatprep.subr.mxu0 0.0
    %2698 = vmatpush1.msra.mxu0 0.0
    %2699 = vmatprep.subr.mxu0 0.0
    %2700 = vmatpush1.msra.mxu0 0.0
    %2701 = vmatprep.subr.mxu0 0.0
    %2702 = vmatpush1.msra.mxu0 0.0
    %2703 = vmatprep.subr.mxu0 0.0
    %2704 = vmatpush1.msra.mxu0 0.0
    %2705 = vmatprep.subr.mxu0 0.0
    %2706 = vmatpush1.msra.mxu0 0.0
    %2707 = vmatprep.subr.mxu0 0.0
    %2708 = vmatpush1.msra.mxu0 0.0
    %2709 = vmatprep.subr.mxu0 0.0
    %2710 = vmatpush1.msra.mxu0 0.0
    %2711 = vmatprep.subr.mxu0 0.0
    %2712 = vmatpush1.msra.mxu0 0.0
    %2713 = vmatprep.subr.mxu0 0.0
    %2714 = vmatpush1.msra.mxu0 0.0
    %2715 = vmatprep.subr.mxu0 0.0
    %2716 = vmatpush1.msra.mxu0 0.0
    %2717 = vmatprep.subr.mxu0 0.0
    %2718 = vmatpush1.msra.mxu0 0.0
    %2719 = vmatprep.subr.mxu0 0.0
    %2720 = vmatpush1.msra.mxu0 0.0
    %2721 = vmatprep.subr.mxu0 0.0
    %2722 = vmatpush1.msra.mxu0 0.0
    %2723 = vmatprep.subr.mxu0 0.0
    %2724 = vmatpush1.msra.mxu0 0.0
    %2725 = vmatprep.subr.mxu0 0.0
    %2726 = vmatpush1.msra.mxu0 0.0
    %2727 = vmatprep.mubr.f32.mxu0 0.0
    %2728 = vmatmul.mubr.f32.gmra.mrb[0].mxu0 %v2661
    %v2729 = vpop.f32.mrb[0].mxu0
    %v2730 = vadd.f32 0.0, %v2729
    %v2731 = vpop.f32.mrb[0].mxu0
    %v2732 = vadd.f32 0.0, %v2731
    %2733 = vdwg.mxu0
    %2734 = vmatprep.subr.mxu0 %v2651
    %2735 = vmatpush1.msra.mxu0 %v2655
    %2736 = vmatprep.subr.mxu0 0.0
    %2737 = vmatpush1.msra.mxu0 0.0
    %2738 = vmatprep.subr.mxu0 0.0
    %2739 = vmatpush1.msra.mxu0 0.0
    %2740 = vmatprep.subr.mxu0 0.0
    %2741 = vmatpush1.msra.mxu0 0.0
    %2742 = vmatprep.subr.mxu0 0.0
    %2743 = vmatpush1.msra.mxu0 0.0
    %2744 = vmatprep.subr.mxu0 0.0
    %2745 = vmatpush1.msra.mxu0 0.0
    %2746 = vmatprep.subr.mxu0 0.0
    %2747 = vmatpush1.msra.mxu0 0.0
    %2748 = vmatprep.subr.mxu0 0.0
    %2749 = vmatpush1.msra.mxu0 0.0
    %2750 = vmatprep.subr.mxu0 0.0
    %2751 = vmatpush1.msra.mxu0 0.0
    %2752 = vmatprep.subr.mxu0 0.0
    %2753 = vmatpush1.msra.mxu0 0.0
    %2754 = vmatprep.subr.mxu0 0.0
    %2755 = vmatpush1.msra.mxu0 0.0
    %2756 = vmatprep.subr.mxu0 0.0
    %2757 = vmatpush1.msra.mxu0 0.0
    %2758 = vmatprep.subr.mxu0 0.0
    %2759 = vmatpush1.msra.mxu0 0.0
    %2760 = vmatprep.subr.mxu0 0.0
    %2761 = vmatpush1.msra.mxu0 0.0
    %2762 = vmatprep.subr.mxu0 0.0
    %2763 = vmatpush1.msra.mxu0 0.0
    %2764 = vmatprep.subr.mxu0 0.0
    %2765 = vmatpush1.msra.mxu0 0.0
    %2766 = vmatprep.subr.mxu0 0.0
    %2767 = vmatpush1.msra.mxu0 0.0
    %2768 = vmatprep.subr.mxu0 0.0
    %2769 = vmatpush1.msra.mxu0 0.0
    %2770 = vmatprep.subr.mxu0 0.0
    %2771 = vmatpush1.msra.mxu0 0.0
    %2772 = vmatprep.subr.mxu0 0.0
    %2773 = vmatpush1.msra.mxu0 0.0
    %2774 = vmatprep.subr.mxu0 0.0
    %2775 = vmatpush1.msra.mxu0 0.0
    %2776 = vmatprep.subr.mxu0 0.0
    %2777 = vmatpush1.msra.mxu0 0.0
    %2778 = vmatprep.subr.mxu0 0.0
    %2779 = vmatpush1.msra.mxu0 0.0
    %2780 = vmatprep.subr.mxu0 0.0
    %2781 = vmatpush1.msra.mxu0 0.0
    %2782 = vmatprep.subr.mxu0 0.0
    %2783 = vmatpush1.msra.mxu0 0.0
    %2784 = vmatprep.subr.mxu0 0.0
    %2785 = vmatpush1.msra.mxu0 0.0
    %2786 = vmatprep.subr.mxu0 0.0
    %2787 = vmatpush1.msra.mxu0 0.0
    %2788 = vmatprep.subr.mxu0 0.0
    %2789 = vmatpush1.msra.mxu0 0.0
    %2790 = vmatprep.subr.mxu0 0.0
    %2791 = vmatpush1.msra.mxu0 0.0
    %2792 = vmatprep.subr.mxu0 0.0
    %2793 = vmatpush1.msra.mxu0 0.0
    %2794 = vmatprep.subr.mxu0 0.0
    %2795 = vmatpush1.msra.mxu0 0.0
    %2796 = vmatprep.subr.mxu0 0.0
    %2797 = vmatpush1.msra.mxu0 0.0
    %2798 = vmatprep.mubr.f32.mxu0 0.0
    %2799 = vmatmul.mubr.f32.gmra.mrb[0].mxu0 %v2661
    %v2800 = vpop.f32.mrb[0].mxu0
    %v2801 = vadd.f32 0.0, %v2800
    %v2802 = vpop.f32.mrb[0].mxu0
    %v2803 = vadd.f32 0.0, %v2802
    %2804 = vdwg.mxu0
    %v2805 = vadd.f32 %v2638, %v2730
    %v2806 = vadd.f32 %v2639, %v2732
    %v2807 = vadd.f32 %v2640, %v2801
    %v2808 = vadd.f32 %v2641, %v2803
    %s2809 = scalar_lea.vmem %s3, 96
    %v2810 = vld [vmem:[%s2809] sm:$0xff]
    %2811 = vrot.lane.b32.xlu0 %v822, 98
    %v2812 = vpop.permute.xlu0 %2811
    %2813 = vrot.lane.b32.xlu0 %v823, 98
    %v2814 = vpop.permute.xlu0 %2813
    %2815 = vrot.lane.b32.xlu0 %v824, 98
    %v2816 = vpop.permute.xlu0 %2815
    %2817 = vrot.lane.b32.xlu0 %v825, 98
    %v2818 = vpop.permute.xlu0 %2817
    %vm2819 = vcmask 801792
    %v2820 = vsel %vm2819, %v2812, %v2814
    %v2821 = vsel %vm2819, %v2814, %v2816
    %v2822 = vsel %vm2819, %v2816, %v2818
    %v2828 = vsel %vm848, %v2810, 0
    %2830 = vmatprep.subr.mxu0 %v2821
    %2831 = vmatpush1.msra.mxu0 %v2820
    %2832 = vmatprep.subr.mxu0 0.0
    %2833 = vmatpush1.msra.mxu0 0.0
    %2834 = vmatprep.subr.mxu0 0.0
    %2835 = vmatpush1.msra.mxu0 0.0
    %2836 = vmatprep.subr.mxu0 0.0
    %2837 = vmatpush1.msra.mxu0 0.0
    %2838 = vmatprep.subr.mxu0 0.0
    %2839 = vmatpush1.msra.mxu0 0.0
    %2840 = vmatprep.subr.mxu0 0.0
    %2841 = vmatpush1.msra.mxu0 0.0
    %2842 = vmatprep.subr.mxu0 0.0
    %2843 = vmatpush1.msra.mxu0 0.0
    %2844 = vmatprep.subr.mxu0 0.0
    %2845 = vmatpush1.msra.mxu0 0.0
    %2846 = vmatprep.subr.mxu0 0.0
    %2847 = vmatpush1.msra.mxu0 0.0
    %2848 = vmatprep.subr.mxu0 0.0
    %2849 = vmatpush1.msra.mxu0 0.0
    %2850 = vmatprep.subr.mxu0 0.0
    %2851 = vmatpush1.msra.mxu0 0.0
    %2852 = vmatprep.subr.mxu0 0.0
    %2853 = vmatpush1.msra.mxu0 0.0
    %2854 = vmatprep.subr.mxu0 0.0
    %2855 = vmatpush1.msra.mxu0 0.0
    %2856 = vmatprep.subr.mxu0 0.0
    %2857 = vmatpush1.msra.mxu0 0.0
    %2858 = vmatprep.subr.mxu0 0.0
    %2859 = vmatpush1.msra.mxu0 0.0
    %2860 = vmatprep.subr.mxu0 0.0
    %2861 = vmatpush1.msra.mxu0 0.0
    %2862 = vmatprep.subr.mxu0 0.0
    %2863 = vmatpush1.msra.mxu0 0.0
    %2864 = vmatprep.subr.mxu0 0.0
    %2865 = vmatpush1.msra.mxu0 0.0
    %2866 = vmatprep.subr.mxu0 0.0
    %2867 = vmatpush1.msra.mxu0 0.0
    %2868 = vmatprep.subr.mxu0 0.0
    %2869 = vmatpush1.msra.mxu0 0.0
    %2870 = vmatprep.subr.mxu0 0.0
    %2871 = vmatpush1.msra.mxu0 0.0
    %2872 = vmatprep.subr.mxu0 0.0
    %2873 = vmatpush1.msra.mxu0 0.0
    %2874 = vmatprep.subr.mxu0 0.0
    %2875 = vmatpush1.msra.mxu0 0.0
    %2876 = vmatprep.subr.mxu0 0.0
    %2877 = vmatpush1.msra.mxu0 0.0
    %2878 = vmatprep.subr.mxu0 0.0
    %2879 = vmatpush1.msra.mxu0 0.0
    %2880 = vmatprep.subr.mxu0 0.0
    %2881 = vmatpush1.msra.mxu0 0.0
    %2882 = vmatprep.subr.mxu0 0.0
    %2883 = vmatpush1.msra.mxu0 0.0
    %2884 = vmatprep.subr.mxu0 0.0
    %2885 = vmatpush1.msra.mxu0 0.0
    %2886 = vmatprep.subr.mxu0 0.0
    %2887 = vmatpush1.msra.mxu0 0.0
    %2888 = vmatprep.subr.mxu0 0.0
    %2889 = vmatpush1.msra.mxu0 0.0
    %2890 = vmatprep.subr.mxu0 0.0
    %2891 = vmatpush1.msra.mxu0 0.0
    %2892 = vmatprep.subr.mxu0 0.0
    %2893 = vmatpush1.msra.mxu0 0.0
    %2894 = vmatprep.mubr.f32.mxu0 0.0
    %2895 = vmatmul.mubr.f32.gmra.mrb[0].mxu0 %v2828
    %v2896 = vpop.f32.mrb[0].mxu0
    %v2897 = vadd.f32 0.0, %v2896
    %v2898 = vpop.f32.mrb[0].mxu0
    %v2899 = vadd.f32 0.0, %v2898
    %2900 = vdwg.mxu0
    %2901 = vmatprep.subr.mxu0 %v2818
    %2902 = vmatpush1.msra.mxu0 %v2822
    %2903 = vmatprep.subr.mxu0 0.0
    %2904 = vmatpush1.msra.mxu0 0.0
    %2905 = vmatprep.subr.mxu0 0.0
    %2906 = vmatpush1.msra.mxu0 0.0
    %2907 = vmatprep.subr.mxu0 0.0
    %2908 = vmatpush1.msra.mxu0 0.0
    %2909 = vmatprep.subr.mxu0 0.0
    %2910 = vmatpush1.msra.mxu0 0.0
    %2911 = vmatprep.subr.mxu0 0.0
    %2912 = vmatpush1.msra.mxu0 0.0
    %2913 = vmatprep.subr.mxu0 0.0
    %2914 = vmatpush1.msra.mxu0 0.0
    %2915 = vmatprep.subr.mxu0 0.0
    %2916 = vmatpush1.msra.mxu0 0.0
    %2917 = vmatprep.subr.mxu0 0.0
    %2918 = vmatpush1.msra.mxu0 0.0
    %2919 = vmatprep.subr.mxu0 0.0
    %2920 = vmatpush1.msra.mxu0 0.0
    %2921 = vmatprep.subr.mxu0 0.0
    %2922 = vmatpush1.msra.mxu0 0.0
    %2923 = vmatprep.subr.mxu0 0.0
    %2924 = vmatpush1.msra.mxu0 0.0
    %2925 = vmatprep.subr.mxu0 0.0
    %2926 = vmatpush1.msra.mxu0 0.0
    %2927 = vmatprep.subr.mxu0 0.0
    %2928 = vmatpush1.msra.mxu0 0.0
    %2929 = vmatprep.subr.mxu0 0.0
    %2930 = vmatpush1.msra.mxu0 0.0
    %2931 = vmatprep.subr.mxu0 0.0
    %2932 = vmatpush1.msra.mxu0 0.0
    %2933 = vmatprep.subr.mxu0 0.0
    %2934 = vmatpush1.msra.mxu0 0.0
    %2935 = vmatprep.subr.mxu0 0.0
    %2936 = vmatpush1.msra.mxu0 0.0
    %2937 = vmatprep.subr.mxu0 0.0
    %2938 = vmatpush1.msra.mxu0 0.0
    %2939 = vmatprep.subr.mxu0 0.0
    %2940 = vmatpush1.msra.mxu0 0.0
    %2941 = vmatprep.subr.mxu0 0.0
    %2942 = vmatpush1.msra.mxu0 0.0
    %2943 = vmatprep.subr.mxu0 0.0
    %2944 = vmatpush1.msra.mxu0 0.0
    %2945 = vmatprep.subr.mxu0 0.0
    %2946 = vmatpush1.msra.mxu0 0.0
    %2947 = vmatprep.subr.mxu0 0.0
    %2948 = vmatpush1.msra.mxu0 0.0
    %2949 = vmatprep.subr.mxu0 0.0
    %2950 = vmatpush1.msra.mxu0 0.0
    %2951 = vmatprep.subr.mxu0 0.0
    %2952 = vmatpush1.msra.mxu0 0.0
    %2953 = vmatprep.subr.mxu0 0.0
    %2954 = vmatpush1.msra.mxu0 0.0
    %2955 = vmatprep.subr.mxu0 0.0
    %2956 = vmatpush1.msra.mxu0 0.0
    %2957 = vmatprep.subr.mxu0 0.0
    %2958 = vmatpush1.msra.mxu0 0.0
    %2959 = vmatprep.subr.mxu0 0.0
    %2960 = vmatpush1.msra.mxu0 0.0
    %2961 = vmatprep.subr.mxu0 0.0
    %2962 = vmatpush1.msra.mxu0 0.0
    %2963 = vmatprep.subr.mxu0 0.0
    %2964 = vmatpush1.msra.mxu0 0.0
    %2965 = vmatprep.mubr.f32.mxu0 0.0
    %2966 = vmatmul.mubr.f32.gmra.mrb[0].mxu0 %v2828
    %v2967 = vpop.f32.mrb[0].mxu0
    %v2968 = vadd.f32 0.0, %v2967
    %v2969 = vpop.f32.mrb[0].mxu0
    %v2970 = vadd.f32 0.0, %v2969
    %2971 = vdwg.mxu0
    %v2972 = vadd.f32 %v2805, %v2897
    %v2973 = vadd.f32 %v2806, %v2899
    %v2974 = vadd.f32 %v2807, %v2968
    %v2975 = vadd.f32 %v2808, %v2970
    %s2976 = scalar_lea.vmem %s3, 104
    %v2977 = vld [vmem:[%s2976] sm:$0xff]
    %2978 = vrot.lane.b32.xlu0 %v822, 97
    %v2979 = vpop.permute.xlu0 %2978
    %2980 = vrot.lane.b32.xlu0 %v823, 97
    %v2981 = vpop.permute.xlu0 %2980
    %2982 = vrot.lane.b32.xlu0 %v824, 97
    %v2983 = vpop.permute.xlu0 %2982
    %2984 = vrot.lane.b32.xlu0 %v825, 97
    %v2985 = vpop.permute.xlu0 %2984
    %vm2986 = vcmask 793600
    %v2987 = vsel %vm2986, %v2979, %v2981
    %v2988 = vsel %vm2986, %v2981, %v2983
    %v2989 = vsel %vm2986, %v2983, %v2985
    %v2995 = vsel %vm848, %v2977, 0
    %2997 = vmatprep.subr.mxu0 %v2988
    %2998 = vmatpush1.msra.mxu0 %v2987
    %2999 = vmatprep.subr.mxu0 0.0
    %3000 = vmatpush1.msra.mxu0 0.0
    %3001 = vmatprep.subr.mxu0 0.0
    %3002 = vmatpush1.msra.mxu0 0.0
    %3003 = vmatprep.subr.mxu0 0.0
    %3004 = vmatpush1.msra.mxu0 0.0
    %3005 = vmatprep.subr.mxu0 0.0
    %3006 = vmatpush1.msra.mxu0 0.0
    %3007 = vmatprep.subr.mxu0 0.0
    %3008 = vmatpush1.msra.mxu0 0.0
    %3009 = vmatprep.subr.mxu0 0.0
    %3010 = vmatpush1.msra.mxu0 0.0
    %3011 = vmatprep.subr.mxu0 0.0
    %3012 = vmatpush1.msra.mxu0 0.0
    %3013 = vmatprep.subr.mxu0 0.0
    %3014 = vmatpush1.msra.mxu0 0.0
    %3015 = vmatprep.subr.mxu0 0.0
    %3016 = vmatpush1.msra.mxu0 0.0
    %3017 = vmatprep.subr.mxu0 0.0
    %3018 = vmatpush1.msra.mxu0 0.0
    %3019 = vmatprep.subr.mxu0 0.0
    %3020 = vmatpush1.msra.mxu0 0.0
    %3021 = vmatprep.subr.mxu0 0.0
    %3022 = vmatpush1.msra.mxu0 0.0
    %3023 = vmatprep.subr.mxu0 0.0
    %3024 = vmatpush1.msra.mxu0 0.0
    %3025 = vmatprep.subr.mxu0 0.0
    %3026 = vmatpush1.msra.mxu0 0.0
    %3027 = vmatprep.subr.mxu0 0.0
    %3028 = vmatpush1.msra.mxu0 0.0
    %3029 = vmatprep.subr.mxu0 0.0
    %3030 = vmatpush1.msra.mxu0 0.0
    %3031 = vmatprep.subr.mxu0 0.0
    %3032 = vmatpush1.msra.mxu0 0.0
    %3033 = vmatprep.subr.mxu0 0.0
    %3034 = vmatpush1.msra.mxu0 0.0
    %3035 = vmatprep.subr.mxu0 0.0
    %3036 = vmatpush1.msra.mxu0 0.0
    %3037 = vmatprep.subr.mxu0 0.0
    %3038 = vmatpush1.msra.mxu0 0.0
    %3039 = vmatprep.subr.mxu0 0.0
    %3040 = vmatpush1.msra.mxu0 0.0
    %3041 = vmatprep.subr.mxu0 0.0
    %3042 = vmatpush1.msra.mxu0 0.0
    %3043 = vmatprep.subr.mxu0 0.0
    %3044 = vmatpush1.msra.mxu0 0.0
    %3045 = vmatprep.subr.mxu0 0.0
    %3046 = vmatpush1.msra.mxu0 0.0
    %3047 = vmatprep.subr.mxu0 0.0
    %3048 = vmatpush1.msra.mxu0 0.0
    %3049 = vmatprep.subr.mxu0 0.0
    %3050 = vmatpush1.msra.mxu0 0.0
    %3051 = vmatprep.subr.mxu0 0.0
    %3052 = vmatpush1.msra.mxu0 0.0
    %3053 = vmatprep.subr.mxu0 0.0
    %3054 = vmatpush1.msra.mxu0 0.0
    %3055 = vmatprep.subr.mxu0 0.0
    %3056 = vmatpush1.msra.mxu0 0.0
    %3057 = vmatprep.subr.mxu0 0.0
    %3058 = vmatpush1.msra.mxu0 0.0
    %3059 = vmatprep.subr.mxu0 0.0
    %3060 = vmatpush1.msra.mxu0 0.0
    %3061 = vmatprep.mubr.f32.mxu0 0.0
    %3062 = vmatmul.mubr.f32.gmra.mrb[0].mxu0 %v2995
    %v3063 = vpop.f32.mrb[0].mxu0
    %v3064 = vadd.f32 0.0, %v3063
    %v3065 = vpop.f32.mrb[0].mxu0
    %v3066 = vadd.f32 0.0, %v3065
    %3067 = vdwg.mxu0
    %3068 = vmatprep.subr.mxu0 %v2985
    %3069 = vmatpush1.msra.mxu0 %v2989
    %3070 = vmatprep.subr.mxu0 0.0
    %3071 = vmatpush1.msra.mxu0 0.0
    %3072 = vmatprep.subr.mxu0 0.0
    %3073 = vmatpush1.msra.mxu0 0.0
    %3074 = vmatprep.subr.mxu0 0.0
    %3075 = vmatpush1.msra.mxu0 0.0
    %3076 = vmatprep.subr.mxu0 0.0
    %3077 = vmatpush1.msra.mxu0 0.0
    %3078 = vmatprep.subr.mxu0 0.0
    %3079 = vmatpush1.msra.mxu0 0.0
    %3080 = vmatprep.subr.mxu0 0.0
    %3081 = vmatpush1.msra.mxu0 0.0
    %3082 = vmatprep.subr.mxu0 0.0
    %3083 = vmatpush1.msra.mxu0 0.0
    %3084 = vmatprep.subr.mxu0 0.0
    %3085 = vmatpush1.msra.mxu0 0.0
    %3086 = vmatprep.subr.mxu0 0.0
    %3087 = vmatpush1.msra.mxu0 0.0
    %3088 = vmatprep.subr.mxu0 0.0
    %3089 = vmatpush1.msra.mxu0 0.0
    %3090 = vmatprep.subr.mxu0 0.0
    %3091 = vmatpush1.msra.mxu0 0.0
    %3092 = vmatprep.subr.mxu0 0.0
    %3093 = vmatpush1.msra.mxu0 0.0
    %3094 = vmatprep.subr.mxu0 0.0
    %3095 = vmatpush1.msra.mxu0 0.0
    %3096 = vmatprep.subr.mxu0 0.0
    %3097 = vmatpush1.msra.mxu0 0.0
    %3098 = vmatprep.subr.mxu0 0.0
    %3099 = vmatpush1.msra.mxu0 0.0
    %3100 = vmatprep.subr.mxu0 0.0
    %3101 = vmatpush1.msra.mxu0 0.0
    %3102 = vmatprep.subr.mxu0 0.0
    %3103 = vmatpush1.msra.mxu0 0.0
    %3104 = vmatprep.subr.mxu0 0.0
    %3105 = vmatpush1.msra.mxu0 0.0
    %3106 = vmatprep.subr.mxu0 0.0
    %3107 = vmatpush1.msra.mxu0 0.0
    %3108 = vmatprep.subr.mxu0 0.0
    %3109 = vmatpush1.msra.mxu0 0.0
    %3110 = vmatprep.subr.mxu0 0.0
    %3111 = vmatpush1.msra.mxu0 0.0
    %3112 = vmatprep.subr.mxu0 0.0
    %3113 = vmatpush1.msra.mxu0 0.0
    %3114 = vmatprep.subr.mxu0 0.0
    %3115 = vmatpush1.msra.mxu0 0.0
    %3116 = vmatprep.subr.mxu0 0.0
    %3117 = vmatpush1.msra.mxu0 0.0
    %3118 = vmatprep.subr.mxu0 0.0
    %3119 = vmatpush1.msra.mxu0 0.0
    %3120 = vmatprep.subr.mxu0 0.0
    %3121 = vmatpush1.msra.mxu0 0.0
    %3122 = vmatprep.subr.mxu0 0.0
    %3123 = vmatpush1.msra.mxu0 0.0
    %3124 = vmatprep.subr.mxu0 0.0
    %3125 = vmatpush1.msra.mxu0 0.0
    %3126 = vmatprep.subr.mxu0 0.0
    %3127 = vmatpush1.msra.mxu0 0.0
    %3128 = vmatprep.subr.mxu0 0.0
    %3129 = vmatpush1.msra.mxu0 0.0
    %3130 = vmatprep.subr.mxu0 0.0
    %3131 = vmatpush1.msra.mxu0 0.0
    %3132 = vmatprep.mubr.f32.mxu0 0.0
    %3133 = vmatmul.mubr.f32.gmra.mrb[0].mxu0 %v2995
    %v3134 = vpop.f32.mrb[0].mxu0
    %v3135 = vadd.f32 0.0, %v3134
    %v3136 = vpop.f32.mrb[0].mxu0
    %v3137 = vadd.f32 0.0, %v3136
    %3138 = vdwg.mxu0
    %v3139 = vadd.f32 %v2972, %v3064
    %v3140 = vadd.f32 %v2973, %v3066
    %v3141 = vadd.f32 %v2974, %v3135
    %v3142 = vadd.f32 %v2975, %v3137
    %s3143 = scalar_lea.vmem %s3, 112
    %v3144 = vld [vmem:[%s3143] sm:$0xff]
    %3145 = vrot.lane.b32.xlu0 %v822, 96
    %v3146 = vpop.permute.xlu0 %3145
    %3147 = vrot.lane.b32.xlu0 %v823, 96
    %v3148 = vpop.permute.xlu0 %3147
    %3149 = vrot.lane.b32.xlu0 %v824, 96
    %v3150 = vpop.permute.xlu0 %3149
    %3151 = vrot.lane.b32.xlu0 %v825, 96
    %v3152 = vpop.permute.xlu0 %3151
    %vm3153 = vcmask 785408
    %v3154 = vsel %vm3153, %v3146, %v3148
    %v3155 = vsel %vm3153, %v3148, %v3150
    %v3156 = vsel %vm3153, %v3150, %v3152
    %v3162 = vsel %vm848, %v3144, 0
    %3164 = vmatprep.subr.mxu0 %v3155
    %3165 = vmatpush1.msra.mxu0 %v3154
    %3166 = vmatprep.subr.mxu0 0.0
    %3167 = vmatpush1.msra.mxu0 0.0
    %3168 = vmatprep.subr.mxu0 0.0
    %3169 = vmatpush1.msra.mxu0 0.0
    %3170 = vmatprep.subr.mxu0 0.0
    %3171 = vmatpush1.msra.mxu0 0.0
    %3172 = vmatprep.subr.mxu0 0.0
    %3173 = vmatpush1.msra.mxu0 0.0
    %3174 = vmatprep.subr.mxu0 0.0
    %3175 = vmatpush1.msra.mxu0 0.0
    %3176 = vmatprep.subr.mxu0 0.0
    %3177 = vmatpush1.msra.mxu0 0.0
    %3178 = vmatprep.subr.mxu0 0.0
    %3179 = vmatpush1.msra.mxu0 0.0
    %3180 = vmatprep.subr.mxu0 0.0
    %3181 = vmatpush1.msra.mxu0 0.0
    %3182 = vmatprep.subr.mxu0 0.0
    %3183 = vmatpush1.msra.mxu0 0.0
    %3184 = vmatprep.subr.mxu0 0.0
    %3185 = vmatpush1.msra.mxu0 0.0
    %3186 = vmatprep.subr.mxu0 0.0
    %3187 = vmatpush1.msra.mxu0 0.0
    %3188 = vmatprep.subr.mxu0 0.0
    %3189 = vmatpush1.msra.mxu0 0.0
    %3190 = vmatprep.subr.mxu0 0.0
    %3191 = vmatpush1.msra.mxu0 0.0
    %3192 = vmatprep.subr.mxu0 0.0
    %3193 = vmatpush1.msra.mxu0 0.0
    %3194 = vmatprep.subr.mxu0 0.0
    %3195 = vmatpush1.msra.mxu0 0.0
    %3196 = vmatprep.subr.mxu0 0.0
    %3197 = vmatpush1.msra.mxu0 0.0
    %3198 = vmatprep.subr.mxu0 0.0
    %3199 = vmatpush1.msra.mxu0 0.0
    %3200 = vmatprep.subr.mxu0 0.0
    %3201 = vmatpush1.msra.mxu0 0.0
    %3202 = vmatprep.subr.mxu0 0.0
    %3203 = vmatpush1.msra.mxu0 0.0
    %3204 = vmatprep.subr.mxu0 0.0
    %3205 = vmatpush1.msra.mxu0 0.0
    %3206 = vmatprep.subr.mxu0 0.0
    %3207 = vmatpush1.msra.mxu0 0.0
    %3208 = vmatprep.subr.mxu0 0.0
    %3209 = vmatpush1.msra.mxu0 0.0
    %3210 = vmatprep.subr.mxu0 0.0
    %3211 = vmatpush1.msra.mxu0 0.0
    %3212 = vmatprep.subr.mxu0 0.0
    %3213 = vmatpush1.msra.mxu0 0.0
    %3214 = vmatprep.subr.mxu0 0.0
    %3215 = vmatpush1.msra.mxu0 0.0
    %3216 = vmatprep.subr.mxu0 0.0
    %3217 = vmatpush1.msra.mxu0 0.0
    %3218 = vmatprep.subr.mxu0 0.0
    %3219 = vmatpush1.msra.mxu0 0.0
    %3220 = vmatprep.subr.mxu0 0.0
    %3221 = vmatpush1.msra.mxu0 0.0
    %3222 = vmatprep.subr.mxu0 0.0
    %3223 = vmatpush1.msra.mxu0 0.0
    %3224 = vmatprep.subr.mxu0 0.0
    %3225 = vmatpush1.msra.mxu0 0.0
    %3226 = vmatprep.subr.mxu0 0.0
    %3227 = vmatpush1.msra.mxu0 0.0
    %3228 = vmatprep.mubr.f32.mxu0 0.0
    %3229 = vmatmul.mubr.f32.gmra.mrb[0].mxu0 %v3162
    %v3230 = vpop.f32.mrb[0].mxu0
    %v3231 = vadd.f32 0.0, %v3230
    %v3232 = vpop.f32.mrb[0].mxu0
    %v3233 = vadd.f32 0.0, %v3232
    %3234 = vdwg.mxu0
    %3235 = vmatprep.subr.mxu0 %v3152
    %3236 = vmatpush1.msra.mxu0 %v3156
    %3237 = vmatprep.subr.mxu0 0.0
    %3238 = vmatpush1.msra.mxu0 0.0
    %3239 = vmatprep.subr.mxu0 0.0
    %3240 = vmatpush1.msra.mxu0 0.0
    %3241 = vmatprep.subr.mxu0 0.0
    %3242 = vmatpush1.msra.mxu0 0.0
    %3243 = vmatprep.subr.mxu0 0.0
    %3244 = vmatpush1.msra.mxu0 0.0
    %3245 = vmatprep.subr.mxu0 0.0
    %3246 = vmatpush1.msra.mxu0 0.0
    %3247 = vmatprep.subr.mxu0 0.0
    %3248 = vmatpush1.msra.mxu0 0.0
    %3249 = vmatprep.subr.mxu0 0.0
    %3250 = vmatpush1.msra.mxu0 0.0
    %3251 = vmatprep.subr.mxu0 0.0
    %3252 = vmatpush1.msra.mxu0 0.0
    %3253 = vmatprep.subr.mxu0 0.0
    %3254 = vmatpush1.msra.mxu0 0.0
    %3255 = vmatprep.subr.mxu0 0.0
    %3256 = vmatpush1.msra.mxu0 0.0
    %3257 = vmatprep.subr.mxu0 0.0
    %3258 = vmatpush1.msra.mxu0 0.0
    %3259 = vmatprep.subr.mxu0 0.0
    %3260 = vmatpush1.msra.mxu0 0.0
    %3261 = vmatprep.subr.mxu0 0.0
    %3262 = vmatpush1.msra.mxu0 0.0
    %3263 = vmatprep.subr.mxu0 0.0
    %3264 = vmatpush1.msra.mxu0 0.0
    %3265 = vmatprep.subr.mxu0 0.0
    %3266 = vmatpush1.msra.mxu0 0.0
    %3267 = vmatprep.subr.mxu0 0.0
    %3268 = vmatpush1.msra.mxu0 0.0
    %3269 = vmatprep.subr.mxu0 0.0
    %3270 = vmatpush1.msra.mxu0 0.0
    %3271 = vmatprep.subr.mxu0 0.0
    %3272 = vmatpush1.msra.mxu0 0.0
    %3273 = vmatprep.subr.mxu0 0.0
    %3274 = vmatpush1.msra.mxu0 0.0
    %3275 = vmatprep.subr.mxu0 0.0
    %3276 = vmatpush1.msra.mxu0 0.0
    %3277 = vmatprep.subr.mxu0 0.0
    %3278 = vmatpush1.msra.mxu0 0.0
    %3279 = vmatprep.subr.mxu0 0.0
    %3280 = vmatpush1.msra.mxu0 0.0
    %3281 = vmatprep.subr.mxu0 0.0
    %3282 = vmatpush1.msra.mxu0 0.0
    %3283 = vmatprep.subr.mxu0 0.0
    %3284 = vmatpush1.msra.mxu0 0.0
    %3285 = vmatprep.subr.mxu0 0.0
    %3286 = vmatpush1.msra.mxu0 0.0
    %3287 = vmatprep.subr.mxu0 0.0
    %3288 = vmatpush1.msra.mxu0 0.0
    %3289 = vmatprep.subr.mxu0 0.0
    %3290 = vmatpush1.msra.mxu0 0.0
    %3291 = vmatprep.subr.mxu0 0.0
    %3292 = vmatpush1.msra.mxu0 0.0
    %3293 = vmatprep.subr.mxu0 0.0
    %3294 = vmatpush1.msra.mxu0 0.0
    %3295 = vmatprep.subr.mxu0 0.0
    %3296 = vmatpush1.msra.mxu0 0.0
    %3297 = vmatprep.subr.mxu0 0.0
    %3298 = vmatpush1.msra.mxu0 0.0
    %3299 = vmatprep.mubr.f32.mxu0 0.0
    %3300 = vmatmul.mubr.f32.gmra.mrb[0].mxu0 %v3162
    %v3301 = vpop.f32.mrb[0].mxu0
    %v3302 = vadd.f32 0.0, %v3301
    %v3303 = vpop.f32.mrb[0].mxu0
    %v3304 = vadd.f32 0.0, %v3303
    %3305 = vdwg.mxu0
    %v3306 = vadd.f32 %v3139, %v3231
    %v3307 = vadd.f32 %v3140, %v3233
    %v3308 = vadd.f32 %v3141, %v3302
    %v3309 = vadd.f32 %v3142, %v3304
    %s3310 = scalar_lea.vmem %s3, 120
    %v3311 = vld [vmem:[%s3310] sm:$0xff]
    %3312 = vrot.lane.b32.xlu0 %v822, 86
    %v3313 = vpop.permute.xlu0 %3312
    %3314 = vrot.lane.b32.xlu0 %v823, 86
    %v3315 = vpop.permute.xlu0 %3314
    %3316 = vrot.lane.b32.xlu0 %v824, 86
    %v3317 = vpop.permute.xlu0 %3316
    %3318 = vrot.lane.b32.xlu0 %v825, 86
    %v3319 = vpop.permute.xlu0 %3318
    %vm3320 = vcmask 703488
    %v3321 = vsel %vm3320, %v3313, %v3315
    %v3322 = vsel %vm3320, %v3315, %v3317
    %v3323 = vsel %vm3320, %v3317, %v3319
    %v3329 = vsel %vm848, %v3311, 0
    %3331 = vmatprep.subr.mxu0 %v3322
    %3332 = vmatpush1.msra.mxu0 %v3321
    %3333 = vmatprep.subr.mxu0 0.0
    %3334 = vmatpush1.msra.mxu0 0.0
    %3335 = vmatprep.subr.mxu0 0.0
    %3336 = vmatpush1.msra.mxu0 0.0
    %3337 = vmatprep.subr.mxu0 0.0
    %3338 = vmatpush1.msra.mxu0 0.0
    %3339 = vmatprep.subr.mxu0 0.0
    %3340 = vmatpush1.msra.mxu0 0.0
    %3341 = vmatprep.subr.mxu0 0.0
    %3342 = vmatpush1.msra.mxu0 0.0
    %3343 = vmatprep.subr.mxu0 0.0
    %3344 = vmatpush1.msra.mxu0 0.0
    %3345 = vmatprep.subr.mxu0 0.0
    %3346 = vmatpush1.msra.mxu0 0.0
    %3347 = vmatprep.subr.mxu0 0.0
    %3348 = vmatpush1.msra.mxu0 0.0
    %3349 = vmatprep.subr.mxu0 0.0
    %3350 = vmatpush1.msra.mxu0 0.0
    %3351 = vmatprep.subr.mxu0 0.0
    %3352 = vmatpush1.msra.mxu0 0.0
    %3353 = vmatprep.subr.mxu0 0.0
    %3354 = vmatpush1.msra.mxu0 0.0
    %3355 = vmatprep.subr.mxu0 0.0
    %3356 = vmatpush1.msra.mxu0 0.0
    %3357 = vmatprep.subr.mxu0 0.0
    %3358 = vmatpush1.msra.mxu0 0.0
    %3359 = vmatprep.subr.mxu0 0.0
    %3360 = vmatpush1.msra.mxu0 0.0
    %3361 = vmatprep.subr.mxu0 0.0
    %3362 = vmatpush1.msra.mxu0 0.0
    %3363 = vmatprep.subr.mxu0 0.0
    %3364 = vmatpush1.msra.mxu0 0.0
    %3365 = vmatprep.subr.mxu0 0.0
    %3366 = vmatpush1.msra.mxu0 0.0
    %3367 = vmatprep.subr.mxu0 0.0
    %3368 = vmatpush1.msra.mxu0 0.0
    %3369 = vmatprep.subr.mxu0 0.0
    %3370 = vmatpush1.msra.mxu0 0.0
    %3371 = vmatprep.subr.mxu0 0.0
    %3372 = vmatpush1.msra.mxu0 0.0
    %3373 = vmatprep.subr.mxu0 0.0
    %3374 = vmatpush1.msra.mxu0 0.0
    %3375 = vmatprep.subr.mxu0 0.0
    %3376 = vmatpush1.msra.mxu0 0.0
    %3377 = vmatprep.subr.mxu0 0.0
    %3378 = vmatpush1.msra.mxu0 0.0
    %3379 = vmatprep.subr.mxu0 0.0
    %3380 = vmatpush1.msra.mxu0 0.0
    %3381 = vmatprep.subr.mxu0 0.0
    %3382 = vmatpush1.msra.mxu0 0.0
    %3383 = vmatprep.subr.mxu0 0.0
    %3384 = vmatpush1.msra.mxu0 0.0
    %3385 = vmatprep.subr.mxu0 0.0
    %3386 = vmatpush1.msra.mxu0 0.0
    %3387 = vmatprep.subr.mxu0 0.0
    %3388 = vmatpush1.msra.mxu0 0.0
    %3389 = vmatprep.subr.mxu0 0.0
    %3390 = vmatpush1.msra.mxu0 0.0
    %3391 = vmatprep.subr.mxu0 0.0
    %3392 = vmatpush1.msra.mxu0 0.0
    %3393 = vmatprep.subr.mxu0 0.0
    %3394 = vmatpush1.msra.mxu0 0.0
    %3395 = vmatprep.mubr.f32.mxu0 0.0
    %3396 = vmatmul.mubr.f32.gmra.mrb[0].mxu0 %v3329
    %v3397 = vpop.f32.mrb[0].mxu0
    %v3398 = vadd.f32 0.0, %v3397
    %v3399 = vpop.f32.mrb[0].mxu0
    %v3400 = vadd.f32 0.0, %v3399
    %3401 = vdwg.mxu0
    %3402 = vmatprep.subr.mxu0 %v3319
    %3403 = vmatpush1.msra.mxu0 %v3323
    %3404 = vmatprep.subr.mxu0 0.0
    %3405 = vmatpush1.msra.mxu0 0.0
    %3406 = vmatprep.subr.mxu0 0.0
    %3407 = vmatpush1.msra.mxu0 0.0
    %3408 = vmatprep.subr.mxu0 0.0
    %3409 = vmatpush1.msra.mxu0 0.0
    %3410 = vmatprep.subr.mxu0 0.0
    %3411 = vmatpush1.msra.mxu0 0.0
    %3412 = vmatprep.subr.mxu0 0.0
    %3413 = vmatpush1.msra.mxu0 0.0
    %3414 = vmatprep.subr.mxu0 0.0
    %3415 = vmatpush1.msra.mxu0 0.0
    %3416 = vmatprep.subr.mxu0 0.0
    %3417 = vmatpush1.msra.mxu0 0.0
    %3418 = vmatprep.subr.mxu0 0.0
    %3419 = vmatpush1.msra.mxu0 0.0
    %3420 = vmatprep.subr.mxu0 0.0
    %3421 = vmatpush1.msra.mxu0 0.0
    %3422 = vmatprep.subr.mxu0 0.0
    %3423 = vmatpush1.msra.mxu0 0.0
    %3424 = vmatprep.subr.mxu0 0.0
    %3425 = vmatpush1.msra.mxu0 0.0
    %3426 = vmatprep.subr.mxu0 0.0
    %3427 = vmatpush1.msra.mxu0 0.0
    %3428 = vmatprep.subr.mxu0 0.0
    %3429 = vmatpush1.msra.mxu0 0.0
    %3430 = vmatprep.subr.mxu0 0.0
    %3431 = vmatpush1.msra.mxu0 0.0
    %3432 = vmatprep.subr.mxu0 0.0
    %3433 = vmatpush1.msra.mxu0 0.0
    %3434 = vmatprep.subr.mxu0 0.0
    %3435 = vmatpush1.msra.mxu0 0.0
    %3436 = vmatprep.subr.mxu0 0.0
    %3437 = vmatpush1.msra.mxu0 0.0
    %3438 = vmatprep.subr.mxu0 0.0
    %3439 = vmatpush1.msra.mxu0 0.0
    %3440 = vmatprep.subr.mxu0 0.0
    %3441 = vmatpush1.msra.mxu0 0.0
    %3442 = vmatprep.subr.mxu0 0.0
    %3443 = vmatpush1.msra.mxu0 0.0
    %3444 = vmatprep.subr.mxu0 0.0
    %3445 = vmatpush1.msra.mxu0 0.0
    %3446 = vmatprep.subr.mxu0 0.0
    %3447 = vmatpush1.msra.mxu0 0.0
    %3448 = vmatprep.subr.mxu0 0.0
    %3449 = vmatpush1.msra.mxu0 0.0
    %3450 = vmatprep.subr.mxu0 0.0
    %3451 = vmatpush1.msra.mxu0 0.0
    %3452 = vmatprep.subr.mxu0 0.0
    %3453 = vmatpush1.msra.mxu0 0.0
    %3454 = vmatprep.subr.mxu0 0.0
    %3455 = vmatpush1.msra.mxu0 0.0
    %3456 = vmatprep.subr.mxu0 0.0
    %3457 = vmatpush1.msra.mxu0 0.0
    %3458 = vmatprep.subr.mxu0 0.0
    %3459 = vmatpush1.msra.mxu0 0.0
    %3460 = vmatprep.subr.mxu0 0.0
    %3461 = vmatpush1.msra.mxu0 0.0
    %3462 = vmatprep.subr.mxu0 0.0
    %3463 = vmatpush1.msra.mxu0 0.0
    %3464 = vmatprep.subr.mxu0 0.0
    %3465 = vmatpush1.msra.mxu0 0.0
    %3466 = vmatprep.mubr.f32.mxu0 0.0
    %3467 = vmatmul.mubr.f32.gmra.mrb[0].mxu0 %v3329
    %v3468 = vpop.f32.mrb[0].mxu0
    %v3469 = vadd.f32 0.0, %v3468
    %v3470 = vpop.f32.mrb[0].mxu0
    %v3471 = vadd.f32 0.0, %v3470
    %3472 = vdwg.mxu0
    %v3473 = vadd.f32 %v3306, %v3398
    %v3474 = vadd.f32 %v3307, %v3400
    %v3475 = vadd.f32 %v3308, %v3469
    %v3476 = vadd.f32 %v3309, %v3471
    %s3477 = scalar_lea.vmem %s3, 128
    %v3478 = vld [vmem:[%s3477] sm:$0xff]
    %3479 = vrot.lane.b32.xlu0 %v822, 85
    %v3480 = vpop.permute.xlu0 %3479
    %3481 = vrot.lane.b32.xlu0 %v823, 85
    %v3482 = vpop.permute.xlu0 %3481
    %3483 = vrot.lane.b32.xlu0 %v824, 85
    %v3484 = vpop.permute.xlu0 %3483
    %3485 = vrot.lane.b32.xlu0 %v825, 85
    %v3486 = vpop.permute.xlu0 %3485
    %vm3487 = vcmask 695296
    %v3488 = vsel %vm3487, %v3480, %v3482
    %v3489 = vsel %vm3487, %v3482, %v3484
    %v3490 = vsel %vm3487, %v3484, %v3486
    %v3496 = vsel %vm848, %v3478, 0
    %3498 = vmatprep.subr.mxu0 %v3489
    %3499 = vmatpush1.msra.mxu0 %v3488
    %3500 = vmatprep.subr.mxu0 0.0
    %3501 = vmatpush1.msra.mxu0 0.0
    %3502 = vmatprep.subr.mxu0 0.0
    %3503 = vmatpush1.msra.mxu0 0.0
    %3504 = vmatprep.subr.mxu0 0.0
    %3505 = vmatpush1.msra.mxu0 0.0
    %3506 = vmatprep.subr.mxu0 0.0
    %3507 = vmatpush1.msra.mxu0 0.0
    %3508 = vmatprep.subr.mxu0 0.0
    %3509 = vmatpush1.msra.mxu0 0.0
    %3510 = vmatprep.subr.mxu0 0.0
    %3511 = vmatpush1.msra.mxu0 0.0
    %3512 = vmatprep.subr.mxu0 0.0
    %3513 = vmatpush1.msra.mxu0 0.0
    %3514 = vmatprep.subr.mxu0 0.0
    %3515 = vmatpush1.msra.mxu0 0.0
    %3516 = vmatprep.subr.mxu0 0.0
    %3517 = vmatpush1.msra.mxu0 0.0
    %3518 = vmatprep.subr.mxu0 0.0
    %3519 = vmatpush1.msra.mxu0 0.0
    %3520 = vmatprep.subr.mxu0 0.0
    %3521 = vmatpush1.msra.mxu0 0.0
    %3522 = vmatprep.subr.mxu0 0.0
    %3523 = vmatpush1.msra.mxu0 0.0
    %3524 = vmatprep.subr.mxu0 0.0
    %3525 = vmatpush1.msra.mxu0 0.0
    %3526 = vmatprep.subr.mxu0 0.0
    %3527 = vmatpush1.msra.mxu0 0.0
    %3528 = vmatprep.subr.mxu0 0.0
    %3529 = vmatpush1.msra.mxu0 0.0
    %3530 = vmatprep.subr.mxu0 0.0
    %3531 = vmatpush1.msra.mxu0 0.0
    %3532 = vmatprep.subr.mxu0 0.0
    %3533 = vmatpush1.msra.mxu0 0.0
    %3534 = vmatprep.subr.mxu0 0.0
    %3535 = vmatpush1.msra.mxu0 0.0
    %3536 = vmatprep.subr.mxu0 0.0
    %3537 = vmatpush1.msra.mxu0 0.0
    %3538 = vmatprep.subr.mxu0 0.0
    %3539 = vmatpush1.msra.mxu0 0.0
    %3540 = vmatprep.subr.mxu0 0.0
    %3541 = vmatpush1.msra.mxu0 0.0
    %3542 = vmatprep.subr.mxu0 0.0
    %3543 = vmatpush1.msra.mxu0 0.0
    %3544 = vmatprep.subr.mxu0 0.0
    %3545 = vmatpush1.msra.mxu0 0.0
    %3546 = vmatprep.subr.mxu0 0.0
    %3547 = vmatpush1.msra.mxu0 0.0
    %3548 = vmatprep.subr.mxu0 0.0
    %3549 = vmatpush1.msra.mxu0 0.0
    %3550 = vmatprep.subr.mxu0 0.0
    %3551 = vmatpush1.msra.mxu0 0.0
    %3552 = vmatprep.subr.mxu0 0.0
    %3553 = vmatpush1.msra.mxu0 0.0
    %3554 = vmatprep.subr.mxu0 0.0
    %3555 = vmatpush1.msra.mxu0 0.0
    %3556 = vmatprep.subr.mxu0 0.0
    %3557 = vmatpush1.msra.mxu0 0.0
    %3558 = vmatprep.subr.mxu0 0.0
    %3559 = vmatpush1.msra.mxu0 0.0
    %3560 = vmatprep.subr.mxu0 0.0
    %3561 = vmatpush1.msra.mxu0 0.0
    %3562 = vmatprep.mubr.f32.mxu0 0.0
    %3563 = vmatmul.mubr.f32.gmra.mrb[0].mxu0 %v3496
    %v3564 = vpop.f32.mrb[0].mxu0
    %v3565 = vadd.f32 0.0, %v3564
    %v3566 = vpop.f32.mrb[0].mxu0
    %v3567 = vadd.f32 0.0, %v3566
    %3568 = vdwg.mxu0
    %3569 = vmatprep.subr.mxu0 %v3486
    %3570 = vmatpush1.msra.mxu0 %v3490
    %3571 = vmatprep.subr.mxu0 0.0
    %3572 = vmatpush1.msra.mxu0 0.0
    %3573 = vmatprep.subr.mxu0 0.0
    %3574 = vmatpush1.msra.mxu0 0.0
    %3575 = vmatprep.subr.mxu0 0.0
    %3576 = vmatpush1.msra.mxu0 0.0
    %3577 = vmatprep.subr.mxu0 0.0
    %3578 = vmatpush1.msra.mxu0 0.0
    %3579 = vmatprep.subr.mxu0 0.0
    %3580 = vmatpush1.msra.mxu0 0.0
    %3581 = vmatprep.subr.mxu0 0.0
    %3582 = vmatpush1.msra.mxu0 0.0
    %3583 = vmatprep.subr.mxu0 0.0
    %3584 = vmatpush1.msra.mxu0 0.0
    %3585 = vmatprep.subr.mxu0 0.0
    %3586 = vmatpush1.msra.mxu0 0.0
    %3587 = vmatprep.subr.mxu0 0.0
    %3588 = vmatpush1.msra.mxu0 0.0
    %3589 = vmatprep.subr.mxu0 0.0
    %3590 = vmatpush1.msra.mxu0 0.0
    %3591 = vmatprep.subr.mxu0 0.0
    %3592 = vmatpush1.msra.mxu0 0.0
    %3593 = vmatprep.subr.mxu0 0.0
    %3594 = vmatpush1.msra.mxu0 0.0
    %3595 = vmatprep.subr.mxu0 0.0
    %3596 = vmatpush1.msra.mxu0 0.0
    %3597 = vmatprep.subr.mxu0 0.0
    %3598 = vmatpush1.msra.mxu0 0.0
    %3599 = vmatprep.subr.mxu0 0.0
    %3600 = vmatpush1.msra.mxu0 0.0
    %3601 = vmatprep.subr.mxu0 0.0
    %3602 = vmatpush1.msra.mxu0 0.0
    %3603 = vmatprep.subr.mxu0 0.0
    %3604 = vmatpush1.msra.mxu0 0.0
    %3605 = vmatprep.subr.mxu0 0.0
    %3606 = vmatpush1.msra.mxu0 0.0
    %3607 = vmatprep.subr.mxu0 0.0
    %3608 = vmatpush1.msra.mxu0 0.0
    %3609 = vmatprep.subr.mxu0 0.0
    %3610 = vmatpush1.msra.mxu0 0.0
    %3611 = vmatprep.subr.mxu0 0.0
    %3612 = vmatpush1.msra.mxu0 0.0
    %3613 = vmatprep.subr.mxu0 0.0
    %3614 = vmatpush1.msra.mxu0 0.0
    %3615 = vmatprep.subr.mxu0 0.0
    %3616 = vmatpush1.msra.mxu0 0.0
    %3617 = vmatprep.subr.mxu0 0.0
    %3618 = vmatpush1.msra.mxu0 0.0
    %3619 = vmatprep.subr.mxu0 0.0
    %3620 = vmatpush1.msra.mxu0 0.0
    %3621 = vmatprep.subr.mxu0 0.0
    %3622 = vmatpush1.msra.mxu0 0.0
    %3623 = vmatprep.subr.mxu0 0.0
    %3624 = vmatpush1.msra.mxu0 0.0
    %3625 = vmatprep.subr.mxu0 0.0
    %3626 = vmatpush1.msra.mxu0 0.0
    %3627 = vmatprep.subr.mxu0 0.0
    %3628 = vmatpush1.msra.mxu0 0.0
    %3629 = vmatprep.subr.mxu0 0.0
    %3630 = vmatpush1.msra.mxu0 0.0
    %3631 = vmatprep.subr.mxu0 0.0
    %3632 = vmatpush1.msra.mxu0 0.0
    %3633 = vmatprep.mubr.f32.mxu0 0.0
    %3634 = vmatmul.mubr.f32.gmra.mrb[0].mxu0 %v3496
    %v3635 = vpop.f32.mrb[0].mxu0
    %v3636 = vadd.f32 0.0, %v3635
    %v3637 = vpop.f32.mrb[0].mxu0
    %v3638 = vadd.f32 0.0, %v3637
    %3639 = vdwg.mxu0
    %v3640 = vadd.f32 %v3473, %v3565
    %v3641 = vadd.f32 %v3474, %v3567
    %v3642 = vadd.f32 %v3475, %v3636
    %v3643 = vadd.f32 %v3476, %v3638
    %s3644 = scalar_lea.vmem %s3, 136
    %v3645 = vld [vmem:[%s3644] sm:$0xff]
    %3646 = vrot.lane.b32.xlu0 %v822, 84
    %v3647 = vpop.permute.xlu0 %3646
    %3648 = vrot.lane.b32.xlu0 %v823, 84
    %v3649 = vpop.permute.xlu0 %3648
    %3650 = vrot.lane.b32.xlu0 %v824, 84
    %v3651 = vpop.permute.xlu0 %3650
    %3652 = vrot.lane.b32.xlu0 %v825, 84
    %v3653 = vpop.permute.xlu0 %3652
    %vm3654 = vcmask 687104
    %v3655 = vsel %vm3654, %v3647, %v3649
    %v3656 = vsel %vm3654, %v3649, %v3651
    %v3657 = vsel %vm3654, %v3651, %v3653
    %v3663 = vsel %vm848, %v3645, 0
    %3665 = vmatprep.subr.mxu0 %v3656
    %3666 = vmatpush1.msra.mxu0 %v3655
    %3667 = vmatprep.subr.mxu0 0.0
    %3668 = vmatpush1.msra.mxu0 0.0
    %3669 = vmatprep.subr.mxu0 0.0
    %3670 = vmatpush1.msra.mxu0 0.0
    %3671 = vmatprep.subr.mxu0 0.0
    %3672 = vmatpush1.msra.mxu0 0.0
    %3673 = vmatprep.subr.mxu0 0.0
    %3674 = vmatpush1.msra.mxu0 0.0
    %3675 = vmatprep.subr.mxu0 0.0
    %3676 = vmatpush1.msra.mxu0 0.0
    %3677 = vmatprep.subr.mxu0 0.0
    %3678 = vmatpush1.msra.mxu0 0.0
    %3679 = vmatprep.subr.mxu0 0.0
    %3680 = vmatpush1.msra.mxu0 0.0
    %3681 = vmatprep.subr.mxu0 0.0
    %3682 = vmatpush1.msra.mxu0 0.0
    %3683 = vmatprep.subr.mxu0 0.0
    %3684 = vmatpush1.msra.mxu0 0.0
    %3685 = vmatprep.subr.mxu0 0.0
    %3686 = vmatpush1.msra.mxu0 0.0
    %3687 = vmatprep.subr.mxu0 0.0
    %3688 = vmatpush1.msra.mxu0 0.0
    %3689 = vmatprep.subr.mxu0 0.0
    %3690 = vmatpush1.msra.mxu0 0.0
    %3691 = vmatprep.subr.mxu0 0.0
    %3692 = vmatpush1.msra.mxu0 0.0
    %3693 = vmatprep.subr.mxu0 0.0
    %3694 = vmatpush1.msra.mxu0 0.0
    %3695 = vmatprep.subr.mxu0 0.0
    %3696 = vmatpush1.msra.mxu0 0.0
    %3697 = vmatprep.subr.mxu0 0.0
    %3698 = vmatpush1.msra.mxu0 0.0
    %3699 = vmatprep.subr.mxu0 0.0
    %3700 = vmatpush1.msra.mxu0 0.0
    %3701 = vmatprep.subr.mxu0 0.0
    %3702 = vmatpush1.msra.mxu0 0.0
    %3703 = vmatprep.subr.mxu0 0.0
    %3704 = vmatpush1.msra.mxu0 0.0
    %3705 = vmatprep.subr.mxu0 0.0
    %3706 = vmatpush1.msra.mxu0 0.0
    %3707 = vmatprep.subr.mxu0 0.0
    %3708 = vmatpush1.msra.mxu0 0.0
    %3709 = vmatprep.subr.mxu0 0.0
    %3710 = vmatpush1.msra.mxu0 0.0
    %3711 = vmatprep.subr.mxu0 0.0
    %3712 = vmatpush1.msra.mxu0 0.0
    %3713 = vmatprep.subr.mxu0 0.0
    %3714 = vmatpush1.msra.mxu0 0.0
    %3715 = vmatprep.subr.mxu0 0.0
    %3716 = vmatpush1.msra.mxu0 0.0
    %3717 = vmatprep.subr.mxu0 0.0
    %3718 = vmatpush1.msra.mxu0 0.0
    %3719 = vmatprep.subr.mxu0 0.0
    %3720 = vmatpush1.msra.mxu0 0.0
    %3721 = vmatprep.subr.mxu0 0.0
    %3722 = vmatpush1.msra.mxu0 0.0
    %3723 = vmatprep.subr.mxu0 0.0
    %3724 = vmatpush1.msra.mxu0 0.0
    %3725 = vmatprep.subr.mxu0 0.0
    %3726 = vmatpush1.msra.mxu0 0.0
    %3727 = vmatprep.subr.mxu0 0.0
    %3728 = vmatpush1.msra.mxu0 0.0
    %3729 = vmatprep.mubr.f32.mxu0 0.0
    %3730 = vmatmul.mubr.f32.gmra.mrb[0].mxu0 %v3663
    %v3731 = vpop.f32.mrb[0].mxu0
    %v3732 = vadd.f32 0.0, %v3731
    %v3733 = vpop.f32.mrb[0].mxu0
    %v3734 = vadd.f32 0.0, %v3733
    %3735 = vdwg.mxu0
    %3736 = vmatprep.subr.mxu0 %v3653
    %3737 = vmatpush1.msra.mxu0 %v3657
    %3738 = vmatprep.subr.mxu0 0.0
    %3739 = vmatpush1.msra.mxu0 0.0
    %3740 = vmatprep.subr.mxu0 0.0
    %3741 = vmatpush1.msra.mxu0 0.0
    %3742 = vmatprep.subr.mxu0 0.0
    %3743 = vmatpush1.msra.mxu0 0.0
    %3744 = vmatprep.subr.mxu0 0.0
    %3745 = vmatpush1.msra.mxu0 0.0
    %3746 = vmatprep.subr.mxu0 0.0
    %3747 = vmatpush1.msra.mxu0 0.0
    %3748 = vmatprep.subr.mxu0 0.0
    %3749 = vmatpush1.msra.mxu0 0.0
    %3750 = vmatprep.subr.mxu0 0.0
    %3751 = vmatpush1.msra.mxu0 0.0
    %3752 = vmatprep.subr.mxu0 0.0
    %3753 = vmatpush1.msra.mxu0 0.0
    %3754 = vmatprep.subr.mxu0 0.0
    %3755 = vmatpush1.msra.mxu0 0.0
    %3756 = vmatprep.subr.mxu0 0.0
    %3757 = vmatpush1.msra.mxu0 0.0
    %3758 = vmatprep.subr.mxu0 0.0
    %3759 = vmatpush1.msra.mxu0 0.0
    %3760 = vmatprep.subr.mxu0 0.0
    %3761 = vmatpush1.msra.mxu0 0.0
    %3762 = vmatprep.subr.mxu0 0.0
    %3763 = vmatpush1.msra.mxu0 0.0
    %3764 = vmatprep.subr.mxu0 0.0
    %3765 = vmatpush1.msra.mxu0 0.0
    %3766 = vmatprep.subr.mxu0 0.0
    %3767 = vmatpush1.msra.mxu0 0.0
    %3768 = vmatprep.subr.mxu0 0.0
    %3769 = vmatpush1.msra.mxu0 0.0
    %3770 = vmatprep.subr.mxu0 0.0
    %3771 = vmatpush1.msra.mxu0 0.0
    %3772 = vmatprep.subr.mxu0 0.0
    %3773 = vmatpush1.msra.mxu0 0.0
    %3774 = vmatprep.subr.mxu0 0.0
    %3775 = vmatpush1.msra.mxu0 0.0
    %3776 = vmatprep.subr.mxu0 0.0
    %3777 = vmatpush1.msra.mxu0 0.0
    %3778 = vmatprep.subr.mxu0 0.0
    %3779 = vmatpush1.msra.mxu0 0.0
    %3780 = vmatprep.subr.mxu0 0.0
    %3781 = vmatpush1.msra.mxu0 0.0
    %3782 = vmatprep.subr.mxu0 0.0
    %3783 = vmatpush1.msra.mxu0 0.0
    %3784 = vmatprep.subr.mxu0 0.0
    %3785 = vmatpush1.msra.mxu0 0.0
    %3786 = vmatprep.subr.mxu0 0.0
    %3787 = vmatpush1.msra.mxu0 0.0
    %3788 = vmatprep.subr.mxu0 0.0
    %3789 = vmatpush1.msra.mxu0 0.0
    %3790 = vmatprep.subr.mxu0 0.0
    %3791 = vmatpush1.msra.mxu0 0.0
    %3792 = vmatprep.subr.mxu0 0.0
    %3793 = vmatpush1.msra.mxu0 0.0
    %3794 = vmatprep.subr.mxu0 0.0
    %3795 = vmatpush1.msra.mxu0 0.0
    %3796 = vmatprep.subr.mxu0 0.0
    %3797 = vmatpush1.msra.mxu0 0.0
    %3798 = vmatprep.subr.mxu0 0.0
    %3799 = vmatpush1.msra.mxu0 0.0
    %3800 = vmatprep.mubr.f32.mxu0 0.0
    %3801 = vmatmul.mubr.f32.gmra.mrb[0].mxu0 %v3663
    %v3802 = vpop.f32.mrb[0].mxu0
    %v3803 = vadd.f32 0.0, %v3802
    %v3804 = vpop.f32.mrb[0].mxu0
    %v3805 = vadd.f32 0.0, %v3804
    %3806 = vdwg.mxu0
    %v3807 = vadd.f32 %v3640, %v3732
    %v3808 = vadd.f32 %v3641, %v3734
    %v3809 = vadd.f32 %v3642, %v3803
    %v3810 = vadd.f32 %v3643, %v3805
    %s3811 = scalar_lea.vmem %s3, 144
    %v3812 = vld [vmem:[%s3811] sm:$0xff]
    %3813 = vrot.lane.b32.xlu0 %v822, 83
    %v3814 = vpop.permute.xlu0 %3813
    %3815 = vrot.lane.b32.xlu0 %v823, 83
    %v3816 = vpop.permute.xlu0 %3815
    %3817 = vrot.lane.b32.xlu0 %v824, 83
    %v3818 = vpop.permute.xlu0 %3817
    %3819 = vrot.lane.b32.xlu0 %v825, 83
    %v3820 = vpop.permute.xlu0 %3819
    %vm3821 = vcmask 678912
    %v3822 = vsel %vm3821, %v3814, %v3816
    %v3823 = vsel %vm3821, %v3816, %v3818
    %v3824 = vsel %vm3821, %v3818, %v3820
    %v3830 = vsel %vm848, %v3812, 0
    %3832 = vmatprep.subr.mxu0 %v3823
    %3833 = vmatpush1.msra.mxu0 %v3822
    %3834 = vmatprep.subr.mxu0 0.0
    %3835 = vmatpush1.msra.mxu0 0.0
    %3836 = vmatprep.subr.mxu0 0.0
    %3837 = vmatpush1.msra.mxu0 0.0
    %3838 = vmatprep.subr.mxu0 0.0
    %3839 = vmatpush1.msra.mxu0 0.0
    %3840 = vmatprep.subr.mxu0 0.0
    %3841 = vmatpush1.msra.mxu0 0.0
    %3842 = vmatprep.subr.mxu0 0.0
    %3843 = vmatpush1.msra.mxu0 0.0
    %3844 = vmatprep.subr.mxu0 0.0
    %3845 = vmatpush1.msra.mxu0 0.0
    %3846 = vmatprep.subr.mxu0 0.0
    %3847 = vmatpush1.msra.mxu0 0.0
    %3848 = vmatprep.subr.mxu0 0.0
    %3849 = vmatpush1.msra.mxu0 0.0
    %3850 = vmatprep.subr.mxu0 0.0
    %3851 = vmatpush1.msra.mxu0 0.0
    %3852 = vmatprep.subr.mxu0 0.0
    %3853 = vmatpush1.msra.mxu0 0.0
    %3854 = vmatprep.subr.mxu0 0.0
    %3855 = vmatpush1.msra.mxu0 0.0
    %3856 = vmatprep.subr.mxu0 0.0
    %3857 = vmatpush1.msra.mxu0 0.0
    %3858 = vmatprep.subr.mxu0 0.0
    %3859 = vmatpush1.msra.mxu0 0.0
    %3860 = vmatprep.subr.mxu0 0.0
    %3861 = vmatpush1.msra.mxu0 0.0
    %3862 = vmatprep.subr.mxu0 0.0
    %3863 = vmatpush1.msra.mxu0 0.0
    %3864 = vmatprep.subr.mxu0 0.0
    %3865 = vmatpush1.msra.mxu0 0.0
    %3866 = vmatprep.subr.mxu0 0.0
    %3867 = vmatpush1.msra.mxu0 0.0
    %3868 = vmatprep.subr.mxu0 0.0
    %3869 = vmatpush1.msra.mxu0 0.0
    %3870 = vmatprep.subr.mxu0 0.0
    %3871 = vmatpush1.msra.mxu0 0.0
    %3872 = vmatprep.subr.mxu0 0.0
    %3873 = vmatpush1.msra.mxu0 0.0
    %3874 = vmatprep.subr.mxu0 0.0
    %3875 = vmatpush1.msra.mxu0 0.0
    %3876 = vmatprep.subr.mxu0 0.0
    %3877 = vmatpush1.msra.mxu0 0.0
    %3878 = vmatprep.subr.mxu0 0.0
    %3879 = vmatpush1.msra.mxu0 0.0
    %3880 = vmatprep.subr.mxu0 0.0
    %3881 = vmatpush1.msra.mxu0 0.0
    %3882 = vmatprep.subr.mxu0 0.0
    %3883 = vmatpush1.msra.mxu0 0.0
    %3884 = vmatprep.subr.mxu0 0.0
    %3885 = vmatpush1.msra.mxu0 0.0
    %3886 = vmatprep.subr.mxu0 0.0
    %3887 = vmatpush1.msra.mxu0 0.0
    %3888 = vmatprep.subr.mxu0 0.0
    %3889 = vmatpush1.msra.mxu0 0.0
    %3890 = vmatprep.subr.mxu0 0.0
    %3891 = vmatpush1.msra.mxu0 0.0
    %3892 = vmatprep.subr.mxu0 0.0
    %3893 = vmatpush1.msra.mxu0 0.0
    %3894 = vmatprep.subr.mxu0 0.0
    %3895 = vmatpush1.msra.mxu0 0.0
    %3896 = vmatprep.mubr.f32.mxu0 0.0
    %3897 = vmatmul.mubr.f32.gmra.mrb[0].mxu0 %v3830
    %v3898 = vpop.f32.mrb[0].mxu0
    %v3899 = vadd.f32 0.0, %v3898
    %v3900 = vpop.f32.mrb[0].mxu0
    %v3901 = vadd.f32 0.0, %v3900
    %3902 = vdwg.mxu0
    %3903 = vmatprep.subr.mxu0 %v3820
    %3904 = vmatpush1.msra.mxu0 %v3824
    %3905 = vmatprep.subr.mxu0 0.0
    %3906 = vmatpush1.msra.mxu0 0.0
    %3907 = vmatprep.subr.mxu0 0.0
    %3908 = vmatpush1.msra.mxu0 0.0
    %3909 = vmatprep.subr.mxu0 0.0
    %3910 = vmatpush1.msra.mxu0 0.0
    %3911 = vmatprep.subr.mxu0 0.0
    %3912 = vmatpush1.msra.mxu0 0.0
    %3913 = vmatprep.subr.mxu0 0.0
    %3914 = vmatpush1.msra.mxu0 0.0
    %3915 = vmatprep.subr.mxu0 0.0
    %3916 = vmatpush1.msra.mxu0 0.0
    %3917 = vmatprep.subr.mxu0 0.0
    %3918 = vmatpush1.msra.mxu0 0.0
    %3919 = vmatprep.subr.mxu0 0.0
    %3920 = vmatpush1.msra.mxu0 0.0
    %3921 = vmatprep.subr.mxu0 0.0
    %3922 = vmatpush1.msra.mxu0 0.0
    %3923 = vmatprep.subr.mxu0 0.0
    %3924 = vmatpush1.msra.mxu0 0.0
    %3925 = vmatprep.subr.mxu0 0.0
    %3926 = vmatpush1.msra.mxu0 0.0
    %3927 = vmatprep.subr.mxu0 0.0
    %3928 = vmatpush1.msra.mxu0 0.0
    %3929 = vmatprep.subr.mxu0 0.0
    %3930 = vmatpush1.msra.mxu0 0.0
    %3931 = vmatprep.subr.mxu0 0.0
    %3932 = vmatpush1.msra.mxu0 0.0
    %3933 = vmatprep.subr.mxu0 0.0
    %3934 = vmatpush1.msra.mxu0 0.0
    %3935 = vmatprep.subr.mxu0 0.0
    %3936 = vmatpush1.msra.mxu0 0.0
    %3937 = vmatprep.subr.mxu0 0.0
    %3938 = vmatpush1.msra.mxu0 0.0
    %3939 = vmatprep.subr.mxu0 0.0
    %3940 = vmatpush1.msra.mxu0 0.0
    %3941 = vmatprep.subr.mxu0 0.0
    %3942 = vmatpush1.msra.mxu0 0.0
    %3943 = vmatprep.subr.mxu0 0.0
    %3944 = vmatpush1.msra.mxu0 0.0
    %3945 = vmatprep.subr.mxu0 0.0
    %3946 = vmatpush1.msra.mxu0 0.0
    %3947 = vmatprep.subr.mxu0 0.0
    %3948 = vmatpush1.msra.mxu0 0.0
    %3949 = vmatprep.subr.mxu0 0.0
    %3950 = vmatpush1.msra.mxu0 0.0
    %3951 = vmatprep.subr.mxu0 0.0
    %3952 = vmatpush1.msra.mxu0 0.0
    %3953 = vmatprep.subr.mxu0 0.0
    %3954 = vmatpush1.msra.mxu0 0.0
    %3955 = vmatprep.subr.mxu0 0.0
    %3956 = vmatpush1.msra.mxu0 0.0
    %3957 = vmatprep.subr.mxu0 0.0
    %3958 = vmatpush1.msra.mxu0 0.0
    %3959 = vmatprep.subr.mxu0 0.0
    %3960 = vmatpush1.msra.mxu0 0.0
    %3961 = vmatprep.subr.mxu0 0.0
    %3962 = vmatpush1.msra.mxu0 0.0
    %3963 = vmatprep.subr.mxu0 0.0
    %3964 = vmatpush1.msra.mxu0 0.0
    %3965 = vmatprep.subr.mxu0 0.0
    %3966 = vmatpush1.msra.mxu0 0.0
    %3967 = vmatprep.mubr.f32.mxu0 0.0
    %3968 = vmatmul.mubr.f32.gmra.mrb[0].mxu0 %v3830
    %v3969 = vpop.f32.mrb[0].mxu0
    %v3970 = vadd.f32 0.0, %v3969
    %v3971 = vpop.f32.mrb[0].mxu0
    %v3972 = vadd.f32 0.0, %v3971
    %3973 = vdwg.mxu0
    %v3974 = vadd.f32 %v3807, %v3899
    %v3975 = vadd.f32 %v3808, %v3901
    %v3976 = vadd.f32 %v3809, %v3970
    %v3977 = vadd.f32 %v3810, %v3972
    %s3978 = scalar_lea.vmem %s3, 152
    %v3979 = vld [vmem:[%s3978] sm:$0xff]
    %3980 = vrot.lane.b32.xlu0 %v822, 82
    %v3981 = vpop.permute.xlu0 %3980
    %3982 = vrot.lane.b32.xlu0 %v823, 82
    %v3983 = vpop.permute.xlu0 %3982
    %3984 = vrot.lane.b32.xlu0 %v824, 82
    %v3985 = vpop.permute.xlu0 %3984
    %3986 = vrot.lane.b32.xlu0 %v825, 82
    %v3987 = vpop.permute.xlu0 %3986
    %vm3988 = vcmask 670720
    %v3989 = vsel %vm3988, %v3981, %v3983
    %v3990 = vsel %vm3988, %v3983, %v3985
    %v3991 = vsel %vm3988, %v3985, %v3987
    %v3997 = vsel %vm848, %v3979, 0
    %3999 = vmatprep.subr.mxu0 %v3990
    %4000 = vmatpush1.msra.mxu0 %v3989
    %4001 = vmatprep.subr.mxu0 0.0
    %4002 = vmatpush1.msra.mxu0 0.0
    %4003 = vmatprep.subr.mxu0 0.0
    %4004 = vmatpush1.msra.mxu0 0.0
    %4005 = vmatprep.subr.mxu0 0.0
    %4006 = vmatpush1.msra.mxu0 0.0
    %4007 = vmatprep.subr.mxu0 0.0
    %4008 = vmatpush1.msra.mxu0 0.0
    %4009 = vmatprep.subr.mxu0 0.0
    %4010 = vmatpush1.msra.mxu0 0.0
    %4011 = vmatprep.subr.mxu0 0.0
    %4012 = vmatpush1.msra.mxu0 0.0
    %4013 = vmatprep.subr.mxu0 0.0
    %4014 = vmatpush1.msra.mxu0 0.0
    %4015 = vmatprep.subr.mxu0 0.0
    %4016 = vmatpush1.msra.mxu0 0.0
    %4017 = vmatprep.subr.mxu0 0.0
    %4018 = vmatpush1.msra.mxu0 0.0
    %4019 = vmatprep.subr.mxu0 0.0
    %4020 = vmatpush1.msra.mxu0 0.0
    %4021 = vmatprep.subr.mxu0 0.0
    %4022 = vmatpush1.msra.mxu0 0.0
    %4023 = vmatprep.subr.mxu0 0.0
    %4024 = vmatpush1.msra.mxu0 0.0
    %4025 = vmatprep.subr.mxu0 0.0
    %4026 = vmatpush1.msra.mxu0 0.0
    %4027 = vmatprep.subr.mxu0 0.0
    %4028 = vmatpush1.msra.mxu0 0.0
    %4029 = vmatprep.subr.mxu0 0.0
    %4030 = vmatpush1.msra.mxu0 0.0
    %4031 = vmatprep.subr.mxu0 0.0
    %4032 = vmatpush1.msra.mxu0 0.0
    %4033 = vmatprep.subr.mxu0 0.0
    %4034 = vmatpush1.msra.mxu0 0.0
    %4035 = vmatprep.subr.mxu0 0.0
    %4036 = vmatpush1.msra.mxu0 0.0
    %4037 = vmatprep.subr.mxu0 0.0
    %4038 = vmatpush1.msra.mxu0 0.0
    %4039 = vmatprep.subr.mxu0 0.0
    %4040 = vmatpush1.msra.mxu0 0.0
    %4041 = vmatprep.subr.mxu0 0.0
    %4042 = vmatpush1.msra.mxu0 0.0
    %4043 = vmatprep.subr.mxu0 0.0
    %4044 = vmatpush1.msra.mxu0 0.0
    %4045 = vmatprep.subr.mxu0 0.0
    %4046 = vmatpush1.msra.mxu0 0.0
    %4047 = vmatprep.subr.mxu0 0.0
    %4048 = vmatpush1.msra.mxu0 0.0
    %4049 = vmatprep.subr.mxu0 0.0
    %4050 = vmatpush1.msra.mxu0 0.0
    %4051 = vmatprep.subr.mxu0 0.0
    %4052 = vmatpush1.msra.mxu0 0.0
    %4053 = vmatprep.subr.mxu0 0.0
    %4054 = vmatpush1.msra.mxu0 0.0
    %4055 = vmatprep.subr.mxu0 0.0
    %4056 = vmatpush1.msra.mxu0 0.0
    %4057 = vmatprep.subr.mxu0 0.0
    %4058 = vmatpush1.msra.mxu0 0.0
    %4059 = vmatprep.subr.mxu0 0.0
    %4060 = vmatpush1.msra.mxu0 0.0
    %4061 = vmatprep.subr.mxu0 0.0
    %4062 = vmatpush1.msra.mxu0 0.0
    %4063 = vmatprep.mubr.f32.mxu0 0.0
    %4064 = vmatmul.mubr.f32.gmra.mrb[0].mxu0 %v3997
    %v4065 = vpop.f32.mrb[0].mxu0
    %v4066 = vadd.f32 0.0, %v4065
    %v4067 = vpop.f32.mrb[0].mxu0
    %v4068 = vadd.f32 0.0, %v4067
    %4069 = vdwg.mxu0
    %4070 = vmatprep.subr.mxu0 %v3987
    %4071 = vmatpush1.msra.mxu0 %v3991
    %4072 = vmatprep.subr.mxu0 0.0
    %4073 = vmatpush1.msra.mxu0 0.0
    %4074 = vmatprep.subr.mxu0 0.0
    %4075 = vmatpush1.msra.mxu0 0.0
    %4076 = vmatprep.subr.mxu0 0.0
    %4077 = vmatpush1.msra.mxu0 0.0
    %4078 = vmatprep.subr.mxu0 0.0
    %4079 = vmatpush1.msra.mxu0 0.0
    %4080 = vmatprep.subr.mxu0 0.0
    %4081 = vmatpush1.msra.mxu0 0.0
    %4082 = vmatprep.subr.mxu0 0.0
    %4083 = vmatpush1.msra.mxu0 0.0
    %4084 = vmatprep.subr.mxu0 0.0
    %4085 = vmatpush1.msra.mxu0 0.0
    %4086 = vmatprep.subr.mxu0 0.0
    %4087 = vmatpush1.msra.mxu0 0.0
    %4088 = vmatprep.subr.mxu0 0.0
    %4089 = vmatpush1.msra.mxu0 0.0
    %4090 = vmatprep.subr.mxu0 0.0
    %4091 = vmatpush1.msra.mxu0 0.0
    %4092 = vmatprep.subr.mxu0 0.0
    %4093 = vmatpush1.msra.mxu0 0.0
    %4094 = vmatprep.subr.mxu0 0.0
    %4095 = vmatpush1.msra.mxu0 0.0
    %4096 = vmatprep.subr.mxu0 0.0
    %4097 = vmatpush1.msra.mxu0 0.0
    %4098 = vmatprep.subr.mxu0 0.0
    %4099 = vmatpush1.msra.mxu0 0.0
    %4100 = vmatprep.subr.mxu0 0.0
    %4101 = vmatpush1.msra.mxu0 0.0
    %4102 = vmatprep.subr.mxu0 0.0
    %4103 = vmatpush1.msra.mxu0 0.0
    %4104 = vmatprep.subr.mxu0 0.0
    %4105 = vmatpush1.msra.mxu0 0.0
    %4106 = vmatprep.subr.mxu0 0.0
    %4107 = vmatpush1.msra.mxu0 0.0
    %4108 = vmatprep.subr.mxu0 0.0
    %4109 = vmatpush1.msra.mxu0 0.0
    %4110 = vmatprep.subr.mxu0 0.0
    %4111 = vmatpush1.msra.mxu0 0.0
    %4112 = vmatprep.subr.mxu0 0.0
    %4113 = vmatpush1.msra.mxu0 0.0
    %4114 = vmatprep.subr.mxu0 0.0
    %4115 = vmatpush1.msra.mxu0 0.0
    %4116 = vmatprep.subr.mxu0 0.0
    %4117 = vmatpush1.msra.mxu0 0.0
    %4118 = vmatprep.subr.mxu0 0.0
    %4119 = vmatpush1.msra.mxu0 0.0
    %4120 = vmatprep.subr.mxu0 0.0
    %4121 = vmatpush1.msra.mxu0 0.0
    %4122 = vmatprep.subr.mxu0 0.0
    %4123 = vmatpush1.msra.mxu0 0.0
    %4124 = vmatprep.subr.mxu0 0.0
    %4125 = vmatpush1.msra.mxu0 0.0
    %4126 = vmatprep.subr.mxu0 0.0
    %4127 = vmatpush1.msra.mxu0 0.0
    %4128 = vmatprep.subr.mxu0 0.0
    %4129 = vmatpush1.msra.mxu0 0.0
    %4130 = vmatprep.subr.mxu0 0.0
    %4131 = vmatpush1.msra.mxu0 0.0
    %4132 = vmatprep.subr.mxu0 0.0
    %4133 = vmatpush1.msra.mxu0 0.0
    %4134 = vmatprep.mubr.f32.mxu0 0.0
    %4135 = vmatmul.mubr.f32.gmra.mrb[0].mxu0 %v3997
    %v4136 = vpop.f32.mrb[0].mxu0
    %v4137 = vadd.f32 0.0, %v4136
    %v4138 = vpop.f32.mrb[0].mxu0
    %v4139 = vadd.f32 0.0, %v4138
    %4140 = vdwg.mxu0
    %v4141 = vadd.f32 %v3974, %v4066
    %v4142 = vadd.f32 %v3975, %v4068
    %v4143 = vadd.f32 %v3976, %v4137
    %v4144 = vadd.f32 %v3977, %v4139
    %s4145 = scalar_lea.vmem %s3, 160
    %v4146 = vld [vmem:[%s4145] sm:$0xff]
    %4147 = vrot.lane.b32.xlu0 %v822, 72
    %v4148 = vpop.permute.xlu0 %4147
    %4149 = vrot.lane.b32.xlu0 %v823, 72
    %v4150 = vpop.permute.xlu0 %4149
    %4151 = vrot.lane.b32.xlu0 %v824, 72
    %v4152 = vpop.permute.xlu0 %4151
    %4153 = vrot.lane.b32.xlu0 %v825, 72
    %v4154 = vpop.permute.xlu0 %4153
    %vm4155 = vcmask 588800
    %v4156 = vsel %vm4155, %v4148, %v4150
    %v4157 = vsel %vm4155, %v4150, %v4152
    %v4158 = vsel %vm4155, %v4152, %v4154
    %v4164 = vsel %vm848, %v4146, 0
    %4166 = vmatprep.subr.mxu0 %v4157
    %4167 = vmatpush1.msra.mxu0 %v4156
    %4168 = vmatprep.subr.mxu0 0.0
    %4169 = vmatpush1.msra.mxu0 0.0
    %4170 = vmatprep.subr.mxu0 0.0
    %4171 = vmatpush1.msra.mxu0 0.0
    %4172 = vmatprep.subr.mxu0 0.0
    %4173 = vmatpush1.msra.mxu0 0.0
    %4174 = vmatprep.subr.mxu0 0.0
    %4175 = vmatpush1.msra.mxu0 0.0
    %4176 = vmatprep.subr.mxu0 0.0
    %4177 = vmatpush1.msra.mxu0 0.0
    %4178 = vmatprep.subr.mxu0 0.0
    %4179 = vmatpush1.msra.mxu0 0.0
    %4180 = vmatprep.subr.mxu0 0.0
    %4181 = vmatpush1.msra.mxu0 0.0
    %4182 = vmatprep.subr.mxu0 0.0
    %4183 = vmatpush1.msra.mxu0 0.0
    %4184 = vmatprep.subr.mxu0 0.0
    %4185 = vmatpush1.msra.mxu0 0.0
    %4186 = vmatprep.subr.mxu0 0.0
    %4187 = vmatpush1.msra.mxu0 0.0
    %4188 = vmatprep.subr.mxu0 0.0
    %4189 = vmatpush1.msra.mxu0 0.0
    %4190 = vmatprep.subr.mxu0 0.0
    %4191 = vmatpush1.msra.mxu0 0.0
    %4192 = vmatprep.subr.mxu0 0.0
    %4193 = vmatpush1.msra.mxu0 0.0
    %4194 = vmatprep.subr.mxu0 0.0
    %4195 = vmatpush1.msra.mxu0 0.0
    %4196 = vmatprep.subr.mxu0 0.0
    %4197 = vmatpush1.msra.mxu0 0.0
    %4198 = vmatprep.subr.mxu0 0.0
    %4199 = vmatpush1.msra.mxu0 0.0
    %4200 = vmatprep.subr.mxu0 0.0
    %4201 = vmatpush1.msra.mxu0 0.0
    %4202 = vmatprep.subr.mxu0 0.0
    %4203 = vmatpush1.msra.mxu0 0.0
    %4204 = vmatprep.subr.mxu0 0.0
    %4205 = vmatpush1.msra.mxu0 0.0
    %4206 = vmatprep.subr.mxu0 0.0
    %4207 = vmatpush1.msra.mxu0 0.0
    %4208 = vmatprep.subr.mxu0 0.0
    %4209 = vmatpush1.msra.mxu0 0.0
    %4210 = vmatprep.subr.mxu0 0.0
    %4211 = vmatpush1.msra.mxu0 0.0
    %4212 = vmatprep.subr.mxu0 0.0
    %4213 = vmatpush1.msra.mxu0 0.0
    %4214 = vmatprep.subr.mxu0 0.0
    %4215 = vmatpush1.msra.mxu0 0.0
    %4216 = vmatprep.subr.mxu0 0.0
    %4217 = vmatpush1.msra.mxu0 0.0
    %4218 = vmatprep.subr.mxu0 0.0
    %4219 = vmatpush1.msra.mxu0 0.0
    %4220 = vmatprep.subr.mxu0 0.0
    %4221 = vmatpush1.msra.mxu0 0.0
    %4222 = vmatprep.subr.mxu0 0.0
    %4223 = vmatpush1.msra.mxu0 0.0
    %4224 = vmatprep.subr.mxu0 0.0
    %4225 = vmatpush1.msra.mxu0 0.0
    %4226 = vmatprep.subr.mxu0 0.0
    %4227 = vmatpush1.msra.mxu0 0.0
    %4228 = vmatprep.subr.mxu0 0.0
    %4229 = vmatpush1.msra.mxu0 0.0
    %4230 = vmatprep.mubr.f32.mxu0 0.0
    %4231 = vmatmul.mubr.f32.gmra.mrb[0].mxu0 %v4164
    %v4232 = vpop.f32.mrb[0].mxu0
    %v4233 = vadd.f32 0.0, %v4232
    %v4234 = vpop.f32.mrb[0].mxu0
    %v4235 = vadd.f32 0.0, %v4234
    %4236 = vdwg.mxu0
    %4237 = vmatprep.subr.mxu0 %v4154
    %4238 = vmatpush1.msra.mxu0 %v4158
    %4239 = vmatprep.subr.mxu0 0.0
    %4240 = vmatpush1.msra.mxu0 0.0
    %4241 = vmatprep.subr.mxu0 0.0
    %4242 = vmatpush1.msra.mxu0 0.0
    %4243 = vmatprep.subr.mxu0 0.0
    %4244 = vmatpush1.msra.mxu0 0.0
    %4245 = vmatprep.subr.mxu0 0.0
    %4246 = vmatpush1.msra.mxu0 0.0
    %4247 = vmatprep.subr.mxu0 0.0
    %4248 = vmatpush1.msra.mxu0 0.0
    %4249 = vmatprep.subr.mxu0 0.0
    %4250 = vmatpush1.msra.mxu0 0.0
    %4251 = vmatprep.subr.mxu0 0.0
    %4252 = vmatpush1.msra.mxu0 0.0
    %4253 = vmatprep.subr.mxu0 0.0
    %4254 = vmatpush1.msra.mxu0 0.0
    %4255 = vmatprep.subr.mxu0 0.0
    %4256 = vmatpush1.msra.mxu0 0.0
    %4257 = vmatprep.subr.mxu0 0.0
    %4258 = vmatpush1.msra.mxu0 0.0
    %4259 = vmatprep.subr.mxu0 0.0
    %4260 = vmatpush1.msra.mxu0 0.0
    %4261 = vmatprep.subr.mxu0 0.0
    %4262 = vmatpush1.msra.mxu0 0.0
    %4263 = vmatprep.subr.mxu0 0.0
    %4264 = vmatpush1.msra.mxu0 0.0
    %4265 = vmatprep.subr.mxu0 0.0
    %4266 = vmatpush1.msra.mxu0 0.0
    %4267 = vmatprep.subr.mxu0 0.0
    %4268 = vmatpush1.msra.mxu0 0.0
    %4269 = vmatprep.subr.mxu0 0.0
    %4270 = vmatpush1.msra.mxu0 0.0
    %4271 = vmatprep.subr.mxu0 0.0
    %4272 = vmatpush1.msra.mxu0 0.0
    %4273 = vmatprep.subr.mxu0 0.0
    %4274 = vmatpush1.msra.mxu0 0.0
    %4275 = vmatprep.subr.mxu0 0.0
    %4276 = vmatpush1.msra.mxu0 0.0
    %4277 = vmatprep.subr.mxu0 0.0
    %4278 = vmatpush1.msra.mxu0 0.0
    %4279 = vmatprep.subr.mxu0 0.0
    %4280 = vmatpush1.msra.mxu0 0.0
    %4281 = vmatprep.subr.mxu0 0.0
    %4282 = vmatpush1.msra.mxu0 0.0
    %4283 = vmatprep.subr.mxu0 0.0
    %4284 = vmatpush1.msra.mxu0 0.0
    %4285 = vmatprep.subr.mxu0 0.0
    %4286 = vmatpush1.msra.mxu0 0.0
    %4287 = vmatprep.subr.mxu0 0.0
    %4288 = vmatpush1.msra.mxu0 0.0
    %4289 = vmatprep.subr.mxu0 0.0
    %4290 = vmatpush1.msra.mxu0 0.0
    %4291 = vmatprep.subr.mxu0 0.0
    %4292 = vmatpush1.msra.mxu0 0.0
    %4293 = vmatprep.subr.mxu0 0.0
    %4294 = vmatpush1.msra.mxu0 0.0
    %4295 = vmatprep.subr.mxu0 0.0
    %4296 = vmatpush1.msra.mxu0 0.0
    %4297 = vmatprep.subr.mxu0 0.0
    %4298 = vmatpush1.msra.mxu0 0.0
    %4299 = vmatprep.subr.mxu0 0.0
    %4300 = vmatpush1.msra.mxu0 0.0
    %4301 = vmatprep.mubr.f32.mxu0 0.0
    %4302 = vmatmul.mubr.f32.gmra.mrb[0].mxu0 %v4164
    %v4303 = vpop.f32.mrb[0].mxu0
    %v4304 = vadd.f32 0.0, %v4303
    %v4305 = vpop.f32.mrb[0].mxu0
    %v4306 = vadd.f32 0.0, %v4305
    %4307 = vdwg.mxu0
    %v4308 = vadd.f32 %v4141, %v4233
    %v4309 = vadd.f32 %v4142, %v4235
    %v4310 = vadd.f32 %v4143, %v4304
    %v4311 = vadd.f32 %v4144, %v4306
    %s4312 = scalar_lea.vmem %s3, 168
    %v4313 = vld [vmem:[%s4312] sm:$0xff]
    %4314 = vrot.lane.b32.xlu0 %v822, 71
    %v4315 = vpop.permute.xlu0 %4314
    %4316 = vrot.lane.b32.xlu0 %v823, 71
    %v4317 = vpop.permute.xlu0 %4316
    %4318 = vrot.lane.b32.xlu0 %v824, 71
    %v4319 = vpop.permute.xlu0 %4318
    %4320 = vrot.lane.b32.xlu0 %v825, 71
    %v4321 = vpop.permute.xlu0 %4320
    %vm4322 = vcmask 580608
    %v4323 = vsel %vm4322, %v4315, %v4317
    %v4324 = vsel %vm4322, %v4317, %v4319
    %v4325 = vsel %vm4322, %v4319, %v4321
    %v4331 = vsel %vm848, %v4313, 0
    %4333 = vmatprep.subr.mxu0 %v4324
    %4334 = vmatpush1.msra.mxu0 %v4323
    %4335 = vmatprep.subr.mxu0 0.0
    %4336 = vmatpush1.msra.mxu0 0.0
    %4337 = vmatprep.subr.mxu0 0.0
    %4338 = vmatpush1.msra.mxu0 0.0
    %4339 = vmatprep.subr.mxu0 0.0
    %4340 = vmatpush1.msra.mxu0 0.0
    %4341 = vmatprep.subr.mxu0 0.0
    %4342 = vmatpush1.msra.mxu0 0.0
    %4343 = vmatprep.subr.mxu0 0.0
    %4344 = vmatpush1.msra.mxu0 0.0
    %4345 = vmatprep.subr.mxu0 0.0
    %4346 = vmatpush1.msra.mxu0 0.0
    %4347 = vmatprep.subr.mxu0 0.0
    %4348 = vmatpush1.msra.mxu0 0.0
    %4349 = vmatprep.subr.mxu0 0.0
    %4350 = vmatpush1.msra.mxu0 0.0
    %4351 = vmatprep.subr.mxu0 0.0
    %4352 = vmatpush1.msra.mxu0 0.0
    %4353 = vmatprep.subr.mxu0 0.0
    %4354 = vmatpush1.msra.mxu0 0.0
    %4355 = vmatprep.subr.mxu0 0.0
    %4356 = vmatpush1.msra.mxu0 0.0
    %4357 = vmatprep.subr.mxu0 0.0
    %4358 = vmatpush1.msra.mxu0 0.0
    %4359 = vmatprep.subr.mxu0 0.0
    %4360 = vmatpush1.msra.mxu0 0.0
    %4361 = vmatprep.subr.mxu0 0.0
    %4362 = vmatpush1.msra.mxu0 0.0
    %4363 = vmatprep.subr.mxu0 0.0
    %4364 = vmatpush1.msra.mxu0 0.0
    %4365 = vmatprep.subr.mxu0 0.0
    %4366 = vmatpush1.msra.mxu0 0.0
    %4367 = vmatprep.subr.mxu0 0.0
    %4368 = vmatpush1.msra.mxu0 0.0
    %4369 = vmatprep.subr.mxu0 0.0
    %4370 = vmatpush1.msra.mxu0 0.0
    %4371 = vmatprep.subr.mxu0 0.0
    %4372 = vmatpush1.msra.mxu0 0.0
    %4373 = vmatprep.subr.mxu0 0.0
    %4374 = vmatpush1.msra.mxu0 0.0
    %4375 = vmatprep.subr.mxu0 0.0
    %4376 = vmatpush1.msra.mxu0 0.0
    %4377 = vmatprep.subr.mxu0 0.0
    %4378 = vmatpush1.msra.mxu0 0.0
    %4379 = vmatprep.subr.mxu0 0.0
    %4380 = vmatpush1.msra.mxu0 0.0
    %4381 = vmatprep.subr.mxu0 0.0
    %4382 = vmatpush1.msra.mxu0 0.0
    %4383 = vmatprep.subr.mxu0 0.0
    %4384 = vmatpush1.msra.mxu0 0.0
    %4385 = vmatprep.subr.mxu0 0.0
    %4386 = vmatpush1.msra.mxu0 0.0
    %4387 = vmatprep.subr.mxu0 0.0
    %4388 = vmatpush1.msra.mxu0 0.0
    %4389 = vmatprep.subr.mxu0 0.0
    %4390 = vmatpush1.msra.mxu0 0.0
    %4391 = vmatprep.subr.mxu0 0.0
    %4392 = vmatpush1.msra.mxu0 0.0
    %4393 = vmatprep.subr.mxu0 0.0
    %4394 = vmatpush1.msra.mxu0 0.0
    %4395 = vmatprep.subr.mxu0 0.0
    %4396 = vmatpush1.msra.mxu0 0.0
    %4397 = vmatprep.mubr.f32.mxu0 0.0
    %4398 = vmatmul.mubr.f32.gmra.mrb[0].mxu0 %v4331
    %v4399 = vpop.f32.mrb[0].mxu0
    %v4400 = vadd.f32 0.0, %v4399
    %v4401 = vpop.f32.mrb[0].mxu0
    %v4402 = vadd.f32 0.0, %v4401
    %4403 = vdwg.mxu0
    %4404 = vmatprep.subr.mxu0 %v4321
    %4405 = vmatpush1.msra.mxu0 %v4325
    %4406 = vmatprep.subr.mxu0 0.0
    %4407 = vmatpush1.msra.mxu0 0.0
    %4408 = vmatprep.subr.mxu0 0.0
    %4409 = vmatpush1.msra.mxu0 0.0
    %4410 = vmatprep.subr.mxu0 0.0
    %4411 = vmatpush1.msra.mxu0 0.0
    %4412 = vmatprep.subr.mxu0 0.0
    %4413 = vmatpush1.msra.mxu0 0.0
    %4414 = vmatprep.subr.mxu0 0.0
    %4415 = vmatpush1.msra.mxu0 0.0
    %4416 = vmatprep.subr.mxu0 0.0
    %4417 = vmatpush1.msra.mxu0 0.0
    %4418 = vmatprep.subr.mxu0 0.0
    %4419 = vmatpush1.msra.mxu0 0.0
    %4420 = vmatprep.subr.mxu0 0.0
    %4421 = vmatpush1.msra.mxu0 0.0
    %4422 = vmatprep.subr.mxu0 0.0
    %4423 = vmatpush1.msra.mxu0 0.0
    %4424 = vmatprep.subr.mxu0 0.0
    %4425 = vmatpush1.msra.mxu0 0.0
    %4426 = vmatprep.subr.mxu0 0.0
    %4427 = vmatpush1.msra.mxu0 0.0
    %4428 = vmatprep.subr.mxu0 0.0
    %4429 = vmatpush1.msra.mxu0 0.0
    %4430 = vmatprep.subr.mxu0 0.0
    %4431 = vmatpush1.msra.mxu0 0.0
    %4432 = vmatprep.subr.mxu0 0.0
    %4433 = vmatpush1.msra.mxu0 0.0
    %4434 = vmatprep.subr.mxu0 0.0
    %4435 = vmatpush1.msra.mxu0 0.0
    %4436 = vmatprep.subr.mxu0 0.0
    %4437 = vmatpush1.msra.mxu0 0.0
    %4438 = vmatprep.subr.mxu0 0.0
    %4439 = vmatpush1.msra.mxu0 0.0
    %4440 = vmatprep.subr.mxu0 0.0
    %4441 = vmatpush1.msra.mxu0 0.0
    %4442 = vmatprep.subr.mxu0 0.0
    %4443 = vmatpush1.msra.mxu0 0.0
    %4444 = vmatprep.subr.mxu0 0.0
    %4445 = vmatpush1.msra.mxu0 0.0
    %4446 = vmatprep.subr.mxu0 0.0
    %4447 = vmatpush1.msra.mxu0 0.0
    %4448 = vmatprep.subr.mxu0 0.0
    %4449 = vmatpush1.msra.mxu0 0.0
    %4450 = vmatprep.subr.mxu0 0.0
    %4451 = vmatpush1.msra.mxu0 0.0
    %4452 = vmatprep.subr.mxu0 0.0
    %4453 = vmatpush1.msra.mxu0 0.0
    %4454 = vmatprep.subr.mxu0 0.0
    %4455 = vmatpush1.msra.mxu0 0.0
    %4456 = vmatprep.subr.mxu0 0.0
    %4457 = vmatpush1.msra.mxu0 0.0
    %4458 = vmatprep.subr.mxu0 0.0
    %4459 = vmatpush1.msra.mxu0 0.0
    %4460 = vmatprep.subr.mxu0 0.0
    %4461 = vmatpush1.msra.mxu0 0.0
    %4462 = vmatprep.subr.mxu0 0.0
    %4463 = vmatpush1.msra.mxu0 0.0
    %4464 = vmatprep.subr.mxu0 0.0
    %4465 = vmatpush1.msra.mxu0 0.0
    %4466 = vmatprep.subr.mxu0 0.0
    %4467 = vmatpush1.msra.mxu0 0.0
    %4468 = vmatprep.mubr.f32.mxu0 0.0
    %4469 = vmatmul.mubr.f32.gmra.mrb[0].mxu0 %v4331
    %v4470 = vpop.f32.mrb[0].mxu0
    %v4471 = vadd.f32 0.0, %v4470
    %v4472 = vpop.f32.mrb[0].mxu0
    %v4473 = vadd.f32 0.0, %v4472
    %4474 = vdwg.mxu0
    %v4475 = vadd.f32 %v4308, %v4400
    %v4476 = vadd.f32 %v4309, %v4402
    %v4477 = vadd.f32 %v4310, %v4471
    %v4478 = vadd.f32 %v4311, %v4473
    %s4479 = scalar_lea.vmem %s3, 176
    %v4480 = vld [vmem:[%s4479] sm:$0xff]
    %4481 = vrot.lane.b32.xlu0 %v822, 70
    %v4482 = vpop.permute.xlu0 %4481
    %4483 = vrot.lane.b32.xlu0 %v823, 70
    %v4484 = vpop.permute.xlu0 %4483
    %4485 = vrot.lane.b32.xlu0 %v824, 70
    %v4486 = vpop.permute.xlu0 %4485
    %4487 = vrot.lane.b32.xlu0 %v825, 70
    %v4488 = vpop.permute.xlu0 %4487
    %vm4489 = vcmask 572416
    %v4490 = vsel %vm4489, %v4482, %v4484
    %v4491 = vsel %vm4489, %v4484, %v4486
    %v4492 = vsel %vm4489, %v4486, %v4488
    %v4498 = vsel %vm848, %v4480, 0
    %4500 = vmatprep.subr.mxu0 %v4491
    %4501 = vmatpush1.msra.mxu0 %v4490
    %4502 = vmatprep.subr.mxu0 0.0
    %4503 = vmatpush1.msra.mxu0 0.0
    %4504 = vmatprep.subr.mxu0 0.0
    %4505 = vmatpush1.msra.mxu0 0.0
    %4506 = vmatprep.subr.mxu0 0.0
    %4507 = vmatpush1.msra.mxu0 0.0
    %4508 = vmatprep.subr.mxu0 0.0
    %4509 = vmatpush1.msra.mxu0 0.0
    %4510 = vmatprep.subr.mxu0 0.0
    %4511 = vmatpush1.msra.mxu0 0.0
    %4512 = vmatprep.subr.mxu0 0.0
    %4513 = vmatpush1.msra.mxu0 0.0
    %4514 = vmatprep.subr.mxu0 0.0
    %4515 = vmatpush1.msra.mxu0 0.0
    %4516 = vmatprep.subr.mxu0 0.0
    %4517 = vmatpush1.msra.mxu0 0.0
    %4518 = vmatprep.subr.mxu0 0.0
    %4519 = vmatpush1.msra.mxu0 0.0
    %4520 = vmatprep.subr.mxu0 0.0
    %4521 = vmatpush1.msra.mxu0 0.0
    %4522 = vmatprep.subr.mxu0 0.0
    %4523 = vmatpush1.msra.mxu0 0.0
    %4524 = vmatprep.subr.mxu0 0.0
    %4525 = vmatpush1.msra.mxu0 0.0
    %4526 = vmatprep.subr.mxu0 0.0
    %4527 = vmatpush1.msra.mxu0 0.0
    %4528 = vmatprep.subr.mxu0 0.0
    %4529 = vmatpush1.msra.mxu0 0.0
    %4530 = vmatprep.subr.mxu0 0.0
    %4531 = vmatpush1.msra.mxu0 0.0
    %4532 = vmatprep.subr.mxu0 0.0
    %4533 = vmatpush1.msra.mxu0 0.0
    %4534 = vmatprep.subr.mxu0 0.0
    %4535 = vmatpush1.msra.mxu0 0.0
    %4536 = vmatprep.subr.mxu0 0.0
    %4537 = vmatpush1.msra.mxu0 0.0
    %4538 = vmatprep.subr.mxu0 0.0
    %4539 = vmatpush1.msra.mxu0 0.0
    %4540 = vmatprep.subr.mxu0 0.0
    %4541 = vmatpush1.msra.mxu0 0.0
    %4542 = vmatprep.subr.mxu0 0.0
    %4543 = vmatpush1.msra.mxu0 0.0
    %4544 = vmatprep.subr.mxu0 0.0
    %4545 = vmatpush1.msra.mxu0 0.0
    %4546 = vmatprep.subr.mxu0 0.0
    %4547 = vmatpush1.msra.mxu0 0.0
    %4548 = vmatprep.subr.mxu0 0.0
    %4549 = vmatpush1.msra.mxu0 0.0
    %4550 = vmatprep.subr.mxu0 0.0
    %4551 = vmatpush1.msra.mxu0 0.0
    %4552 = vmatprep.subr.mxu0 0.0
    %4553 = vmatpush1.msra.mxu0 0.0
    %4554 = vmatprep.subr.mxu0 0.0
    %4555 = vmatpush1.msra.mxu0 0.0
    %4556 = vmatprep.subr.mxu0 0.0
    %4557 = vmatpush1.msra.mxu0 0.0
    %4558 = vmatprep.subr.mxu0 0.0
    %4559 = vmatpush1.msra.mxu0 0.0
    %4560 = vmatprep.subr.mxu0 0.0
    %4561 = vmatpush1.msra.mxu0 0.0
    %4562 = vmatprep.subr.mxu0 0.0
    %4563 = vmatpush1.msra.mxu0 0.0
    %4564 = vmatprep.mubr.f32.mxu0 0.0
    %4565 = vmatmul.mubr.f32.gmra.mrb[0].mxu0 %v4498
    %v4566 = vpop.f32.mrb[0].mxu0
    %v4567 = vadd.f32 0.0, %v4566
    %v4568 = vpop.f32.mrb[0].mxu0
    %v4569 = vadd.f32 0.0, %v4568
    %4570 = vdwg.mxu0
    %4571 = vmatprep.subr.mxu0 %v4488
    %4572 = vmatpush1.msra.mxu0 %v4492
    %4573 = vmatprep.subr.mxu0 0.0
    %4574 = vmatpush1.msra.mxu0 0.0
    %4575 = vmatprep.subr.mxu0 0.0
    %4576 = vmatpush1.msra.mxu0 0.0
    %4577 = vmatprep.subr.mxu0 0.0
    %4578 = vmatpush1.msra.mxu0 0.0
    %4579 = vmatprep.subr.mxu0 0.0
    %4580 = vmatpush1.msra.mxu0 0.0
    %4581 = vmatprep.subr.mxu0 0.0
    %4582 = vmatpush1.msra.mxu0 0.0
    %4583 = vmatprep.subr.mxu0 0.0
    %4584 = vmatpush1.msra.mxu0 0.0
    %4585 = vmatprep.subr.mxu0 0.0
    %4586 = vmatpush1.msra.mxu0 0.0
    %4587 = vmatprep.subr.mxu0 0.0
    %4588 = vmatpush1.msra.mxu0 0.0
    %4589 = vmatprep.subr.mxu0 0.0
    %4590 = vmatpush1.msra.mxu0 0.0
    %4591 = vmatprep.subr.mxu0 0.0
    %4592 = vmatpush1.msra.mxu0 0.0
    %4593 = vmatprep.subr.mxu0 0.0
    %4594 = vmatpush1.msra.mxu0 0.0
    %4595 = vmatprep.subr.mxu0 0.0
    %4596 = vmatpush1.msra.mxu0 0.0
    %4597 = vmatprep.subr.mxu0 0.0
    %4598 = vmatpush1.msra.mxu0 0.0
    %4599 = vmatprep.subr.mxu0 0.0
    %4600 = vmatpush1.msra.mxu0 0.0
    %4601 = vmatprep.subr.mxu0 0.0
    %4602 = vmatpush1.msra.mxu0 0.0
    %4603 = vmatprep.subr.mxu0 0.0
    %4604 = vmatpush1.msra.mxu0 0.0
    %4605 = vmatprep.subr.mxu0 0.0
    %4606 = vmatpush1.msra.mxu0 0.0
    %4607 = vmatprep.subr.mxu0 0.0
    %4608 = vmatpush1.msra.mxu0 0.0
    %4609 = vmatprep.subr.mxu0 0.0
    %4610 = vmatpush1.msra.mxu0 0.0
    %4611 = vmatprep.subr.mxu0 0.0
    %4612 = vmatpush1.msra.mxu0 0.0
    %4613 = vmatprep.subr.mxu0 0.0
    %4614 = vmatpush1.msra.mxu0 0.0
    %4615 = vmatprep.subr.mxu0 0.0
    %4616 = vmatpush1.msra.mxu0 0.0
    %4617 = vmatprep.subr.mxu0 0.0
    %4618 = vmatpush1.msra.mxu0 0.0
    %4619 = vmatprep.subr.mxu0 0.0
    %4620 = vmatpush1.msra.mxu0 0.0
    %4621 = vmatprep.subr.mxu0 0.0
    %4622 = vmatpush1.msra.mxu0 0.0
    %4623 = vmatprep.subr.mxu0 0.0
    %4624 = vmatpush1.msra.mxu0 0.0
    %4625 = vmatprep.subr.mxu0 0.0
    %4626 = vmatpush1.msra.mxu0 0.0
    %4627 = vmatprep.subr.mxu0 0.0
    %4628 = vmatpush1.msra.mxu0 0.0
    %4629 = vmatprep.subr.mxu0 0.0
    %4630 = vmatpush1.msra.mxu0 0.0
    %4631 = vmatprep.subr.mxu0 0.0
    %4632 = vmatpush1.msra.mxu0 0.0
    %4633 = vmatprep.subr.mxu0 0.0
    %4634 = vmatpush1.msra.mxu0 0.0
    %4635 = vmatprep.mubr.f32.mxu0 0.0
    %4636 = vmatmul.mubr.f32.gmra.mrb[0].mxu0 %v4498
    %v4637 = vpop.f32.mrb[0].mxu0
    %v4638 = vadd.f32 0.0, %v4637
    %v4639 = vpop.f32.mrb[0].mxu0
    %v4640 = vadd.f32 0.0, %v4639
    %4641 = vdwg.mxu0
    %v4642 = vadd.f32 %v4475, %v4567
    %v4643 = vadd.f32 %v4476, %v4569
    %v4644 = vadd.f32 %v4477, %v4638
    %v4645 = vadd.f32 %v4478, %v4640
    %s4646 = scalar_lea.vmem %s3, 184
    %v4647 = vld [vmem:[%s4646] sm:$0xff]
    %4648 = vrot.lane.b32.xlu0 %v822, 69
    %v4649 = vpop.permute.xlu0 %4648
    %4650 = vrot.lane.b32.xlu0 %v823, 69
    %v4651 = vpop.permute.xlu0 %4650
    %4652 = vrot.lane.b32.xlu0 %v824, 69
    %v4653 = vpop.permute.xlu0 %4652
    %4654 = vrot.lane.b32.xlu0 %v825, 69
    %v4655 = vpop.permute.xlu0 %4654
    %vm4656 = vcmask 564224
    %v4657 = vsel %vm4656, %v4649, %v4651
    %v4658 = vsel %vm4656, %v4651, %v4653
    %v4659 = vsel %vm4656, %v4653, %v4655
    %v4665 = vsel %vm848, %v4647, 0
    %4667 = vmatprep.subr.mxu0 %v4658
    %4668 = vmatpush1.msra.mxu0 %v4657
    %4669 = vmatprep.subr.mxu0 0.0
    %4670 = vmatpush1.msra.mxu0 0.0
    %4671 = vmatprep.subr.mxu0 0.0
    %4672 = vmatpush1.msra.mxu0 0.0
    %4673 = vmatprep.subr.mxu0 0.0
    %4674 = vmatpush1.msra.mxu0 0.0
    %4675 = vmatprep.subr.mxu0 0.0
    %4676 = vmatpush1.msra.mxu0 0.0
    %4677 = vmatprep.subr.mxu0 0.0
    %4678 = vmatpush1.msra.mxu0 0.0
    %4679 = vmatprep.subr.mxu0 0.0
    %4680 = vmatpush1.msra.mxu0 0.0
    %4681 = vmatprep.subr.mxu0 0.0
    %4682 = vmatpush1.msra.mxu0 0.0
    %4683 = vmatprep.subr.mxu0 0.0
    %4684 = vmatpush1.msra.mxu0 0.0
    %4685 = vmatprep.subr.mxu0 0.0
    %4686 = vmatpush1.msra.mxu0 0.0
    %4687 = vmatprep.subr.mxu0 0.0
    %4688 = vmatpush1.msra.mxu0 0.0
    %4689 = vmatprep.subr.mxu0 0.0
    %4690 = vmatpush1.msra.mxu0 0.0
    %4691 = vmatprep.subr.mxu0 0.0
    %4692 = vmatpush1.msra.mxu0 0.0
    %4693 = vmatprep.subr.mxu0 0.0
    %4694 = vmatpush1.msra.mxu0 0.0
    %4695 = vmatprep.subr.mxu0 0.0
    %4696 = vmatpush1.msra.mxu0 0.0
    %4697 = vmatprep.subr.mxu0 0.0
    %4698 = vmatpush1.msra.mxu0 0.0
    %4699 = vmatprep.subr.mxu0 0.0
    %4700 = vmatpush1.msra.mxu0 0.0
    %4701 = vmatprep.subr.mxu0 0.0
    %4702 = vmatpush1.msra.mxu0 0.0
    %4703 = vmatprep.subr.mxu0 0.0
    %4704 = vmatpush1.msra.mxu0 0.0
    %4705 = vmatprep.subr.mxu0 0.0
    %4706 = vmatpush1.msra.mxu0 0.0
    %4707 = vmatprep.subr.mxu0 0.0
    %4708 = vmatpush1.msra.mxu0 0.0
    %4709 = vmatprep.subr.mxu0 0.0
    %4710 = vmatpush1.msra.mxu0 0.0
    %4711 = vmatprep.subr.mxu0 0.0
    %4712 = vmatpush1.msra.mxu0 0.0
    %4713 = vmatprep.subr.mxu0 0.0
    %4714 = vmatpush1.msra.mxu0 0.0
    %4715 = vmatprep.subr.mxu0 0.0
    %4716 = vmatpush1.msra.mxu0 0.0
    %4717 = vmatprep.subr.mxu0 0.0
    %4718 = vmatpush1.msra.mxu0 0.0
    %4719 = vmatprep.subr.mxu0 0.0
    %4720 = vmatpush1.msra.mxu0 0.0
    %4721 = vmatprep.subr.mxu0 0.0
    %4722 = vmatpush1.msra.mxu0 0.0
    %4723 = vmatprep.subr.mxu0 0.0
    %4724 = vmatpush1.msra.mxu0 0.0
    %4725 = vmatprep.subr.mxu0 0.0
    %4726 = vmatpush1.msra.mxu0 0.0
    %4727 = vmatprep.subr.mxu0 0.0
    %4728 = vmatpush1.msra.mxu0 0.0
    %4729 = vmatprep.subr.mxu0 0.0
    %4730 = vmatpush1.msra.mxu0 0.0
    %4731 = vmatprep.mubr.f32.mxu0 0.0
    %4732 = vmatmul.mubr.f32.gmra.mrb[0].mxu0 %v4665
    %v4733 = vpop.f32.mrb[0].mxu0
    %v4734 = vadd.f32 0.0, %v4733
    %v4735 = vpop.f32.mrb[0].mxu0
    %v4736 = vadd.f32 0.0, %v4735
    %4737 = vdwg.mxu0
    %4738 = vmatprep.subr.mxu0 %v4655
    %4739 = vmatpush1.msra.mxu0 %v4659
    %4740 = vmatprep.subr.mxu0 0.0
    %4741 = vmatpush1.msra.mxu0 0.0
    %4742 = vmatprep.subr.mxu0 0.0
    %4743 = vmatpush1.msra.mxu0 0.0
    %4744 = vmatprep.subr.mxu0 0.0
    %4745 = vmatpush1.msra.mxu0 0.0
    %4746 = vmatprep.subr.mxu0 0.0
    %4747 = vmatpush1.msra.mxu0 0.0
    %4748 = vmatprep.subr.mxu0 0.0
    %4749 = vmatpush1.msra.mxu0 0.0
    %4750 = vmatprep.subr.mxu0 0.0
    %4751 = vmatpush1.msra.mxu0 0.0
    %4752 = vmatprep.subr.mxu0 0.0
    %4753 = vmatpush1.msra.mxu0 0.0
    %4754 = vmatprep.subr.mxu0 0.0
    %4755 = vmatpush1.msra.mxu0 0.0
    %4756 = vmatprep.subr.mxu0 0.0
    %4757 = vmatpush1.msra.mxu0 0.0
    %4758 = vmatprep.subr.mxu0 0.0
    %4759 = vmatpush1.msra.mxu0 0.0
    %4760 = vmatprep.subr.mxu0 0.0
    %4761 = vmatpush1.msra.mxu0 0.0
    %4762 = vmatprep.subr.mxu0 0.0
    %4763 = vmatpush1.msra.mxu0 0.0
    %4764 = vmatprep.subr.mxu0 0.0
    %4765 = vmatpush1.msra.mxu0 0.0
    %4766 = vmatprep.subr.mxu0 0.0
    %4767 = vmatpush1.msra.mxu0 0.0
    %4768 = vmatprep.subr.mxu0 0.0
    %4769 = vmatpush1.msra.mxu0 0.0
    %4770 = vmatprep.subr.mxu0 0.0
    %4771 = vmatpush1.msra.mxu0 0.0
    %4772 = vmatprep.subr.mxu0 0.0
    %4773 = vmatpush1.msra.mxu0 0.0
    %4774 = vmatprep.subr.mxu0 0.0
    %4775 = vmatpush1.msra.mxu0 0.0
    %4776 = vmatprep.subr.mxu0 0.0
    %4777 = vmatpush1.msra.mxu0 0.0
    %4778 = vmatprep.subr.mxu0 0.0
    %4779 = vmatpush1.msra.mxu0 0.0
    %4780 = vmatprep.subr.mxu0 0.0
    %4781 = vmatpush1.msra.mxu0 0.0
    %4782 = vmatprep.subr.mxu0 0.0
    %4783 = vmatpush1.msra.mxu0 0.0
    %4784 = vmatprep.subr.mxu0 0.0
    %4785 = vmatpush1.msra.mxu0 0.0
    %4786 = vmatprep.subr.mxu0 0.0
    %4787 = vmatpush1.msra.mxu0 0.0
    %4788 = vmatprep.subr.mxu0 0.0
    %4789 = vmatpush1.msra.mxu0 0.0
    %4790 = vmatprep.subr.mxu0 0.0
    %4791 = vmatpush1.msra.mxu0 0.0
    %4792 = vmatprep.subr.mxu0 0.0
    %4793 = vmatpush1.msra.mxu0 0.0
    %4794 = vmatprep.subr.mxu0 0.0
    %4795 = vmatpush1.msra.mxu0 0.0
    %4796 = vmatprep.subr.mxu0 0.0
    %4797 = vmatpush1.msra.mxu0 0.0
    %4798 = vmatprep.subr.mxu0 0.0
    %4799 = vmatpush1.msra.mxu0 0.0
    %4800 = vmatprep.subr.mxu0 0.0
    %4801 = vmatpush1.msra.mxu0 0.0
    %4802 = vmatprep.mubr.f32.mxu0 0.0
    %4803 = vmatmul.mubr.f32.gmra.mrb[0].mxu0 %v4665
    %v4804 = vpop.f32.mrb[0].mxu0
    %v4805 = vadd.f32 0.0, %v4804
    %v4806 = vpop.f32.mrb[0].mxu0
    %v4807 = vadd.f32 0.0, %v4806
    %4808 = vdwg.mxu0
    %v4809 = vadd.f32 %v4642, %v4734
    %v4810 = vadd.f32 %v4643, %v4736
    %v4811 = vadd.f32 %v4644, %v4805
    %v4812 = vadd.f32 %v4645, %v4807
    %s4813 = scalar_lea.vmem %s3, 192
    %v4814 = vld [vmem:[%s4813] sm:$0xff]
    %4815 = vrot.lane.b32.xlu0 %v822, 68
    %v4816 = vpop.permute.xlu0 %4815
    %4817 = vrot.lane.b32.xlu0 %v823, 68
    %v4818 = vpop.permute.xlu0 %4817
    %4819 = vrot.lane.b32.xlu0 %v824, 68
    %v4820 = vpop.permute.xlu0 %4819
    %4821 = vrot.lane.b32.xlu0 %v825, 68
    %v4822 = vpop.permute.xlu0 %4821
    %v4823 = vsel %vm819, %v4816, %v4818
    %v4824 = vsel %vm819, %v4818, %v4820
    %v4825 = vsel %vm819, %v4820, %v4822
    %v4831 = vsel %vm848, %v4814, 0
    %4833 = vmatprep.subr.mxu0 %v4824
    %4834 = vmatpush1.msra.mxu0 %v4823
    %4835 = vmatprep.subr.mxu0 0.0
    %4836 = vmatpush1.msra.mxu0 0.0
    %4837 = vmatprep.subr.mxu0 0.0
    %4838 = vmatpush1.msra.mxu0 0.0
    %4839 = vmatprep.subr.mxu0 0.0
    %4840 = vmatpush1.msra.mxu0 0.0
    %4841 = vmatprep.subr.mxu0 0.0
    %4842 = vmatpush1.msra.mxu0 0.0
    %4843 = vmatprep.subr.mxu0 0.0
    %4844 = vmatpush1.msra.mxu0 0.0
    %4845 = vmatprep.subr.mxu0 0.0
    %4846 = vmatpush1.msra.mxu0 0.0
    %4847 = vmatprep.subr.mxu0 0.0
    %4848 = vmatpush1.msra.mxu0 0.0
    %4849 = vmatprep.subr.mxu0 0.0
    %4850 = vmatpush1.msra.mxu0 0.0
    %4851 = vmatprep.subr.mxu0 0.0
    %4852 = vmatpush1.msra.mxu0 0.0
    %4853 = vmatprep.subr.mxu0 0.0
    %4854 = vmatpush1.msra.mxu0 0.0
    %4855 = vmatprep.subr.mxu0 0.0
    %4856 = vmatpush1.msra.mxu0 0.0
    %4857 = vmatprep.subr.mxu0 0.0
    %4858 = vmatpush1.msra.mxu0 0.0
    %4859 = vmatprep.subr.mxu0 0.0
    %4860 = vmatpush1.msra.mxu0 0.0
    %4861 = vmatprep.subr.mxu0 0.0
    %4862 = vmatpush1.msra.mxu0 0.0
    %4863 = vmatprep.subr.mxu0 0.0
    %4864 = vmatpush1.msra.mxu0 0.0
    %4865 = vmatprep.subr.mxu0 0.0
    %4866 = vmatpush1.msra.mxu0 0.0
    %4867 = vmatprep.subr.mxu0 0.0
    %4868 = vmatpush1.msra.mxu0 0.0
    %4869 = vmatprep.subr.mxu0 0.0
    %4870 = vmatpush1.msra.mxu0 0.0
    %4871 = vmatprep.subr.mxu0 0.0
    %4872 = vmatpush1.msra.mxu0 0.0
    %4873 = vmatprep.subr.mxu0 0.0
    %4874 = vmatpush1.msra.mxu0 0.0
    %4875 = vmatprep.subr.mxu0 0.0
    %4876 = vmatpush1.msra.mxu0 0.0
    %4877 = vmatprep.subr.mxu0 0.0
    %4878 = vmatpush1.msra.mxu0 0.0
    %4879 = vmatprep.subr.mxu0 0.0
    %4880 = vmatpush1.msra.mxu0 0.0
    %4881 = vmatprep.subr.mxu0 0.0
    %4882 = vmatpush1.msra.mxu0 0.0
    %4883 = vmatprep.subr.mxu0 0.0
    %4884 = vmatpush1.msra.mxu0 0.0
    %4885 = vmatprep.subr.mxu0 0.0
    %4886 = vmatpush1.msra.mxu0 0.0
    %4887 = vmatprep.subr.mxu0 0.0
    %4888 = vmatpush1.msra.mxu0 0.0
    %4889 = vmatprep.subr.mxu0 0.0
    %4890 = vmatpush1.msra.mxu0 0.0
    %4891 = vmatprep.subr.mxu0 0.0
    %4892 = vmatpush1.msra.mxu0 0.0
    %4893 = vmatprep.subr.mxu0 0.0
    %4894 = vmatpush1.msra.mxu0 0.0
    %4895 = vmatprep.subr.mxu0 0.0
    %4896 = vmatpush1.msra.mxu0 0.0
    %4897 = vmatprep.mubr.f32.mxu0 0.0
    %4898 = vmatmul.mubr.f32.gmra.mrb[0].mxu0 %v4831
    %v4899 = vpop.f32.mrb[0].mxu0
    %v4900 = vadd.f32 0.0, %v4899
    %v4901 = vpop.f32.mrb[0].mxu0
    %v4902 = vadd.f32 0.0, %v4901
    %4903 = vdwg.mxu0
    %4904 = vmatprep.subr.mxu0 %v4822
    %4905 = vmatpush1.msra.mxu0 %v4825
    %4906 = vmatprep.subr.mxu0 0.0
    %4907 = vmatpush1.msra.mxu0 0.0
    %4908 = vmatprep.subr.mxu0 0.0
    %4909 = vmatpush1.msra.mxu0 0.0
    %4910 = vmatprep.subr.mxu0 0.0
    %4911 = vmatpush1.msra.mxu0 0.0
    %4912 = vmatprep.subr.mxu0 0.0
    %4913 = vmatpush1.msra.mxu0 0.0
    %4914 = vmatprep.subr.mxu0 0.0
    %4915 = vmatpush1.msra.mxu0 0.0
    %4916 = vmatprep.subr.mxu0 0.0
    %4917 = vmatpush1.msra.mxu0 0.0
    %4918 = vmatprep.subr.mxu0 0.0
    %4919 = vmatpush1.msra.mxu0 0.0
    %4920 = vmatprep.subr.mxu0 0.0
    %4921 = vmatpush1.msra.mxu0 0.0
    %4922 = vmatprep.subr.mxu0 0.0
    %4923 = vmatpush1.msra.mxu0 0.0
    %4924 = vmatprep.subr.mxu0 0.0
    %4925 = vmatpush1.msra.mxu0 0.0
    %4926 = vmatprep.subr.mxu0 0.0
    %4927 = vmatpush1.msra.mxu0 0.0
    %4928 = vmatprep.subr.mxu0 0.0
    %4929 = vmatpush1.msra.mxu0 0.0
    %4930 = vmatprep.subr.mxu0 0.0
    %4931 = vmatpush1.msra.mxu0 0.0
    %4932 = vmatprep.subr.mxu0 0.0
    %4933 = vmatpush1.msra.mxu0 0.0
    %4934 = vmatprep.subr.mxu0 0.0
    %4935 = vmatpush1.msra.mxu0 0.0
    %4936 = vmatprep.subr.mxu0 0.0
    %4937 = vmatpush1.msra.mxu0 0.0
    %4938 = vmatprep.subr.mxu0 0.0
    %4939 = vmatpush1.msra.mxu0 0.0
    %4940 = vmatprep.subr.mxu0 0.0
    %4941 = vmatpush1.msra.mxu0 0.0
    %4942 = vmatprep.subr.mxu0 0.0
    %4943 = vmatpush1.msra.mxu0 0.0
    %4944 = vmatprep.subr.mxu0 0.0
    %4945 = vmatpush1.msra.mxu0 0.0
    %4946 = vmatprep.subr.mxu0 0.0
    %4947 = vmatpush1.msra.mxu0 0.0
    %4948 = vmatprep.subr.mxu0 0.0
    %4949 = vmatpush1.msra.mxu0 0.0
    %4950 = vmatprep.subr.mxu0 0.0
    %4951 = vmatpush1.msra.mxu0 0.0
    %4952 = vmatprep.subr.mxu0 0.0
    %4953 = vmatpush1.msra.mxu0 0.0
    %4954 = vmatprep.subr.mxu0 0.0
    %4955 = vmatpush1.msra.mxu0 0.0
    %4956 = vmatprep.subr.mxu0 0.0
    %4957 = vmatpush1.msra.mxu0 0.0
    %4958 = vmatprep.subr.mxu0 0.0
    %4959 = vmatpush1.msra.mxu0 0.0
    %4960 = vmatprep.subr.mxu0 0.0
    %4961 = vmatpush1.msra.mxu0 0.0
    %4962 = vmatprep.subr.mxu0 0.0
    %4963 = vmatpush1.msra.mxu0 0.0
    %4964 = vmatprep.subr.mxu0 0.0
    %4965 = vmatpush1.msra.mxu0 0.0
    %4966 = vmatprep.subr.mxu0 0.0
    %4967 = vmatpush1.msra.mxu0 0.0
    %4968 = vmatprep.mubr.f32.mxu0 0.0
    %4969 = vmatmul.mubr.f32.gmra.mrb[0].mxu0 %v4831
    %v4970 = vpop.f32.mrb[0].mxu0
    %v4971 = vadd.f32 0.0, %v4970
    %v4972 = vpop.f32.mrb[0].mxu0
    %v4973 = vadd.f32 0.0, %v4972
    %4974 = vdwg.mxu0
    %v4975 = vadd.f32 %v4809, %v4900
    %v4976 = vadd.f32 %v4810, %v4902
    %v4977 = vadd.f32 %v4811, %v4971
    %v4978 = vadd.f32 %v4812, %v4973
    %v4979 = vld [vmem:[%s4] sm:$0xff]
    %4981 = vset.pattern.permute.xlu0 0
    %4982 = vperm.xlu0 %4981, %v4979
    %v4983 = vpop.permute.xlu0 %4982
    %v4985 = vadd.f32 %v4975, %v4983
    %v4986 = vadd.f32 %v4976, %v4983
    %v4987 = vadd.f32 %v4977, %v4983
    %v4988 = vadd.f32 %v4978, %v4983
    %v4989 = vmax.f32 %v4985, 0.0
    %v4990 = vmax.f32 %v4986, 0.0
    %v4991 = vmax.f32 %v4987, 0.0
    %v4992 = vmax.f32 %v4988, 0.0
    %v4993 = vld [vmem:[%s5] sm:$0xff]
    %v4994 = vld [vmem:[%s5 + $0x8] sm:$0xff]
    %v4995 = vld [vmem:[%s5 + $0x10] sm:$0xff]
    %v4996 = vld [vmem:[%s5 + $0x18] sm:$0xff]
    %v4997 = vld [vmem:[%s5 + $0x20] sm:$0xff]
    %v4998 = vld [vmem:[%s5 + $0x28] sm:$0xff]
    %v4999 = vld [vmem:[%s5 + $0x30] sm:$0xff]
    %v5000 = vld [vmem:[%s5 + $0x38] sm:$0xff]
    %v5001 = vld [vmem:[%s5 + $0x40] sm:$0xff]
    %v5002 = vld [vmem:[%s5 + $0x48] sm:$0xff]
    %v5003 = vld [vmem:[%s5 + $0x50] sm:$0xff]
    %v5004 = vld [vmem:[%s5 + $0x58] sm:$0xff]
    %v5005 = vld [vmem:[%s5 + $0x60] sm:$0xff]
    %v5006 = vld [vmem:[%s5 + $0x68] sm:$0xff]
    %v5007 = vld [vmem:[%s5 + $0x70] sm:$0xff]
    %v5008 = vld [vmem:[%s5 + $0x78] sm:$0xff]
    %v5009 = vld [vmem:[%s5 + $0x80] sm:$0xff]
    %v5010 = vld [vmem:[%s5 + $0x88] sm:$0xff]
    %v5011 = vld [vmem:[%s5 + $0x90] sm:$0xff]
    %v5012 = vld [vmem:[%s5 + $0x98] sm:$0xff]
    %v5013 = vld [vmem:[%s5 + $0xa0] sm:$0xff]
    %v5014 = vld [vmem:[%s5 + $0xa8] sm:$0xff]
    %v5015 = vld [vmem:[%s5 + $0xb0] sm:$0xff]
    %v5016 = vld [vmem:[%s5 + $0xb8] sm:$0xff]
    %v5017 = vld [vmem:[%s5 + $0xc0] sm:$0xff]
    %v5018 = vld [vmem:[%s5 + $0xc8] sm:$0xff]
    %v5019 = vld [vmem:[%s5 + $0xd0] sm:$0xff]
    %v5020 = vld [vmem:[%s5 + $0xd8] sm:$0xff]
    %v5021 = vld [vmem:[%s5 + $0xe0] sm:$0xff]
    %v5022 = vld [vmem:[%s5 + $0xe8] sm:$0xff]
    %v5023 = vld [vmem:[%s5 + $0xf0] sm:$0xff]
    %v5024 = vld [vmem:[%s5 + $0xf8] sm:$0xff]
    %v5025 = vld [vmem:[%s5 + $0x100] sm:$0xff]
    %v5026 = vld [vmem:[%s5 + $0x108] sm:$0xff]
    %v5027 = vld [vmem:[%s5 + $0x110] sm:$0xff]
    %v5028 = vld [vmem:[%s5 + $0x118] sm:$0xff]
    %v5029 = vld [vmem:[%s5 + $0x120] sm:$0xff]
    %v5030 = vld [vmem:[%s5 + $0x128] sm:$0xff]
    %v5031 = vld [vmem:[%s5 + $0x130] sm:$0xff]
    %v5032 = vld [vmem:[%s5 + $0x138] sm:$0xff]
    %v5033 = vld [vmem:[%s5 + $0x140] sm:$0xff]
    %v5034 = vld [vmem:[%s5 + $0x148] sm:$0xff]
    %v5035 = vld [vmem:[%s5 + $0x150] sm:$0xff]
    %v5036 = vld [vmem:[%s5 + $0x158] sm:$0xff]
    %v5037 = vld [vmem:[%s5 + $0x160] sm:$0xff]
    %v5038 = vld [vmem:[%s5 + $0x168] sm:$0xff]
    %v5039 = vld [vmem:[%s5 + $0x170] sm:$0xff]
    %v5040 = vld [vmem:[%s5 + $0x178] sm:$0xff]
    %v5041 = vld [vmem:[%s5 + $0x180] sm:$0xff]
    %v5043 = vsel %vm848, %v4992, 0
    %5045 = vmatprep.subr.mxu0 0.0
    %5046 = vmatpush1.msra.mxu0 %v4993
    %5047 = vmatprep.subr.mxu0 0.0
    %5048 = vmatpush1.msra.mxu0 %v4994
    %5049 = vmatprep.subr.mxu0 0.0
    %5050 = vmatpush1.msra.mxu0 %v4995
    %5051 = vmatprep.subr.mxu0 0.0
    %5052 = vmatpush1.msra.mxu0 %v4996
    %5053 = vmatprep.subr.mxu0 0.0
    %5054 = vmatpush1.msra.mxu0 %v4997
    %5055 = vmatprep.subr.mxu0 0.0
    %5056 = vmatpush1.msra.mxu0 %v4998
    %5057 = vmatprep.subr.mxu0 0.0
    %5058 = vmatpush1.msra.mxu0 %v4999
    %5059 = vmatprep.subr.mxu0 0.0
    %5060 = vmatpush1.msra.mxu0 %v5000
    %5061 = vmatprep.subr.mxu0 0.0
    %5062 = vmatpush1.msra.mxu0 %v5001
    %5063 = vmatprep.subr.mxu0 0.0
    %5064 = vmatpush1.msra.mxu0 %v5002
    %5065 = vmatprep.subr.mxu0 0.0
    %5066 = vmatpush1.msra.mxu0 %v5003
    %5067 = vmatprep.subr.mxu0 0.0
    %5068 = vmatpush1.msra.mxu0 %v5004
    %5069 = vmatprep.subr.mxu0 0.0
    %5070 = vmatpush1.msra.mxu0 %v5005
    %5071 = vmatprep.subr.mxu0 0.0
    %5072 = vmatpush1.msra.mxu0 %v5006
    %5073 = vmatprep.subr.mxu0 0.0
    %5074 = vmatpush1.msra.mxu0 %v5007
    %5075 = vmatprep.subr.mxu0 0.0
    %5076 = vmatpush1.msra.mxu0 %v5008
    %5077 = vmatprep.subr.mxu0 0.0
    %5078 = vmatpush1.msra.mxu0 %v5009
    %5079 = vmatprep.subr.mxu0 0.0
    %5080 = vmatpush1.msra.mxu0 %v5010
    %5081 = vmatprep.subr.mxu0 0.0
    %5082 = vmatpush1.msra.mxu0 %v5011
    %5083 = vmatprep.subr.mxu0 0.0
    %5084 = vmatpush1.msra.mxu0 %v5012
    %5085 = vmatprep.subr.mxu0 0.0
    %5086 = vmatpush1.msra.mxu0 %v5013
    %5087 = vmatprep.subr.mxu0 0.0
    %5088 = vmatpush1.msra.mxu0 %v5014
    %5089 = vmatprep.subr.mxu0 0.0
    %5090 = vmatpush1.msra.mxu0 %v5015
    %5091 = vmatprep.subr.mxu0 0.0
    %5092 = vmatpush1.msra.mxu0 %v5016
    %5093 = vmatprep.subr.mxu0 0.0
    %5094 = vmatpush1.msra.mxu0 %v5017
    %5095 = vmatprep.subr.mxu0 0.0
    %5096 = vmatpush1.msra.mxu0 %v5018
    %5097 = vmatprep.subr.mxu0 0.0
    %5098 = vmatpush1.msra.mxu0 %v5019
    %5099 = vmatprep.subr.mxu0 0.0
    %5100 = vmatpush1.msra.mxu0 %v5020
    %5101 = vmatprep.subr.mxu0 0.0
    %5102 = vmatpush1.msra.mxu0 %v5021
    %5103 = vmatprep.subr.mxu0 0.0
    %5104 = vmatpush1.msra.mxu0 %v5022
    %5105 = vmatprep.subr.mxu0 0.0
    %5106 = vmatpush1.msra.mxu0 %v5023
    %5107 = vmatprep.subr.mxu0 0.0
    %5108 = vmatpush1.msra.mxu0 %v5024
    %5109 = vmatprep.mubr.f32.mxu0 %v4990
    %5110 = vmatmul.mubr.f32.gmra.mrb[0].mxu0 %v4989
    %v5111 = vpop.f32.mrb[0].mxu0
    %v5112 = vadd.f32 0.0, %v5111
    %v5113 = vpop.f32.mrb[0].mxu0
    %5114 = vdwg.mxu0
    %5115 = vmatprep.subr.mxu0 0.0
    %5116 = vmatpush1.msra.mxu0 %v5025
    %5117 = vmatprep.subr.mxu0 0.0
    %5118 = vmatpush1.msra.mxu0 %v5026
    %5119 = vmatprep.subr.mxu0 0.0
    %5120 = vmatpush1.msra.mxu0 %v5027
    %5121 = vmatprep.subr.mxu0 0.0
    %5122 = vmatpush1.msra.mxu0 %v5028
    %5123 = vmatprep.subr.mxu0 0.0
    %5124 = vmatpush1.msra.mxu0 %v5029
    %5125 = vmatprep.subr.mxu0 0.0
    %5126 = vmatpush1.msra.mxu0 %v5030
    %5127 = vmatprep.subr.mxu0 0.0
    %5128 = vmatpush1.msra.mxu0 %v5031
    %5129 = vmatprep.subr.mxu0 0.0
    %5130 = vmatpush1.msra.mxu0 %v5032
    %5131 = vmatprep.subr.mxu0 0.0
    %5132 = vmatpush1.msra.mxu0 %v5033
    %5133 = vmatprep.subr.mxu0 0.0
    %5134 = vmatpush1.msra.mxu0 %v5034
    %5135 = vmatprep.subr.mxu0 0.0
    %5136 = vmatpush1.msra.mxu0 %v5035
    %5137 = vmatprep.subr.mxu0 0.0
    %5138 = vmatpush1.msra.mxu0 %v5036
    %5139 = vmatprep.subr.mxu0 0.0
    %5140 = vmatpush1.msra.mxu0 %v5037
    %5141 = vmatprep.subr.mxu0 0.0
    %5142 = vmatpush1.msra.mxu0 %v5038
    %5143 = vmatprep.subr.mxu0 0.0
    %5144 = vmatpush1.msra.mxu0 %v5039
    %5145 = vmatprep.subr.mxu0 0.0
    %5146 = vmatpush1.msra.mxu0 %v5040
    %5147 = vmatprep.subr.mxu0 0.0
    %5148 = vmatpush1.msra.mxu0 %v5041
    %5149 = vmatprep.subr.mxu0 0.0
    %5150 = vmatpush1.msra.mxu0 0.0
    %5151 = vmatprep.subr.mxu0 0.0
    %5152 = vmatpush1.msra.mxu0 0.0
    %5153 = vmatprep.subr.mxu0 0.0
    %5154 = vmatpush1.msra.mxu0 0.0
    %5155 = vmatprep.subr.mxu0 0.0
    %5156 = vmatpush1.msra.mxu0 0.0
    %5157 = vmatprep.subr.mxu0 0.0
    %5158 = vmatpush1.msra.mxu0 0.0
    %5159 = vmatprep.subr.mxu0 0.0
    %5160 = vmatpush1.msra.mxu0 0.0
    %5161 = vmatprep.subr.mxu0 0.0
    %5162 = vmatpush1.msra.mxu0 0.0
    %5163 = vmatprep.subr.mxu0 0.0
    %5164 = vmatpush1.msra.mxu0 0.0
    %5165 = vmatprep.subr.mxu0 0.0
    %5166 = vmatpush1.msra.mxu0 0.0
    %5167 = vmatprep.subr.mxu0 0.0
    %5168 = vmatpush1.msra.mxu0 0.0
    %5169 = vmatprep.subr.mxu0 0.0
    %5170 = vmatpush1.msra.mxu0 0.0
    %5171 = vmatprep.subr.mxu0 0.0
    %5172 = vmatpush1.msra.mxu0 0.0
    %5173 = vmatprep.subr.mxu0 0.0
    %5174 = vmatpush1.msra.mxu0 0.0
    %5175 = vmatprep.subr.mxu0 0.0
    %5176 = vmatpush1.msra.mxu0 0.0
    %5177 = vmatprep.subr.mxu0 0.0
    %5178 = vmatpush1.msra.mxu0 0.0
    %5179 = vmatprep.mubr.f32.mxu0 %v5043
    %5180 = vmatmul.mubr.f32.gmra.mrb[0].mxu0 %v4991
    %v5181 = vpop.f32.mrb[0].mxu0
    %v5182 = vadd.f32 %v5112, %v5181
    %v5183 = vpop.f32.mrb[0].mxu0
    %5184 = vdwg.mxu0
    %v5185 = vmul.f32 %v5182, 0.25
    %vm5186 = vcmask 196608
    %5187 = vst.msk [vmem:[#allocation3] sm:$0x1] %vm5186, %v5185
    %v5190 = vunpack.c.l.s4 1983009808
    %v5191 = vunpack.c.0.s8 %v5190
    %v5192 = vlaneseq
    %v5193 = vshrl.u32 %v5192, 7
    %v5194 = vsub.s32 %v5191, %v5193
    %v5195 = vrot.slane %v5185, %v5194
    %v5196 = vrot.slane %v5195, 7
    %v5197 = vrot.slane %v5196, 2
    %5198 = vrot.lane.b32.xlu0 %v5197, 25
    %v5199 = vpop.permute.xlu0 %5198
    %vm5201 = vcmask 401608
    %5202 = vst.msk [vmem:[#allocation3] sm:$0x1] %vm5201, %v5199
    %v5203 = vcombine.high %v5195, %v5195
    %5204 = vrot.lane.b32.xlu0 %v5203, 50
    %v5205 = vpop.permute.xlu0 %5204
    %vm5207 = vcmask 606608
    %5208 = vst.msk [vmem:[#allocation3] sm:$0x1] %vm5207, %v5205
    %v5209 = vrot.slane %v5203, 7
    %v5210 = vrot.slane %v5209, 2
    %5211 = vrot.lane.b32.xlu0 %v5210, 75
    %v5212 = vpop.permute.xlu0 %5211
    %vm5214 = vcmask 811608
    %5215 = vst.msk [vmem:[#allocation3] sm:$0x1] %vm5214, %v5212
    %v5216 = vcombine.high %v5185, %v5185
    %v5218 = vunpack.c.l.s4 1983009808
    %v5219 = vunpack.c.0.s8 %v5218
    %v5220 = vlaneseq
    %v5221 = vshrl.u32 %v5220, 7
    %v5222 = vsub.s32 %v5219, %v5221
    %v5223 = vrot.slane %v5216, %v5222
    %5224 = vrot.lane.b32.xlu0 %v5223, 100
    %v5225 = vpop.permute.xlu0 %5224
    %vm5227 = vcmask 1016608
    %5228 = vst.msk [vmem:[#allocation3] sm:$0x1] %vm5227, %v5225
    %v5229 = vrot.slane %v5223, 7
    %v5230 = vrot.slane %v5229, 2
    %5231 = vrot.lane.b32.xlu0 %v5230, 125
    %v5232 = vpop.permute.xlu0 %5231
    %v5233 = vrot.slane %v5232, 6
    %v5234 = vsel %vm1316, %v5233, %v5232
    %vm5236 = vcmask 1041384
    %vm5237 = vcmask 174082
    %vm5238 = vmor %vm5237, %vm5236
    %5239 = vst.msk [vmem:[#allocation3] sm:$0x5] %vm5238, %v5234
    %5240 = vrot.lane.b32.xlu0 %v5195, 103
    %v5241 = vpop.permute.xlu0 %5240
    %5243 = vst.msk [vmem:[#allocation3 + $0x1] sm:$0x1] %vm5186, %v5241
    %5245 = vst.msk [vmem:[#allocation3 + $0x1] sm:$0x1] %vm5201, %v5197
    %5246 = vrot.lane.b32.xlu0 %v5203, 25
    %v5247 = vpop.permute.xlu0 %5246
    %5249 = vst.msk [vmem:[#allocation3 + $0x1] sm:$0x1] %vm5207, %v5247
    %5250 = vrot.lane.b32.xlu0 %v5210, 50
    %v5251 = vpop.permute.xlu0 %5250
    %5253 = vst.msk [vmem:[#allocation3 + $0x1] sm:$0x1] %vm5214, %v5251
    %5254 = vrot.lane.b32.xlu0 %v5223, 75
    %v5255 = vpop.permute.xlu0 %5254
    %5257 = vst.msk [vmem:[#allocation3 + $0x1] sm:$0x1] %vm5227, %v5255
    %5258 = vrot.lane.b32.xlu0 %v5230, 100
    %v5259 = vpop.permute.xlu0 %5258
    %v5260 = vrot.slane %v5259, 6
    %v5261 = vsel %vm2485, %v5260, %v5259
    %5263 = vst.msk [vmem:[#allocation3 + $0x1] sm:$0x5] %vm5238, %v5261
    %v5264 = vld [vmem:[#allocation3] sm:$0xf]
    %v5265 = vld [vmem:[%s6] sm:$0xff]
    %v5266 = vld [vmem:[%s6 + $0x8] sm:$0xff]
    %v5267 = vld [vmem:[%s6 + $0x10] sm:$0xff]
    %v5268 = vld [vmem:[%s6 + $0x18] sm:$0xff]
    %v5269 = vld [vmem:[%s6 + $0x20] sm:$0xff]
    %v5270 = vld [vmem:[%s6 + $0x28] sm:$0xff]
    %v5271 = vld [vmem:[%s6 + $0x30] sm:$0xff]
    %v5272 = vld [vmem:[%s6 + $0x38] sm:$0xff]
    %v5273 = vld [vmem:[%s6 + $0x40] sm:$0xff]
    %v5274 = vld [vmem:[%s6 + $0x48] sm:$0xff]
    %v5275 = vld [vmem:[%s6 + $0x50] sm:$0xff]
    %v5276 = vld [vmem:[%s6 + $0x58] sm:$0xff]
    %v5277 = vld [vmem:[%s6 + $0x60] sm:$0xff]
    %v5278 = vld [vmem:[%s6 + $0x68] sm:$0xff]
    %v5279 = vld [vmem:[%s6 + $0x70] sm:$0xff]
    %v5280 = vld [vmem:[%s6 + $0x78] sm:$0xff]
    %v5281 = vld [vmem:[%s6 + $0x80] sm:$0xff]
    %v5282 = vld [vmem:[%s6 + $0x88] sm:$0xff]
    %v5283 = vld [vmem:[%s6 + $0x90] sm:$0x3f]
    %v5284 = vld [vmem:[%s7] sm:$0x1]
    %v5286 = vlaneseq
    %v5287 = vshrl.u32 %v5286, 7
    %v5288 = vsub.s32 0, %v5287
    %v5289 = vrot.slane %v5284, %v5288
    %v5293 = vunpack.c.l.s4 1983009808
    %v5294 = vunpack.c.0.s8 %v5293
    %v5295 = vlaneseq
    %v5296 = vshrl.u32 %v5295, 7
    %v5297 = vsub.s32 %v5294, %v5296
    %v5298 = vrot.slane %v5264, %v5297
    %v5299 = vcombine.high %v5298, %v5298
    %vm5301 = vcmask 179200
    %v5302 = vsel %vm5301, %v5299, 0
    %vm5304 = vcmask 1045504
    %v5306 = vsel %vm5304, %v5283, 0
    %5308 = vmatprep.subr.mxu0 0.0
    %5309 = vmatpush1.msra.mxu0 %v5265
    %5310 = vmatprep.subr.mxu0 0.0
    %5311 = vmatpush1.msra.mxu0 %v5266
    %5312 = vmatprep.subr.mxu0 0.0
    %5313 = vmatpush1.msra.mxu0 %v5267
    %5314 = vmatprep.subr.mxu0 0.0
    %5315 = vmatpush1.msra.mxu0 %v5268
    %5316 = vmatprep.subr.mxu0 0.0
    %5317 = vmatpush1.msra.mxu0 %v5269
    %5318 = vmatprep.subr.mxu0 0.0
    %5319 = vmatpush1.msra.mxu0 %v5270
    %5320 = vmatprep.subr.mxu0 0.0
    %5321 = vmatpush1.msra.mxu0 %v5271
    %5322 = vmatprep.subr.mxu0 0.0
    %5323 = vmatpush1.msra.mxu0 %v5272
    %5324 = vmatprep.subr.mxu0 0.0
    %5325 = vmatpush1.msra.mxu0 %v5273
    %5326 = vmatprep.subr.mxu0 0.0
    %5327 = vmatpush1.msra.mxu0 %v5274
    %5328 = vmatprep.subr.mxu0 0.0
    %5329 = vmatpush1.msra.mxu0 %v5275
    %5330 = vmatprep.subr.mxu0 0.0
    %5331 = vmatpush1.msra.mxu0 %v5276
    %5332 = vmatprep.subr.mxu0 0.0
    %5333 = vmatpush1.msra.mxu0 %v5277
    %5334 = vmatprep.subr.mxu0 0.0
    %5335 = vmatpush1.msra.mxu0 %v5278
    %5336 = vmatprep.subr.mxu0 0.0
    %5337 = vmatpush1.msra.mxu0 %v5279
    %5338 = vmatprep.subr.mxu0 0.0
    %5339 = vmatpush1.msra.mxu0 %v5280
    %5340 = vmatprep.subr.mxu0 0.0
    %5341 = vmatpush1.msra.mxu0 %v5281
    %5342 = vmatprep.subr.mxu0 0.0
    %5343 = vmatpush1.msra.mxu0 %v5282
    %5344 = vmatprep.subr.mxu0 0.0
    %5345 = vmatpush1.msra.mxu0 %v5306
    %5346 = vmatprep.subr.mxu0 0.0
    %5347 = vmatpush1.msra.mxu0 0.0
    %5348 = vmatprep.subr.mxu0 0.0
    %5349 = vmatpush1.msra.mxu0 0.0
    %5350 = vmatprep.subr.mxu0 0.0
    %5351 = vmatpush1.msra.mxu0 0.0
    %5352 = vmatprep.subr.mxu0 0.0
    %5353 = vmatpush1.msra.mxu0 0.0
    %5354 = vmatprep.subr.mxu0 0.0
    %5355 = vmatpush1.msra.mxu0 0.0
    %5356 = vmatprep.subr.mxu0 0.0
    %5357 = vmatpush1.msra.mxu0 0.0
    %5358 = vmatprep.subr.mxu0 0.0
    %5359 = vmatpush1.msra.mxu0 0.0
    %5360 = vmatprep.subr.mxu0 0.0
    %5361 = vmatpush1.msra.mxu0 0.0
    %5362 = vmatprep.subr.mxu0 0.0
    %5363 = vmatpush1.msra.mxu0 0.0
    %5364 = vmatprep.subr.mxu0 0.0
    %5365 = vmatpush1.msra.mxu0 0.0
    %5366 = vmatprep.subr.mxu0 0.0
    %5367 = vmatpush1.msra.mxu0 0.0
    %5368 = vmatprep.subr.mxu0 0.0
    %5369 = vmatpush1.msra.mxu0 0.0
    %5370 = vmatprep.subr.mxu0 0.0
    %5371 = vmatpush1.msra.mxu0 0.0
    %5372 = vmatprep.mubr.f32.mxu0 %v5302
    %5373 = vmatmul.mubr.f32.gmra.mrb[0].mxu0 %v5298
    %v5374 = vpop.f32.mrb[0].mxu0
    %v5375 = vadd.f32 %v5289, %v5374
    %v5376 = vpop.f32.mrb[0].mxu0
    %5377 = vdwg.mxu0
    %v5378 = vmax.f32 %v5375, 0.0
    %v5379 = vld [vmem:[%s8] sm:$0xff]
    %v5380 = vld [vmem:[%s8 + $0x8] sm:$0xff]
    %v5381 = vld [vmem:[%s8 + $0x10] sm:$0xff]
    %v5382 = vld [vmem:[%s8 + $0x18] sm:$0xff]
    %v5383 = vld [vmem:[%s8 + $0x20] sm:$0xff]
    %v5384 = vld [vmem:[%s8 + $0x28] sm:$0xff]
    %v5385 = vld [vmem:[%s8 + $0x30] sm:$0xff]
    %v5386 = vld [vmem:[%s8 + $0x38] sm:$0xff]
    %v5387 = vld [vmem:[%s9] sm:$0x1]
    %v5389 = vlaneseq
    %v5390 = vshrl.u32 %v5389, 7
    %v5391 = vsub.s32 0, %v5390
    %v5392 = vrot.slane %v5387, %v5391
    %vm5394 = vcmask 523264
    %v5396 = vsel %vm5394, %v5378, 0
    %5398 = vmatprep.subr.mxu0 0.0
    %5399 = vmatpush1.msra.mxu0 %v5379
    %5400 = vmatprep.subr.mxu0 0.0
    %5401 = vmatpush1.msra.mxu0 %v5380
    %5402 = vmatprep.subr.mxu0 0.0
    %5403 = vmatpush1.msra.mxu0 %v5381
    %5404 = vmatprep.subr.mxu0 0.0
    %5405 = vmatpush1.msra.mxu0 %v5382
    %5406 = vmatprep.subr.mxu0 0.0
    %5407 = vmatpush1.msra.mxu0 %v5383
    %5408 = vmatprep.subr.mxu0 0.0
    %5409 = vmatpush1.msra.mxu0 %v5384
    %5410 = vmatprep.subr.mxu0 0.0
    %5411 = vmatpush1.msra.mxu0 %v5385
    %5412 = vmatprep.subr.mxu0 0.0
    %5413 = vmatpush1.msra.mxu0 %v5386
    %5414 = vmatprep.subr.mxu0 0.0
    %5415 = vmatpush1.msra.mxu0 0.0
    %5416 = vmatprep.subr.mxu0 0.0
    %5417 = vmatpush1.msra.mxu0 0.0
    %5418 = vmatprep.subr.mxu0 0.0
    %5419 = vmatpush1.msra.mxu0 0.0
    %5420 = vmatprep.subr.mxu0 0.0
    %5421 = vmatpush1.msra.mxu0 0.0
    %5422 = vmatprep.subr.mxu0 0.0
    %5423 = vmatpush1.msra.mxu0 0.0
    %5424 = vmatprep.subr.mxu0 0.0
    %5425 = vmatpush1.msra.mxu0 0.0
    %5426 = vmatprep.subr.mxu0 0.0
    %5427 = vmatpush1.msra.mxu0 0.0
    %5428 = vmatprep.subr.mxu0 0.0
    %5429 = vmatpush1.msra.mxu0 0.0
    %5430 = vmatprep.subr.mxu0 0.0
    %5431 = vmatpush1.msra.mxu0 0.0
    %5432 = vmatprep.subr.mxu0 0.0
    %5433 = vmatpush1.msra.mxu0 0.0
    %5434 = vmatprep.subr.mxu0 0.0
    %5435 = vmatpush1.msra.mxu0 0.0
    %5436 = vmatprep.subr.mxu0 0.0
    %5437 = vmatpush1.msra.mxu0 0.0
    %5438 = vmatprep.subr.mxu0 0.0
    %5439 = vmatpush1.msra.mxu0 0.0
    %5440 = vmatprep.subr.mxu0 0.0
    %5441 = vmatpush1.msra.mxu0 0.0
    %5442 = vmatprep.subr.mxu0 0.0
    %5443 = vmatpush1.msra.mxu0 0.0
    %5444 = vmatprep.subr.mxu0 0.0
    %5445 = vmatpush1.msra.mxu0 0.0
    %5446 = vmatprep.subr.mxu0 0.0
    %5447 = vmatpush1.msra.mxu0 0.0
    %5448 = vmatprep.subr.mxu0 0.0
    %5449 = vmatpush1.msra.mxu0 0.0
    %5450 = vmatprep.subr.mxu0 0.0
    %5451 = vmatpush1.msra.mxu0 0.0
    %5452 = vmatprep.subr.mxu0 0.0
    %5453 = vmatpush1.msra.mxu0 0.0
    %5454 = vmatprep.subr.mxu0 0.0
    %5455 = vmatpush1.msra.mxu0 0.0
    %5456 = vmatprep.subr.mxu0 0.0
    %5457 = vmatpush1.msra.mxu0 0.0
    %5458 = vmatprep.subr.mxu0 0.0
    %5459 = vmatpush1.msra.mxu0 0.0
    %5460 = vmatprep.subr.mxu0 0.0
    %5461 = vmatpush1.msra.mxu0 0.0
    %5462 = vmatprep.mubr.f32.mxu0 0.0
    %5463 = vmatmul.mubr.f32.gmra.mrb[0].mxu0 %v5396
    %v5464 = vpop.f32.mrb[0].mxu0
    %v5465 = vadd.f32 %v5392, %v5464
    %v5466 = vpop.f32.mrb[0].mxu0
    %5467 = vdwg.mxu0
    %v5468 = vmax.f32 %v5465, 0.0
    %v5469 = vld [vmem:[%s10] sm:$0xff]
    %v5470 = vld [vmem:[%s11] sm:$0x1]
    %v5472 = vlaneseq
    %v5473 = vshrl.u32 %v5472, 7
    %v5474 = vsub.s32 0, %v5473
    %v5475 = vrot.slane %v5470, %v5474
    %v5478 = vsel %vm848, %v5468, 0
    %5480 = vmatprep.subr.mxu0 0.0
    %5481 = vmatpush1.msra.mxu0 %v5469
    %5482 = vmatprep.subr.mxu0 0.0
    %5483 = vmatpush1.msra.mxu0 0.0
    %5484 = vmatprep.subr.mxu0 0.0
    %5485 = vmatpush1.msra.mxu0 0.0
    %5486 = vmatprep.subr.mxu0 0.0
    %5487 = vmatpush1.msra.mxu0 0.0
    %5488 = vmatprep.subr.mxu0 0.0
    %5489 = vmatpush1.msra.mxu0 0.0
    %5490 = vmatprep.subr.mxu0 0.0
    %5491 = vmatpush1.msra.mxu0 0.0
    %5492 = vmatprep.subr.mxu0 0.0
    %5493 = vmatpush1.msra.mxu0 0.0
    %5494 = vmatprep.subr.mxu0 0.0
    %5495 = vmatpush1.msra.mxu0 0.0
    %5496 = vmatprep.subr.mxu0 0.0
    %5497 = vmatpush1.msra.mxu0 0.0
    %5498 = vmatprep.subr.mxu0 0.0
    %5499 = vmatpush1.msra.mxu0 0.0
    %5500 = vmatprep.subr.mxu0 0.0
    %5501 = vmatpush1.msra.mxu0 0.0
    %5502 = vmatprep.subr.mxu0 0.0
    %5503 = vmatpush1.msra.mxu0 0.0
    %5504 = vmatprep.subr.mxu0 0.0
    %5505 = vmatpush1.msra.mxu0 0.0
    %5506 = vmatprep.subr.mxu0 0.0
    %5507 = vmatpush1.msra.mxu0 0.0
    %5508 = vmatprep.subr.mxu0 0.0
    %5509 = vmatpush1.msra.mxu0 0.0
    %5510 = vmatprep.subr.mxu0 0.0
    %5511 = vmatpush1.msra.mxu0 0.0
    %5512 = vmatprep.subr.mxu0 0.0
    %5513 = vmatpush1.msra.mxu0 0.0
    %5514 = vmatprep.subr.mxu0 0.0
    %5515 = vmatpush1.msra.mxu0 0.0
    %5516 = vmatprep.subr.mxu0 0.0
    %5517 = vmatpush1.msra.mxu0 0.0
    %5518 = vmatprep.subr.mxu0 0.0
    %5519 = vmatpush1.msra.mxu0 0.0
    %5520 = vmatprep.subr.mxu0 0.0
    %5521 = vmatpush1.msra.mxu0 0.0
    %5522 = vmatprep.subr.mxu0 0.0
    %5523 = vmatpush1.msra.mxu0 0.0
    %5524 = vmatprep.subr.mxu0 0.0
    %5525 = vmatpush1.msra.mxu0 0.0
    %5526 = vmatprep.subr.mxu0 0.0
    %5527 = vmatpush1.msra.mxu0 0.0
    %5528 = vmatprep.subr.mxu0 0.0
    %5529 = vmatpush1.msra.mxu0 0.0
    %5530 = vmatprep.subr.mxu0 0.0
    %5531 = vmatpush1.msra.mxu0 0.0
    %5532 = vmatprep.subr.mxu0 0.0
    %5533 = vmatpush1.msra.mxu0 0.0
    %5534 = vmatprep.subr.mxu0 0.0
    %5535 = vmatpush1.msra.mxu0 0.0
    %5536 = vmatprep.subr.mxu0 0.0
    %5537 = vmatpush1.msra.mxu0 0.0
    %5538 = vmatprep.subr.mxu0 0.0
    %5539 = vmatpush1.msra.mxu0 0.0
    %5540 = vmatprep.subr.mxu0 0.0
    %5541 = vmatpush1.msra.mxu0 0.0
    %5542 = vmatprep.subr.mxu0 0.0
    %5543 = vmatpush1.msra.mxu0 0.0
    %5544 = vmatprep.mubr.f32.mxu0 0.0
    %5545 = vmatmul.mubr.f32.gmra.mrb[0].mxu0 %v5478
    %v5546 = vpop.f32.mrb[0].mxu0
    %v5547 = vadd.f32 %v5475, %v5546
    %v5548 = vpop.f32.mrb[0].mxu0
    %5549 = vdwg.mxu0
    %vm5550 = vcmask 17408
    %5551 = vst.msk [vmem:[#allocation4] sm:$0x3] %vm5550, %v5547
    // Predicated region
    $region50: #{small_model_forward.1} parent=1 // pred_check
      _
    $region51: #{small_model_forward.1} parent=1 // pred_check_branch
      %5553 = sbr.rel (0) target = $region53
    $region52: #{small_model_forward.1} parent=1 // pred_region
      %s5555 = ssub.s32 32, 32
      %5556 = vsyncadd [#allocation5], %s5555
      %s5558 = sshll.u32 [#allocation4], 4
      %s5559 = int_to_ptr.vmem [resolvable:$true] %s5558
      %5561 = dma.vmem_to_hbm [thread:$0]  %s5559, 32, %s12, [#allocation5]
    $region53: #{small_model_forward.1} parent=1 // pred_fallthru
      _
    // Predicated region
    $region54: #{small_model_forward.1} parent=1 // pred_check
      _
    $region55: #{small_model_forward.1} parent=1 // pred_check_branch
      %5563 = sbr.rel (0) target = $region57
    $region56: #{small_model_forward.1} parent=1 // pred_region
      %5564 = dma.done [#allocation5], 32
    $region57: #{small_model_forward.1} parent=1 // pred_fallthru
      _
    %5565 = vsyncpa [#allocation5], 1

</llo_original>
